<compile_context>
chip_gen: v6e
topology: v6e:2x2x1
jax: 0.10.0
libtpu: 0.0.40
codegen_flags: <defaults>
</compile_context>

<pallas_src>
import functools

import jax
import jax.numpy as jnp
from jax.experimental import pallas as pl
from jax.experimental.pallas import tpu as pltpu

SLOPE = 0.01                      # nn.LeakyReLU default negative_slope
VMEM_LIMIT = 48 * 1024 * 1024     # explicit scoped-VMEM limit (fits v7x 64MiB)


def _leaky_relu(v):
    return jnp.where(v >= 0, v, SLOPE * v)


# ---------------------------------------------------------------------------
# Kernel 1: conv 3x3 / stride 2 (Cin -> mid) + LeakyReLU, then depthwise 7x7
#           (stride 1, pad 3) + LeakyReLU.  One grid step == one batch element.
# Input is the padded image pre-split into its 4 stride-2 phases, so every tap
# of the strided conv is a contiguous slice.
# ---------------------------------------------------------------------------
def _stem_head_kernel(xp_ref, w1_ref, b1_ref, wdw_ref, bdw_ref,
                      o_ref, pad_ref, *, ho, wo, cin, mid, cdt):
    # ---- 3x3 stride-2 conv via in-kernel im2col over the phase planes (MXU) --
    taps = []
    for ky in range(3):
        py, dy = ky % 2, ky // 2
        for kx in range(3):
            px, dx = kx % 2, kx // 2
            taps.append(xp_ref[2 * py + px, dy:dy + ho, dx:dx + wo, :])
    patches = jnp.concatenate(taps, axis=-1).reshape(ho * wo, 9 * cin)
    o1 = jnp.dot(patches.astype(cdt), w1_ref[...],
                 preferred_element_type=jnp.float32)
    o1 = _leaky_relu(o1 + b1_ref[...]).reshape(ho, wo, mid)

    # ---- depthwise 7x7 (+3 zero halo held in VMEM scratch), fp32 on the VPU --
    pad_ref[...] = jnp.zeros_like(pad_ref)
    pad_ref[3:3 + ho, 3:3 + wo, :] = o1

    wdw = wdw_ref[...]                                   # (49, mid), resident
    acc = jnp.zeros((ho, wo, mid), jnp.float32)
    for ky in range(7):
        row = pad_ref[ky:ky + ho, :, :]                  # one row slice per ky
        for kx in range(7):
            acc = acc + row[:, kx:kx + wo, :] * wdw[ky * 7 + kx, :]
    acc = _leaky_relu(acc + bdw_ref[0, :])
    o_ref[0] = acc.astype(o_ref.dtype)


# ---------------------------------------------------------------------------
# Kernel 2: fused tail.  Reads the phase-split `o` once and computes
#   b1 = act(conv3x3_s2(act(conv1x1(o))))     (branch1)
#   b2 = maxpool2x2(o)                         (branch2, == max over phases)
#   out = concat(b1, b2) @ W_out + b           (split-K GEMM)
# ---------------------------------------------------------------------------
def _stem_tail_kernel(oP_ref, w11_ref, b11_ref, w12_ref, b12_ref,
                      wca_ref, wcb_ref, bo_ref, out_ref, b1ap_ref,
                      *, h4, w4, mid, cout, cdt):
    oP = oP_ref[...]                                     # (4, h4, w4, mid)

    # branch2: 2x2 max-pool == max over the four stride-2 phases (fp32 VPU)
    b2 = jnp.max(oP, axis=0).reshape(h4 * w4, mid)

    # branch1[0]: 1x1 conv + LeakyReLU, applied phase-wise (MXU)
    b1a = jnp.dot(oP.reshape(4 * h4 * w4, mid).astype(cdt), w11_ref[...],
                  preferred_element_type=jnp.float32)
    b1a = _leaky_relu(b1a + b11_ref[...]).reshape(4, h4, w4, mid)

    # scatter phases into a top/left zero-padded scratch (the pad=1 of the
    # following stride-2 conv) -- contiguous stores only.
    b1ap_ref[...] = jnp.zeros_like(b1ap_ref)
    for p in range(4):
        b1ap_ref[p, 1:, 1:, :] = b1a[p]

    # branch1[1]: 3x3 stride-2 conv + LeakyReLU via phase taps (MXU)
    # tap index k -> (phase parity, slice start): 0 -> (1,0), 1 -> (0,1), 2 -> (1,1)
    pm = ((1, 0), (0, 1), (1, 1))
    taps = []
    for ky in range(3):
        pyk, sy = pm[ky]
        for kx in range(3):
            pxk, sx = pm[kx]
            taps.append(b1ap_ref[2 * pyk + pxk, sy:sy + h4, sx:sx + w4, :])
    pat = jnp.concatenate(taps, axis=-1).reshape(h4 * w4, 9 * mid)
    b1 = jnp.dot(pat.astype(cdt), w12_ref[...], preferred_element_type=jnp.float32)
    b1 = _leaky_relu(b1 + b12_ref[...])

    # concat + final 1x1 conv == split-K GEMM over the two branches (MXU)
    out = jnp.dot(b1.astype(cdt), wca_ref[...], preferred_element_type=jnp.float32)
    out = out + jnp.dot(b2.astype(cdt), wcb_ref[...],
                        preferred_element_type=jnp.float32)
    out = out + bo_ref[...]
    out_ref[0] = out.reshape(h4, w4, cout).astype(out_ref.dtype)


# ---------------------------------------------------------------------------
# Host-side layout plumbing
# ---------------------------------------------------------------------------
def _phase_split(x, th, tw):
    """(N, 2*th, 2*tw, C) -> (N*4, th, tw, C); plane index = 2*py + px."""
    N, _, _, C = x.shape
    x = x.reshape(N, th, 2, tw, 2, C).transpose(0, 2, 4, 1, 3, 5)
    return x.reshape(N * 4, th, tw, C)


# ---------------------------------------------------------------------------
# Stem: parameters + forward
# ---------------------------------------------------------------------------
def init_stem_params(key, out_channel=64, min_mid_c=32, in_channels=3):
    mid = out_channel // 4 if out_channel // 4 >= min_mid_c else min_mid_c
    ks = jax.random.split(key, 10)

    def rnd(k, shape, fan_in):
        return jax.random.normal(k, shape, jnp.float32) / jnp.sqrt(float(fan_in))

    params = dict(
        # conv1[0]: RepBlock 3x3 stride 2, 3 -> mid (fused conv + LeakyReLU)
        w1a=rnd(ks[0], (3, 3, in_channels, mid), 9 * in_channels),
        b1a=rnd(ks[1], (mid,), mid),
        # conv1[1]: RepBlock 7x7 depthwise, stride 1 (fused conv + LeakyReLU)
        w_dw=rnd(ks[2], (7, 7, mid), 49),
        b_dw=rnd(ks[3], (mid,), mid),
        # branch1[0]: RepConv 1x1
        w_b1_1=rnd(ks[4], (1, 1, mid, mid), mid),
        b_b1_1=rnd(ks[5], (mid,), mid),
        # branch1[1]: RepConv 3x3 stride 2
        w_b1_2=rnd(ks[6], (3, 3, mid, mid), 9 * mid),
        b_b1_2=rnd(ks[7], (mid,), mid),
        # conv1x1: plain Conv2d(2*mid -> out_channel), no activation
        w_out=rnd(ks[8], (1, 1, 2 * mid, out_channel), 2 * mid),
        b_out=rnd(ks[9], (out_channel,), out_channel),
    )
    return params, mid


def stem_forward(x_nchw, params, compute_dtype=jnp.float32):
    x = jnp.transpose(x_nchw, (0, 2, 3, 1)).astype(jnp.float32)   # NCHW -> NHWC
    N, H, W, cin = x.shape
    mid = params['w1a'].shape[-1]
    cout = params['w_out'].shape[-1]

    ho = (H - 1) // 2 + 1          # conv 3x3 / s2 / pad 1 output size
    wo = (W - 1) // 2 + 1
    # TODO(synk): odd conv1 output sizes (ceil-mode pool) not supported.
    assert ho % 2 == 0 and wo % 2 == 0, "stem kernel requires even conv1 output"
    h4, w4 = ho // 2, wo // 2

    # pad to (2*ho+2, 2*wo+2) and pre-split the stride-2 phases of the input
    xp = jnp.pad(x, ((0, 0), (1, 2 * ho + 1 - H), (1, 2 * wo + 1 - W), (0, 0)))
    xP = _phase_split(xp, ho + 1, wo + 1)

    cdt = compute_dtype
    w1 = params['w1a'].reshape(9 * cin, mid).astype(cdt)
    b1 = params['b1a'].reshape(1, mid).astype(jnp.float32)
    wdw = params['w_dw'].reshape(49, mid).astype(jnp.float32)
    bdw = params['b_dw'].reshape(1, mid).astype(jnp.float32)
    w11 = params['w_b1_1'].reshape(mid, mid).astype(cdt)
    b11 = params['b_b1_1'].reshape(1, mid).astype(jnp.float32)
    w12 = params['w_b1_2'].reshape(9 * mid, mid).astype(cdt)
    b12 = params['b_b1_2'].reshape(1, mid).astype(jnp.float32)
    wout = params['w_out'].reshape(2 * mid, cout)
    wca = wout[:mid, :].astype(cdt)          # multiplies branch1 channels
    wcb = wout[mid:, :].astype(cdt)          # multiplies branch2 channels
    bo = params['b_out'].reshape(1, cout).astype(jnp.float32)

    cparams = pltpu.CompilerParams(dimension_semantics=("parallel",),
                                   vmem_limit_bytes=VMEM_LIMIT)

    # ---- kernel 1: conv3x3/s2 + act + depthwise 7x7 + act ------------------
    o = pl.pallas_call(
        functools.partial(_stem_head_kernel,
                          ho=ho, wo=wo, cin=cin, mid=mid, cdt=cdt),
        out_shape=jax.ShapeDtypeStruct((N, ho, wo, mid), jnp.float32),
        grid_spec=pltpu.PrefetchScalarGridSpec(
            num_scalar_prefetch=0,
            grid=(N,),
            in_specs=[
                pl.BlockSpec((4, ho + 1, wo + 1, cin), lambda n: (n, 0, 0, 0)),
                pl.BlockSpec((9 * cin, mid), lambda n: (0, 0)),
                pl.BlockSpec((1, mid), lambda n: (0, 0)),
                pl.BlockSpec((49, mid), lambda n: (0, 0)),
                pl.BlockSpec((1, mid), lambda n: (0, 0)),
            ],
            out_specs=pl.BlockSpec((1, ho, wo, mid), lambda n: (n, 0, 0, 0)),
            scratch_shapes=[pltpu.VMEM((ho + 6, wo + 6, mid), jnp.float32)],
        ),
        compiler_params=cparams,
    )(xP, w1, b1, wdw, bdw)

    # phase-split `o` once; serves both the stride-2 conv and the 2x2 pool
    oP = _phase_split(o, h4, w4)

    # ---- kernel 2: fused tail (1x1 + 3x3/s2 + pool + concat + 1x1) ---------
    out = pl.pallas_call(
        functools.partial(_stem_tail_kernel,
                          h4=h4, w4=w4, mid=mid, cout=cout, cdt=cdt),
        out_shape=jax.ShapeDtypeStruct((N, h4, w4, cout), jnp.float32),
        grid_spec=pltpu.PrefetchScalarGridSpec(
            num_scalar_prefetch=0,
            grid=(N,),
            in_specs=[
                pl.BlockSpec((4, h4, w4, mid), lambda n: (n, 0, 0, 0)),
                pl.BlockSpec((mid, mid), lambda n: (0, 0)),
                pl.BlockSpec((1, mid), lambda n: (0, 0)),
                pl.BlockSpec((9 * mid, mid), lambda n: (0, 0)),
                pl.BlockSpec((1, mid), lambda n: (0, 0)),
                pl.BlockSpec((mid, cout), lambda n: (0, 0)),
                pl.BlockSpec((mid, cout), lambda n: (0, 0)),
                pl.BlockSpec((1, cout), lambda n: (0, 0)),
            ],
            out_specs=pl.BlockSpec((1, h4, w4, cout), lambda n: (n, 0, 0, 0)),
            scratch_shapes=[pltpu.VMEM((4, h4 + 1, w4 + 1, mid), jnp.float32)],
        ),
        compiler_params=cparams,
    )(oP, w11, b11, w12, b12, wca, wcb, bo)

    return jnp.transpose(out, (0, 3, 1, 2))              # NHWC -> NCHW


# ---------------------------------------------------------------------------
# Pure-JAX reference (mirrors the compute-dtype policy of the kernels)
# ---------------------------------------------------------------------------
def stem_reference(x_nchw, params, compute_dtype=jnp.float32):
    def act(v):
        return jnp.where(v >= 0, v, SLOPE * v)

    def conv(x, w, b, s, p, groups=1, cast=True):
        xd = x.astype(compute_dtype) if cast else x.astype(jnp.float32)
        wd = w.astype(compute_dtype) if cast else w.astype(jnp.float32)
        out = jax.lax.conv_general_dilated(
            xd, wd, (s, s), ((p, p), (p, p)),
            dimension_numbers=('NHWC', 'HWIO', 'NHWC'),
            feature_group_count=groups,
            preferred_element_type=jnp.float32)
        return out + b

    x = jnp.transpose(x_nchw, (0, 2, 3, 1)).astype(jnp.float32)
    o = act(conv(x, params['w1a'], params['b1a'], 2, 1))
    C = o.shape[-1]
    o = act(conv(o, params['w_dw'].reshape(7, 7, 1, C), params['b_dw'],
                 1, 3, groups=C, cast=False))
    b1 = act(conv(o, params['w_b1_1'], params['b_b1_1'], 1, 0))
    b1 = act(conv(b1, params['w_b1_2'], params['b_b1_2'], 2, 1))
    N, Ho, Wo, _ = o.shape
    b2 = o.reshape(N, Ho // 2, 2, Wo // 2, 2, C).max(axis=(2, 4))
    cat = jnp.concatenate([b1, b2], axis=-1)
    out = conv(cat, params['w_out'], params['b_out'], 1, 0)
    return jnp.transpose(out, (0, 3, 1, 2))


if __name__ == "__main__":
    key = jax.random.PRNGKey(0)
    kx, kp = jax.random.split(key)

    # Small shapes consistent with the module: batch=2, 3 RGB channels, 16x16.
    x = jax.random.normal(kx, (2, 3, 16, 16), jnp.float32)
    params, mid = init_stem_params(kp, out_channel=64, min_mid_c=32)

    # fp32 MXU path -- strict check against the XLA reference
    fwd_f32 = jax.jit(functools.partial(stem_forward, compute_dtype=jnp.float32))
    out = jax.block_until_ready(fwd_f32(x, params))
    assert out.shape == (2, 64, 4, 4), out.shape
    ref = stem_reference(x, params, jnp.float32)
    err = float(jnp.max(jnp.abs(out - ref)))
    assert jnp.allclose(out, ref, atol=1e-4, rtol=1e-4), err

    # bf16 MXU path (fp32 accumulation, fp32 VPU math) -- loose sanity check
    fwd_bf16 = jax.jit(functools.partial(stem_forward, compute_dtype=jnp.bfloat16))
    out_bf = jax.block_until_ready(fwd_bf16(x, params))
    err_bf = float(jnp.max(jnp.abs(out_bf - ref)))
    assert jnp.allclose(out_bf, ref, atol=2e-1, rtol=5e-2), err_bf

    print("KERNEL_OK")
</pallas_src>

<mosaic_0001>
module attributes {stable_mosaic.version = 11 : i64} {
  func.func @_stem_head_kernel(%arg0: i32, %arg1: memref<4x9x9x3xf32, #tpu.memory_space<vmem>>, %arg2: memref<27x32xf32, #tpu.memory_space<vmem>>, %arg3: memref<1x32xf32, #tpu.memory_space<vmem>>, %arg4: memref<49x32xf32, #tpu.memory_space<vmem>>, %arg5: memref<1x32xf32, #tpu.memory_space<vmem>>, %arg6: memref<1x8x8x32xf32, #tpu.memory_space<vmem>>, %arg7: memref<14x14x32xf32, #tpu.memory_space<vmem>>) attributes {dimension_semantics = [#tpu.dimension_semantics<parallel>], iteration_bounds = array<i64: 2>, scalar_prefetch = 0 : i64, scratch_operands = 1 : i64, tpu.core_type = #tpu.core_type<tc>, window_params = [{transform_indices = @transform_0, window_bounds = array<i64: 4, 9, 9, 3>}, {pipeline_mode = #tpu.pipeline_mode<synchronous>, transform_indices = @transform_1, window_bounds = array<i64: 27, 32>}, {pipeline_mode = #tpu.pipeline_mode<synchronous>, transform_indices = @transform_2, window_bounds = array<i64: 1, 32>}, {pipeline_mode = #tpu.pipeline_mode<synchronous>, transform_indices = @transform_3, window_bounds = array<i64: 49, 32>}, {pipeline_mode = #tpu.pipeline_mode<synchronous>, transform_indices = @transform_4, window_bounds = array<i64: 1, 32>}, {transform_indices = @transform_5, window_bounds = array<i64: 1, 8, 8, 32>}]} {
    %c0 = arith.constant 0 : index
    %c0_0 = arith.constant 0 : index
    %c0_1 = arith.constant 0 : index
    %c0_2 = arith.constant 0 : index
    %0 = vector.load %arg1[%c0, %c0_0, %c0_1, %c0_2] : memref<4x9x9x3xf32, #tpu.memory_space<vmem>>, vector<1x8x8x3xf32>
    %1 = vector.shape_cast %0 : vector<1x8x8x3xf32> to vector<8x8x3xf32>
    %c1 = arith.constant 1 : index
    %c0_3 = arith.constant 0 : index
    %c0_4 = arith.constant 0 : index
    %c0_5 = arith.constant 0 : index
    %2 = vector.load %arg1[%c1, %c0_3, %c0_4, %c0_5] : memref<4x9x9x3xf32, #tpu.memory_space<vmem>>, vector<1x8x8x3xf32>
    %3 = vector.shape_cast %2 : vector<1x8x8x3xf32> to vector<8x8x3xf32>
    %c0_6 = arith.constant 0 : index
    %c0_7 = arith.constant 0 : index
    %c1_8 = arith.constant 1 : index
    %c0_9 = arith.constant 0 : index
    %4 = vector.load %arg1[%c0_6, %c0_7, %c1_8, %c0_9] : memref<4x9x9x3xf32, #tpu.memory_space<vmem>>, vector<1x8x8x3xf32>
    %5 = vector.shape_cast %4 : vector<1x8x8x3xf32> to vector<8x8x3xf32>
    %c2 = arith.constant 2 : index
    %c0_10 = arith.constant 0 : index
    %c0_11 = arith.constant 0 : index
    %c0_12 = arith.constant 0 : index
    %6 = vector.load %arg1[%c2, %c0_10, %c0_11, %c0_12] : memref<4x9x9x3xf32, #tpu.memory_space<vmem>>, vector<1x8x8x3xf32>
    %7 = vector.shape_cast %6 : vector<1x8x8x3xf32> to vector<8x8x3xf32>
    %c3 = arith.constant 3 : index
    %c0_13 = arith.constant 0 : index
    %c0_14 = arith.constant 0 : index
    %c0_15 = arith.constant 0 : index
    %8 = vector.load %arg1[%c3, %c0_13, %c0_14, %c0_15] : memref<4x9x9x3xf32, #tpu.memory_space<vmem>>, vector<1x8x8x3xf32>
    %9 = vector.shape_cast %8 : vector<1x8x8x3xf32> to vector<8x8x3xf32>
    %c2_16 = arith.constant 2 : index
    %c0_17 = arith.constant 0 : index
    %c1_18 = arith.constant 1 : index
    %c0_19 = arith.constant 0 : index
    %10 = vector.load %arg1[%c2_16, %c0_17, %c1_18, %c0_19] : memref<4x9x9x3xf32, #tpu.memory_space<vmem>>, vector<1x8x8x3xf32>
    %11 = vector.shape_cast %10 : vector<1x8x8x3xf32> to vector<8x8x3xf32>
    %c0_20 = arith.constant 0 : index
    %c1_21 = arith.constant 1 : index
    %c0_22 = arith.constant 0 : index
    %c0_23 = arith.constant 0 : index
    %12 = vector.load %arg1[%c0_20, %c1_21, %c0_22, %c0_23] : memref<4x9x9x3xf32, #tpu.memory_space<vmem>>, vector<1x8x8x3xf32>
    %13 = vector.shape_cast %12 : vector<1x8x8x3xf32> to vector<8x8x3xf32>
    %c1_24 = arith.constant 1 : index
    %c1_25 = arith.constant 1 : index
    %c0_26 = arith.constant 0 : index
    %c0_27 = arith.constant 0 : index
    %14 = vector.load %arg1[%c1_24, %c1_25, %c0_26, %c0_27] : memref<4x9x9x3xf32, #tpu.memory_space<vmem>>, vector<1x8x8x3xf32>
    %15 = vector.shape_cast %14 : vector<1x8x8x3xf32> to vector<8x8x3xf32>
    %c0_28 = arith.constant 0 : index
    %c1_29 = arith.constant 1 : index
    %c1_30 = arith.constant 1 : index
    %c0_31 = arith.constant 0 : index
    %16 = vector.load %arg1[%c0_28, %c1_29, %c1_30, %c0_31] : memref<4x9x9x3xf32, #tpu.memory_space<vmem>>, vector<1x8x8x3xf32>
    %17 = vector.shape_cast %16 : vector<1x8x8x3xf32> to vector<8x8x3xf32>
    %18 = tpu.concatenate %1, %3, %5, %7, %9, %11, %13, %15, %17 in 2 : vector<8x8x3xf32>, vector<8x8x3xf32>, vector<8x8x3xf32>, vector<8x8x3xf32>, vector<8x8x3xf32>, vector<8x8x3xf32>, vector<8x8x3xf32>, vector<8x8x3xf32>, vector<8x8x3xf32> -> vector<8x8x27xf32>
    %19 = vector.shape_cast %18 : vector<8x8x27xf32> to vector<64x27xf32>
    %c0_32 = arith.constant 0 : index
    %c0_33 = arith.constant 0 : index
    %20 = vector.load %arg2[%c0_32, %c0_33] : memref<27x32xf32, #tpu.memory_space<vmem>>, vector<27x32xf32>
    %cst = arith.constant dense<0.000000e+00> : vector<64x32xf32>
    %21 = tpu.matmul %19, %20, %cst {dimension_numbers = #tpu.dot_dimension_numbers<[1], [0], [0], [1], [0, 0, 1, 1], [], []>} : vector<64x27xf32>, vector<27x32xf32>, vector<64x32xf32> -> vector<64x32xf32>
    %c0_34 = arith.constant 0 : index
    %c0_35 = arith.constant 0 : index
    %22 = vector.load %arg3[%c0_34, %c0_35] : memref<1x32xf32, #tpu.memory_space<vmem>>, vector<1x32xf32>
    %23 = vector.broadcast %22 : vector<1x32xf32> to vector<64x32xf32>
    %24 = arith.addf %21, %23 : vector<64x32xf32>
    %cst_36 = arith.constant 0.000000e+00 : f32
    %25 = vector.broadcast %cst_36 : f32 to vector<64x32xf32>
    %26 = arith.cmpf oge, %24, %25 : vector<64x32xf32>
    %cst_37 = arith.constant 0.00999999977 : f32
    %27 = vector.broadcast %cst_37 : f32 to vector<64x32xf32>
    %28 = arith.mulf %27, %24 : vector<64x32xf32>
    %29 = arith.select %26, %24, %28 : vector<64x32xi1>, vector<64x32xf32>
    %30 = vector.shape_cast %29 : vector<64x32xf32> to vector<8x8x32xf32>
    %cst_38 = arith.constant 0.000000e+00 : f32
    %31 = vector.broadcast %cst_38 : f32 to vector<14x14x32xf32>
    %c0_39 = arith.constant 0 : index
    %c0_40 = arith.constant 0 : index
    %c0_41 = arith.constant 0 : index
    %32 = vector.load %arg7[%c0_39, %c0_40, %c0_41] : memref<14x14x32xf32, #tpu.memory_space<vmem>>, vector<14x14x32xf32>
    tpu.vector_store %arg7[%c0_39, %c0_40, %c0_41], %31 {strides = array<i32>} : memref<14x14x32xf32, #tpu.memory_space<vmem>>, vector<14x14x32xf32>,
    %c3_42 = arith.constant 3 : index
    %c3_43 = arith.constant 3 : index
    %c0_44 = arith.constant 0 : index
    %33 = vector.load %arg7[%c3_42, %c3_43, %c0_44] : memref<14x14x32xf32, #tpu.memory_space<vmem>>, vector<8x8x32xf32>
    tpu.vector_store %arg7[%c3_42, %c3_43, %c0_44], %30 {strides = array<i32>} : memref<14x14x32xf32, #tpu.memory_space<vmem>>, vector<8x8x32xf32>,
    %c0_45 = arith.constant 0 : index
    %c0_46 = arith.constant 0 : index
    %34 = vector.load %arg4[%c0_45, %c0_46] : memref<49x32xf32, #tpu.memory_space<vmem>>, vector<49x32xf32>
    %cst_47 = arith.constant 0.000000e+00 : f32
    %35 = vector.broadcast %cst_47 : f32 to vector<8x8x32xf32>
    %c0_48 = arith.constant 0 : index
    %c0_49 = arith.constant 0 : index
    %c0_50 = arith.constant 0 : index
    %36 = vector.load %arg7[%c0_48, %c0_49, %c0_50] : memref<14x14x32xf32, #tpu.memory_space<vmem>>, vector<8x14x32xf32>
    %37 = vector.extract_strided_slice %36 {offsets = [0, 0, 0], sizes = [8, 8, 32], strides = [1, 1, 1]} : vector<8x14x32xf32> to vector<8x8x32xf32>
    %38 = vector.extract_strided_slice %34 {offsets = [0, 0], sizes = [1, 32], strides = [1, 1]} : vector<49x32xf32> to vector<1x32xf32>
    %39 = vector.shape_cast %38 : vector<1x32xf32> to vector<32xf32>
    %40 = vector.shape_cast %39 : vector<32xf32> to vector<1x1x32xf32>
    %41 = vector.broadcast %40 : vector<1x1x32xf32> to vector<8x8x32xf32>
    %42 = arith.mulf %37, %41 : vector<8x8x32xf32>
    %43 = arith.addf %35, %42 : vector<8x8x32xf32>
    %44 = vector.extract_strided_slice %36 {offsets = [0, 1, 0], sizes = [8, 8, 32], strides = [1, 1, 1]} : vector<8x14x32xf32> to vector<8x8x32xf32>
    %45 = vector.extract_strided_slice %34 {offsets = [1, 0], sizes = [1, 32], strides = [1, 1]} : vector<49x32xf32> to vector<1x32xf32>
    %46 = vector.shape_cast %45 : vector<1x32xf32> to vector<32xf32>
    %47 = vector.shape_cast %46 : vector<32xf32> to vector<1x1x32xf32>
    %48 = vector.broadcast %47 : vector<1x1x32xf32> to vector<8x8x32xf32>
    %49 = arith.mulf %44, %48 : vector<8x8x32xf32>
    %50 = arith.addf %43, %49 : vector<8x8x32xf32>
    %51 = vector.extract_strided_slice %36 {offsets = [0, 2, 0], sizes = [8, 8, 32], strides = [1, 1, 1]} : vector<8x14x32xf32> to vector<8x8x32xf32>
    %52 = vector.extract_strided_slice %34 {offsets = [2, 0], sizes = [1, 32], strides = [1, 1]} : vector<49x32xf32> to vector<1x32xf32>
    %53 = vector.shape_cast %52 : vector<1x32xf32> to vector<32xf32>
    %54 = vector.shape_cast %53 : vector<32xf32> to vector<1x1x32xf32>
    %55 = vector.broadcast %54 : vector<1x1x32xf32> to vector<8x8x32xf32>
    %56 = arith.mulf %51, %55 : vector<8x8x32xf32>
    %57 = arith.addf %50, %56 : vector<8x8x32xf32>
    %58 = vector.extract_strided_slice %36 {offsets = [0, 3, 0], sizes = [8, 8, 32], strides = [1, 1, 1]} : vector<8x14x32xf32> to vector<8x8x32xf32>
    %59 = vector.extract_strided_slice %34 {offsets = [3, 0], sizes = [1, 32], strides = [1, 1]} : vector<49x32xf32> to vector<1x32xf32>
    %60 = vector.shape_cast %59 : vector<1x32xf32> to vector<32xf32>
    %61 = vector.shape_cast %60 : vector<32xf32> to vector<1x1x32xf32>
    %62 = vector.broadcast %61 : vector<1x1x32xf32> to vector<8x8x32xf32>
    %63 = arith.mulf %58, %62 : vector<8x8x32xf32>
    %64 = arith.addf %57, %63 : vector<8x8x32xf32>
    %65 = vector.extract_strided_slice %36 {offsets = [0, 4, 0], sizes = [8, 8, 32], strides = [1, 1, 1]} : vector<8x14x32xf32> to vector<8x8x32xf32>
    %66 = vector.extract_strided_slice %34 {offsets = [4, 0], sizes = [1, 32], strides = [1, 1]} : vector<49x32xf32> to vector<1x32xf32>
    %67 = vector.shape_cast %66 : vector<1x32xf32> to vector<32xf32>
    %68 = vector.shape_cast %67 : vector<32xf32> to vector<1x1x32xf32>
    %69 = vector.broadcast %68 : vector<1x1x32xf32> to vector<8x8x32xf32>
    %70 = arith.mulf %65, %69 : vector<8x8x32xf32>
    %71 = arith.addf %64, %70 : vector<8x8x32xf32>
    %72 = vector.extract_strided_slice %36 {offsets = [0, 5, 0], sizes = [8, 8, 32], strides = [1, 1, 1]} : vector<8x14x32xf32> to vector<8x8x32xf32>
    %73 = vector.extract_strided_slice %34 {offsets = [5, 0], sizes = [1, 32], strides = [1, 1]} : vector<49x32xf32> to vector<1x32xf32>
    %74 = vector.shape_cast %73 : vector<1x32xf32> to vector<32xf32>
    %75 = vector.shape_cast %74 : vector<32xf32> to vector<1x1x32xf32>
    %76 = vector.broadcast %75 : vector<1x1x32xf32> to vector<8x8x32xf32>
    %77 = arith.mulf %72, %76 : vector<8x8x32xf32>
    %78 = arith.addf %71, %77 : vector<8x8x32xf32>
    %79 = vector.extract_strided_slice %36 {offsets = [0, 6, 0], sizes = [8, 8, 32], strides = [1, 1, 1]} : vector<8x14x32xf32> to vector<8x8x32xf32>
    %80 = vector.extract_strided_slice %34 {offsets = [6, 0], sizes = [1, 32], strides = [1, 1]} : vector<49x32xf32> to vector<1x32xf32>
    %81 = vector.shape_cast %80 : vector<1x32xf32> to vector<32xf32>
    %82 = vector.shape_cast %81 : vector<32xf32> to vector<1x1x32xf32>
    %83 = vector.broadcast %82 : vector<1x1x32xf32> to vector<8x8x32xf32>
    %84 = arith.mulf %79, %83 : vector<8x8x32xf32>
    %85 = arith.addf %78, %84 : vector<8x8x32xf32>
    %c1_51 = arith.constant 1 : index
    %c0_52 = arith.constant 0 : index
    %c0_53 = arith.constant 0 : index
    %86 = vector.load %arg7[%c1_51, %c0_52, %c0_53] : memref<14x14x32xf32, #tpu.memory_space<vmem>>, vector<8x14x32xf32>
    %87 = vector.extract_strided_slice %86 {offsets = [0, 0, 0], sizes = [8, 8, 32], strides = [1, 1, 1]} : vector<8x14x32xf32> to vector<8x8x32xf32>
    %88 = vector.extract_strided_slice %34 {offsets = [7, 0], sizes = [1, 32], strides = [1, 1]} : vector<49x32xf32> to vector<1x32xf32>
    %89 = vector.shape_cast %88 : vector<1x32xf32> to vector<32xf32>
    %90 = vector.shape_cast %89 : vector<32xf32> to vector<1x1x32xf32>
    %91 = vector.broadcast %90 : vector<1x1x32xf32> to vector<8x8x32xf32>
    %92 = arith.mulf %87, %91 : vector<8x8x32xf32>
    %93 = arith.addf %85, %92 : vector<8x8x32xf32>
    %94 = vector.extract_strided_slice %86 {offsets = [0, 1, 0], sizes = [8, 8, 32], strides = [1, 1, 1]} : vector<8x14x32xf32> to vector<8x8x32xf32>
    %95 = vector.extract_strided_slice %34 {offsets = [8, 0], sizes = [1, 32], strides = [1, 1]} : vector<49x32xf32> to vector<1x32xf32>
    %96 = vector.shape_cast %95 : vector<1x32xf32> to vector<32xf32>
    %97 = vector.shape_cast %96 : vector<32xf32> to vector<1x1x32xf32>
    %98 = vector.broadcast %97 : vector<1x1x32xf32> to vector<8x8x32xf32>
    %99 = arith.mulf %94, %98 : vector<8x8x32xf32>
    %100 = arith.addf %93, %99 : vector<8x8x32xf32>
    %101 = vector.extract_strided_slice %86 {offsets = [0, 2, 0], sizes = [8, 8, 32], strides = [1, 1, 1]} : vector<8x14x32xf32> to vector<8x8x32xf32>
    %102 = vector.extract_strided_slice %34 {offsets = [9, 0], sizes = [1, 32], strides = [1, 1]} : vector<49x32xf32> to vector<1x32xf32>
    %103 = vector.shape_cast %102 : vector<1x32xf32> to vector<32xf32>
    %104 = vector.shape_cast %103 : vector<32xf32> to vector<1x1x32xf32>
    %105 = vector.broadcast %104 : vector<1x1x32xf32> to vector<8x8x32xf32>
    %106 = arith.mulf %101, %105 : vector<8x8x32xf32>
    %107 = arith.addf %100, %106 : vector<8x8x32xf32>
    %108 = vector.extract_strided_slice %86 {offsets = [0, 3, 0], sizes = [8, 8, 32], strides = [1, 1, 1]} : vector<8x14x32xf32> to vector<8x8x32xf32>
    %109 = vector.extract_strided_slice %34 {offsets = [10, 0], sizes = [1, 32], strides = [1, 1]} : vector<49x32xf32> to vector<1x32xf32>
    %110 = vector.shape_cast %109 : vector<1x32xf32> to vector<32xf32>
    %111 = vector.shape_cast %110 : vector<32xf32> to vector<1x1x32xf32>
    %112 = vector.broadcast %111 : vector<1x1x32xf32> to vector<8x8x32xf32>
    %113 = arith.mulf %108, %112 : vector<8x8x32xf32>
    %114 = arith.addf %107, %113 : vector<8x8x32xf32>
    %115 = vector.extract_strided_slice %86 {offsets = [0, 4, 0], sizes = [8, 8, 32], strides = [1, 1, 1]} : vector<8x14x32xf32> to vector<8x8x32xf32>
    %116 = vector.extract_strided_slice %34 {offsets = [11, 0], sizes = [1, 32], strides = [1, 1]} : vector<49x32xf32> to vector<1x32xf32>
    %117 = vector.shape_cast %116 : vector<1x32xf32> to vector<32xf32>
    %118 = vector.shape_cast %117 : vector<32xf32> to vector<1x1x32xf32>
    %119 = vector.broadcast %118 : vector<1x1x32xf32> to vector<8x8x32xf32>
    %120 = arith.mulf %115, %119 : vector<8x8x32xf32>
    %121 = arith.addf %114, %120 : vector<8x8x32xf32>
    %122 = vector.extract_strided_slice %86 {offsets = [0, 5, 0], sizes = [8, 8, 32], strides = [1, 1, 1]} : vector<8x14x32xf32> to vector<8x8x32xf32>
    %123 = vector.extract_strided_slice %34 {offsets = [12, 0], sizes = [1, 32], strides = [1, 1]} : vector<49x32xf32> to vector<1x32xf32>
    %124 = vector.shape_cast %123 : vector<1x32xf32> to vector<32xf32>
    %125 = vector.shape_cast %124 : vector<32xf32> to vector<1x1x32xf32>
    %126 = vector.broadcast %125 : vector<1x1x32xf32> to vector<8x8x32xf32>
    %127 = arith.mulf %122, %126 : vector<8x8x32xf32>
    %128 = arith.addf %121, %127 : vector<8x8x32xf32>
    %129 = vector.extract_strided_slice %86 {offsets = [0, 6, 0], sizes = [8, 8, 32], strides = [1, 1, 1]} : vector<8x14x32xf32> to vector<8x8x32xf32>
    %130 = vector.extract_strided_slice %34 {offsets = [13, 0], sizes = [1, 32], strides = [1, 1]} : vector<49x32xf32> to vector<1x32xf32>
    %131 = vector.shape_cast %130 : vector<1x32xf32> to vector<32xf32>
    %132 = vector.shape_cast %131 : vector<32xf32> to vector<1x1x32xf32>
    %133 = vector.broadcast %132 : vector<1x1x32xf32> to vector<8x8x32xf32>
    %134 = arith.mulf %129, %133 : vector<8x8x32xf32>
    %135 = arith.addf %128, %134 : vector<8x8x32xf32>
    %c2_54 = arith.constant 2 : index
    %c0_55 = arith.constant 0 : index
    %c0_56 = arith.constant 0 : index
    %136 = vector.load %arg7[%c2_54, %c0_55, %c0_56] : memref<14x14x32xf32, #tpu.memory_space<vmem>>, vector<8x14x32xf32>
    %137 = vector.extract_strided_slice %136 {offsets = [0, 0, 0], sizes = [8, 8, 32], strides = [1, 1, 1]} : vector<8x14x32xf32> to vector<8x8x32xf32>
    %138 = vector.extract_strided_slice %34 {offsets = [14, 0], sizes = [1, 32], strides = [1, 1]} : vector<49x32xf32> to vector<1x32xf32>
    %139 = vector.shape_cast %138 : vector<1x32xf32> to vector<32xf32>
    %140 = vector.shape_cast %139 : vector<32xf32> to vector<1x1x32xf32>
    %141 = vector.broadcast %140 : vector<1x1x32xf32> to vector<8x8x32xf32>
    %142 = arith.mulf %137, %141 : vector<8x8x32xf32>
    %143 = arith.addf %135, %142 : vector<8x8x32xf32>
    %144 = vector.extract_strided_slice %136 {offsets = [0, 1, 0], sizes = [8, 8, 32], strides = [1, 1, 1]} : vector<8x14x32xf32> to vector<8x8x32xf32>
    %145 = vector.extract_strided_slice %34 {offsets = [15, 0], sizes = [1, 32], strides = [1, 1]} : vector<49x32xf32> to vector<1x32xf32>
    %146 = vector.shape_cast %145 : vector<1x32xf32> to vector<32xf32>
    %147 = vector.shape_cast %146 : vector<32xf32> to vector<1x1x32xf32>
    %148 = vector.broadcast %147 : vector<1x1x32xf32> to vector<8x8x32xf32>
    %149 = arith.mulf %144, %148 : vector<8x8x32xf32>
    %150 = arith.addf %143, %149 : vector<8x8x32xf32>
    %151 = vector.extract_strided_slice %136 {offsets = [0, 2, 0], sizes = [8, 8, 32], strides = [1, 1, 1]} : vector<8x14x32xf32> to vector<8x8x32xf32>
    %152 = vector.extract_strided_slice %34 {offsets = [16, 0], sizes = [1, 32], strides = [1, 1]} : vector<49x32xf32> to vector<1x32xf32>
    %153 = vector.shape_cast %152 : vector<1x32xf32> to vector<32xf32>
    %154 = vector.shape_cast %153 : vector<32xf32> to vector<1x1x32xf32>
    %155 = vector.broadcast %154 : vector<1x1x32xf32> to vector<8x8x32xf32>
    %156 = arith.mulf %151, %155 : vector<8x8x32xf32>
    %157 = arith.addf %150, %156 : vector<8x8x32xf32>
    %158 = vector.extract_strided_slice %136 {offsets = [0, 3, 0], sizes = [8, 8, 32], strides = [1, 1, 1]} : vector<8x14x32xf32> to vector<8x8x32xf32>
    %159 = vector.extract_strided_slice %34 {offsets = [17, 0], sizes = [1, 32], strides = [1, 1]} : vector<49x32xf32> to vector<1x32xf32>
    %160 = vector.shape_cast %159 : vector<1x32xf32> to vector<32xf32>
    %161 = vector.shape_cast %160 : vector<32xf32> to vector<1x1x32xf32>
    %162 = vector.broadcast %161 : vector<1x1x32xf32> to vector<8x8x32xf32>
    %163 = arith.mulf %158, %162 : vector<8x8x32xf32>
    %164 = arith.addf %157, %163 : vector<8x8x32xf32>
    %165 = vector.extract_strided_slice %136 {offsets = [0, 4, 0], sizes = [8, 8, 32], strides = [1, 1, 1]} : vector<8x14x32xf32> to vector<8x8x32xf32>
    %166 = vector.extract_strided_slice %34 {offsets = [18, 0], sizes = [1, 32], strides = [1, 1]} : vector<49x32xf32> to vector<1x32xf32>
    %167 = vector.shape_cast %166 : vector<1x32xf32> to vector<32xf32>
    %168 = vector.shape_cast %167 : vector<32xf32> to vector<1x1x32xf32>
    %169 = vector.broadcast %168 : vector<1x1x32xf32> to vector<8x8x32xf32>
    %170 = arith.mulf %165, %169 : vector<8x8x32xf32>
    %171 = arith.addf %164, %170 : vector<8x8x32xf32>
    %172 = vector.extract_strided_slice %136 {offsets = [0, 5, 0], sizes = [8, 8, 32], strides = [1, 1, 1]} : vector<8x14x32xf32> to vector<8x8x32xf32>
    %173 = vector.extract_strided_slice %34 {offsets = [19, 0], sizes = [1, 32], strides = [1, 1]} : vector<49x32xf32> to vector<1x32xf32>
    %174 = vector.shape_cast %173 : vector<1x32xf32> to vector<32xf32>
    %175 = vector.shape_cast %174 : vector<32xf32> to vector<1x1x32xf32>
    %176 = vector.broadcast %175 : vector<1x1x32xf32> to vector<8x8x32xf32>
    %177 = arith.mulf %172, %176 : vector<8x8x32xf32>
    %178 = arith.addf %171, %177 : vector<8x8x32xf32>
    %179 = vector.extract_strided_slice %136 {offsets = [0, 6, 0], sizes = [8, 8, 32], strides = [1, 1, 1]} : vector<8x14x32xf32> to vector<8x8x32xf32>
    %180 = vector.extract_strided_slice %34 {offsets = [20, 0], sizes = [1, 32], strides = [1, 1]} : vector<49x32xf32> to vector<1x32xf32>
    %181 = vector.shape_cast %180 : vector<1x32xf32> to vector<32xf32>
    %182 = vector.shape_cast %181 : vector<32xf32> to vector<1x1x32xf32>
    %183 = vector.broadcast %182 : vector<1x1x32xf32> to vector<8x8x32xf32>
    %184 = arith.mulf %179, %183 : vector<8x8x32xf32>
    %185 = arith.addf %178, %184 : vector<8x8x32xf32>
    %c3_57 = arith.constant 3 : index
    %c0_58 = arith.constant 0 : index
    %c0_59 = arith.constant 0 : index
    %186 = vector.load %arg7[%c3_57, %c0_58, %c0_59] : memref<14x14x32xf32, #tpu.memory_space<vmem>>, vector<8x14x32xf32>
    %187 = vector.extract_strided_slice %186 {offsets = [0, 0, 0], sizes = [8, 8, 32], strides = [1, 1, 1]} : vector<8x14x32xf32> to vector<8x8x32xf32>
    %188 = vector.extract_strided_slice %34 {offsets = [21, 0], sizes = [1, 32], strides = [1, 1]} : vector<49x32xf32> to vector<1x32xf32>
    %189 = vector.shape_cast %188 : vector<1x32xf32> to vector<32xf32>
    %190 = vector.shape_cast %189 : vector<32xf32> to vector<1x1x32xf32>
    %191 = vector.broadcast %190 : vector<1x1x32xf32> to vector<8x8x32xf32>
    %192 = arith.mulf %187, %191 : vector<8x8x32xf32>
    %193 = arith.addf %185, %192 : vector<8x8x32xf32>
    %194 = vector.extract_strided_slice %186 {offsets = [0, 1, 0], sizes = [8, 8, 32], strides = [1, 1, 1]} : vector<8x14x32xf32> to vector<8x8x32xf32>
    %195 = vector.extract_strided_slice %34 {offsets = [22, 0], sizes = [1, 32], strides = [1, 1]} : vector<49x32xf32> to vector<1x32xf32>
    %196 = vector.shape_cast %195 : vector<1x32xf32> to vector<32xf32>
    %197 = vector.shape_cast %196 : vector<32xf32> to vector<1x1x32xf32>
    %198 = vector.broadcast %197 : vector<1x1x32xf32> to vector<8x8x32xf32>
    %199 = arith.mulf %194, %198 : vector<8x8x32xf32>
    %200 = arith.addf %193, %199 : vector<8x8x32xf32>
    %201 = vector.extract_strided_slice %186 {offsets = [0, 2, 0], sizes = [8, 8, 32], strides = [1, 1, 1]} : vector<8x14x32xf32> to vector<8x8x32xf32>
    %202 = vector.extract_strided_slice %34 {offsets = [23, 0], sizes = [1, 32], strides = [1, 1]} : vector<49x32xf32> to vector<1x32xf32>
    %203 = vector.shape_cast %202 : vector<1x32xf32> to vector<32xf32>
    %204 = vector.shape_cast %203 : vector<32xf32> to vector<1x1x32xf32>
    %205 = vector.broadcast %204 : vector<1x1x32xf32> to vector<8x8x32xf32>
    %206 = arith.mulf %201, %205 : vector<8x8x32xf32>
    %207 = arith.addf %200, %206 : vector<8x8x32xf32>
    %208 = vector.extract_strided_slice %186 {offsets = [0, 3, 0], sizes = [8, 8, 32], strides = [1, 1, 1]} : vector<8x14x32xf32> to vector<8x8x32xf32>
    %209 = vector.extract_strided_slice %34 {offsets = [24, 0], sizes = [1, 32], strides = [1, 1]} : vector<49x32xf32> to vector<1x32xf32>
    %210 = vector.shape_cast %209 : vector<1x32xf32> to vector<32xf32>
    %211 = vector.shape_cast %210 : vector<32xf32> to vector<1x1x32xf32>
    %212 = vector.broadcast %211 : vector<1x1x32xf32> to vector<8x8x32xf32>
    %213 = arith.mulf %208, %212 : vector<8x8x32xf32>
    %214 = arith.addf %207, %213 : vector<8x8x32xf32>
    %215 = vector.extract_strided_slice %186 {offsets = [0, 4, 0], sizes = [8, 8, 32], strides = [1, 1, 1]} : vector<8x14x32xf32> to vector<8x8x32xf32>
    %216 = vector.extract_strided_slice %34 {offsets = [25, 0], sizes = [1, 32], strides = [1, 1]} : vector<49x32xf32> to vector<1x32xf32>
    %217 = vector.shape_cast %216 : vector<1x32xf32> to vector<32xf32>
    %218 = vector.shape_cast %217 : vector<32xf32> to vector<1x1x32xf32>
    %219 = vector.broadcast %218 : vector<1x1x32xf32> to vector<8x8x32xf32>
    %220 = arith.mulf %215, %219 : vector<8x8x32xf32>
    %221 = arith.addf %214, %220 : vector<8x8x32xf32>
    %222 = vector.extract_strided_slice %186 {offsets = [0, 5, 0], sizes = [8, 8, 32], strides = [1, 1, 1]} : vector<8x14x32xf32> to vector<8x8x32xf32>
    %223 = vector.extract_strided_slice %34 {offsets = [26, 0], sizes = [1, 32], strides = [1, 1]} : vector<49x32xf32> to vector<1x32xf32>
    %224 = vector.shape_cast %223 : vector<1x32xf32> to vector<32xf32>
    %225 = vector.shape_cast %224 : vector<32xf32> to vector<1x1x32xf32>
    %226 = vector.broadcast %225 : vector<1x1x32xf32> to vector<8x8x32xf32>
    %227 = arith.mulf %222, %226 : vector<8x8x32xf32>
    %228 = arith.addf %221, %227 : vector<8x8x32xf32>
    %229 = vector.extract_strided_slice %186 {offsets = [0, 6, 0], sizes = [8, 8, 32], strides = [1, 1, 1]} : vector<8x14x32xf32> to vector<8x8x32xf32>
    %230 = vector.extract_strided_slice %34 {offsets = [27, 0], sizes = [1, 32], strides = [1, 1]} : vector<49x32xf32> to vector<1x32xf32>
    %231 = vector.shape_cast %230 : vector<1x32xf32> to vector<32xf32>
    %232 = vector.shape_cast %231 : vector<32xf32> to vector<1x1x32xf32>
    %233 = vector.broadcast %232 : vector<1x1x32xf32> to vector<8x8x32xf32>
    %234 = arith.mulf %229, %233 : vector<8x8x32xf32>
    %235 = arith.addf %228, %234 : vector<8x8x32xf32>
    %c4 = arith.constant 4 : index
    %c0_60 = arith.constant 0 : index
    %c0_61 = arith.constant 0 : index
    %236 = vector.load %arg7[%c4, %c0_60, %c0_61] : memref<14x14x32xf32, #tpu.memory_space<vmem>>, vector<8x14x32xf32>
    %237 = vector.extract_strided_slice %236 {offsets = [0, 0, 0], sizes = [8, 8, 32], strides = [1, 1, 1]} : vector<8x14x32xf32> to vector<8x8x32xf32>
    %238 = vector.extract_strided_slice %34 {offsets = [28, 0], sizes = [1, 32], strides = [1, 1]} : vector<49x32xf32> to vector<1x32xf32>
    %239 = vector.shape_cast %238 : vector<1x32xf32> to vector<32xf32>
    %240 = vector.shape_cast %239 : vector<32xf32> to vector<1x1x32xf32>
    %241 = vector.broadcast %240 : vector<1x1x32xf32> to vector<8x8x32xf32>
    %242 = arith.mulf %237, %241 : vector<8x8x32xf32>
    %243 = arith.addf %235, %242 : vector<8x8x32xf32>
    %244 = vector.extract_strided_slice %236 {offsets = [0, 1, 0], sizes = [8, 8, 32], strides = [1, 1, 1]} : vector<8x14x32xf32> to vector<8x8x32xf32>
    %245 = vector.extract_strided_slice %34 {offsets = [29, 0], sizes = [1, 32], strides = [1, 1]} : vector<49x32xf32> to vector<1x32xf32>
    %246 = vector.shape_cast %245 : vector<1x32xf32> to vector<32xf32>
    %247 = vector.shape_cast %246 : vector<32xf32> to vector<1x1x32xf32>
    %248 = vector.broadcast %247 : vector<1x1x32xf32> to vector<8x8x32xf32>
    %249 = arith.mulf %244, %248 : vector<8x8x32xf32>
    %250 = arith.addf %243, %249 : vector<8x8x32xf32>
    %251 = vector.extract_strided_slice %236 {offsets = [0, 2, 0], sizes = [8, 8, 32], strides = [1, 1, 1]} : vector<8x14x32xf32> to vector<8x8x32xf32>
    %252 = vector.extract_strided_slice %34 {offsets = [30, 0], sizes = [1, 32], strides = [1, 1]} : vector<49x32xf32> to vector<1x32xf32>
    %253 = vector.shape_cast %252 : vector<1x32xf32> to vector<32xf32>
    %254 = vector.shape_cast %253 : vector<32xf32> to vector<1x1x32xf32>
    %255 = vector.broadcast %254 : vector<1x1x32xf32> to vector<8x8x32xf32>
    %256 = arith.mulf %251, %255 : vector<8x8x32xf32>
    %257 = arith.addf %250, %256 : vector<8x8x32xf32>
    %258 = vector.extract_strided_slice %236 {offsets = [0, 3, 0], sizes = [8, 8, 32], strides = [1, 1, 1]} : vector<8x14x32xf32> to vector<8x8x32xf32>
    %259 = vector.extract_strided_slice %34 {offsets = [31, 0], sizes = [1, 32], strides = [1, 1]} : vector<49x32xf32> to vector<1x32xf32>
    %260 = vector.shape_cast %259 : vector<1x32xf32> to vector<32xf32>
    %261 = vector.shape_cast %260 : vector<32xf32> to vector<1x1x32xf32>
    %262 = vector.broadcast %261 : vector<1x1x32xf32> to vector<8x8x32xf32>
    %263 = arith.mulf %258, %262 : vector<8x8x32xf32>
    %264 = arith.addf %257, %263 : vector<8x8x32xf32>
    %265 = vector.extract_strided_slice %236 {offsets = [0, 4, 0], sizes = [8, 8, 32], strides = [1, 1, 1]} : vector<8x14x32xf32> to vector<8x8x32xf32>
    %266 = vector.extract_strided_slice %34 {offsets = [32, 0], sizes = [1, 32], strides = [1, 1]} : vector<49x32xf32> to vector<1x32xf32>
    %267 = vector.shape_cast %266 : vector<1x32xf32> to vector<32xf32>
    %268 = vector.shape_cast %267 : vector<32xf32> to vector<1x1x32xf32>
    %269 = vector.broadcast %268 : vector<1x1x32xf32> to vector<8x8x32xf32>
    %270 = arith.mulf %265, %269 : vector<8x8x32xf32>
    %271 = arith.addf %264, %270 : vector<8x8x32xf32>
    %272 = vector.extract_strided_slice %236 {offsets = [0, 5, 0], sizes = [8, 8, 32], strides = [1, 1, 1]} : vector<8x14x32xf32> to vector<8x8x32xf32>
    %273 = vector.extract_strided_slice %34 {offsets = [33, 0], sizes = [1, 32], strides = [1, 1]} : vector<49x32xf32> to vector<1x32xf32>
    %274 = vector.shape_cast %273 : vector<1x32xf32> to vector<32xf32>
    %275 = vector.shape_cast %274 : vector<32xf32> to vector<1x1x32xf32>
    %276 = vector.broadcast %275 : vector<1x1x32xf32> to vector<8x8x32xf32>
    %277 = arith.mulf %272, %276 : vector<8x8x32xf32>
    %278 = arith.addf %271, %277 : vector<8x8x32xf32>
    %279 = vector.extract_strided_slice %236 {offsets = [0, 6, 0], sizes = [8, 8, 32], strides = [1, 1, 1]} : vector<8x14x32xf32> to vector<8x8x32xf32>
    %280 = vector.extract_strided_slice %34 {offsets = [34, 0], sizes = [1, 32], strides = [1, 1]} : vector<49x32xf32> to vector<1x32xf32>
    %281 = vector.shape_cast %280 : vector<1x32xf32> to vector<32xf32>
    %282 = vector.shape_cast %281 : vector<32xf32> to vector<1x1x32xf32>
    %283 = vector.broadcast %282 : vector<1x1x32xf32> to vector<8x8x32xf32>
    %284 = arith.mulf %279, %283 : vector<8x8x32xf32>
    %285 = arith.addf %278, %284 : vector<8x8x32xf32>
    %c5 = arith.constant 5 : index
    %c0_62 = arith.constant 0 : index
    %c0_63 = arith.constant 0 : index
    %286 = vector.load %arg7[%c5, %c0_62, %c0_63] : memref<14x14x32xf32, #tpu.memory_space<vmem>>, vector<8x14x32xf32>
    %287 = vector.extract_strided_slice %286 {offsets = [0, 0, 0], sizes = [8, 8, 32], strides = [1, 1, 1]} : vector<8x14x32xf32> to vector<8x8x32xf32>
    %288 = vector.extract_strided_slice %34 {offsets = [35, 0], sizes = [1, 32], strides = [1, 1]} : vector<49x32xf32> to vector<1x32xf32>
    %289 = vector.shape_cast %288 : vector<1x32xf32> to vector<32xf32>
    %290 = vector.shape_cast %289 : vector<32xf32> to vector<1x1x32xf32>
    %291 = vector.broadcast %290 : vector<1x1x32xf32> to vector<8x8x32xf32>
    %292 = arith.mulf %287, %291 : vector<8x8x32xf32>
    %293 = arith.addf %285, %292 : vector<8x8x32xf32>
    %294 = vector.extract_strided_slice %286 {offsets = [0, 1, 0], sizes = [8, 8, 32], strides = [1, 1, 1]} : vector<8x14x32xf32> to vector<8x8x32xf32>
    %295 = vector.extract_strided_slice %34 {offsets = [36, 0], sizes = [1, 32], strides = [1, 1]} : vector<49x32xf32> to vector<1x32xf32>
    %296 = vector.shape_cast %295 : vector<1x32xf32> to vector<32xf32>
    %297 = vector.shape_cast %296 : vector<32xf32> to vector<1x1x32xf32>
    %298 = vector.broadcast %297 : vector<1x1x32xf32> to vector<8x8x32xf32>
    %299 = arith.mulf %294, %298 : vector<8x8x32xf32>
    %300 = arith.addf %293, %299 : vector<8x8x32xf32>
    %301 = vector.extract_strided_slice %286 {offsets = [0, 2, 0], sizes = [8, 8, 32], strides = [1, 1, 1]} : vector<8x14x32xf32> to vector<8x8x32xf32>
    %302 = vector.extract_strided_slice %34 {offsets = [37, 0], sizes = [1, 32], strides = [1, 1]} : vector<49x32xf32> to vector<1x32xf32>
    %303 = vector.shape_cast %302 : vector<1x32xf32> to vector<32xf32>
    %304 = vector.shape_cast %303 : vector<32xf32> to vector<1x1x32xf32>
    %305 = vector.broadcast %304 : vector<1x1x32xf32> to vector<8x8x32xf32>
    %306 = arith.mulf %301, %305 : vector<8x8x32xf32>
    %307 = arith.addf %300, %306 : vector<8x8x32xf32>
    %308 = vector.extract_strided_slice %286 {offsets = [0, 3, 0], sizes = [8, 8, 32], strides = [1, 1, 1]} : vector<8x14x32xf32> to vector<8x8x32xf32>
    %309 = vector.extract_strided_slice %34 {offsets = [38, 0], sizes = [1, 32], strides = [1, 1]} : vector<49x32xf32> to vector<1x32xf32>
    %310 = vector.shape_cast %309 : vector<1x32xf32> to vector<32xf32>
    %311 = vector.shape_cast %310 : vector<32xf32> to vector<1x1x32xf32>
    %312 = vector.broadcast %311 : vector<1x1x32xf32> to vector<8x8x32xf32>
    %313 = arith.mulf %308, %312 : vector<8x8x32xf32>
    %314 = arith.addf %307, %313 : vector<8x8x32xf32>
    %315 = vector.extract_strided_slice %286 {offsets = [0, 4, 0], sizes = [8, 8, 32], strides = [1, 1, 1]} : vector<8x14x32xf32> to vector<8x8x32xf32>
    %316 = vector.extract_strided_slice %34 {offsets = [39, 0], sizes = [1, 32], strides = [1, 1]} : vector<49x32xf32> to vector<1x32xf32>
    %317 = vector.shape_cast %316 : vector<1x32xf32> to vector<32xf32>
    %318 = vector.shape_cast %317 : vector<32xf32> to vector<1x1x32xf32>
    %319 = vector.broadcast %318 : vector<1x1x32xf32> to vector<8x8x32xf32>
    %320 = arith.mulf %315, %319 : vector<8x8x32xf32>
    %321 = arith.addf %314, %320 : vector<8x8x32xf32>
    %322 = vector.extract_strided_slice %286 {offsets = [0, 5, 0], sizes = [8, 8, 32], strides = [1, 1, 1]} : vector<8x14x32xf32> to vector<8x8x32xf32>
    %323 = vector.extract_strided_slice %34 {offsets = [40, 0], sizes = [1, 32], strides = [1, 1]} : vector<49x32xf32> to vector<1x32xf32>
    %324 = vector.shape_cast %323 : vector<1x32xf32> to vector<32xf32>
    %325 = vector.shape_cast %324 : vector<32xf32> to vector<1x1x32xf32>
    %326 = vector.broadcast %325 : vector<1x1x32xf32> to vector<8x8x32xf32>
    %327 = arith.mulf %322, %326 : vector<8x8x32xf32>
    %328 = arith.addf %321, %327 : vector<8x8x32xf32>
    %329 = vector.extract_strided_slice %286 {offsets = [0, 6, 0], sizes = [8, 8, 32], strides = [1, 1, 1]} : vector<8x14x32xf32> to vector<8x8x32xf32>
    %330 = vector.extract_strided_slice %34 {offsets = [41, 0], sizes = [1, 32], strides = [1, 1]} : vector<49x32xf32> to vector<1x32xf32>
    %331 = vector.shape_cast %330 : vector<1x32xf32> to vector<32xf32>
    %332 = vector.shape_cast %331 : vector<32xf32> to vector<1x1x32xf32>
    %333 = vector.broadcast %332 : vector<1x1x32xf32> to vector<8x8x32xf32>
    %334 = arith.mulf %329, %333 : vector<8x8x32xf32>
    %335 = arith.addf %328, %334 : vector<8x8x32xf32>
    %c6 = arith.constant 6 : index
    %c0_64 = arith.constant 0 : index
    %c0_65 = arith.constant 0 : index
    %336 = vector.load %arg7[%c6, %c0_64, %c0_65] : memref<14x14x32xf32, #tpu.memory_space<vmem>>, vector<8x14x32xf32>
    %337 = vector.extract_strided_slice %336 {offsets = [0, 0, 0], sizes = [8, 8, 32], strides = [1, 1, 1]} : vector<8x14x32xf32> to vector<8x8x32xf32>
    %338 = vector.extract_strided_slice %34 {offsets = [42, 0], sizes = [1, 32], strides = [1, 1]} : vector<49x32xf32> to vector<1x32xf32>
    %339 = vector.shape_cast %338 : vector<1x32xf32> to vector<32xf32>
    %340 = vector.shape_cast %339 : vector<32xf32> to vector<1x1x32xf32>
    %341 = vector.broadcast %340 : vector<1x1x32xf32> to vector<8x8x32xf32>
    %342 = arith.mulf %337, %341 : vector<8x8x32xf32>
    %343 = arith.addf %335, %342 : vector<8x8x32xf32>
    %344 = vector.extract_strided_slice %336 {offsets = [0, 1, 0], sizes = [8, 8, 32], strides = [1, 1, 1]} : vector<8x14x32xf32> to vector<8x8x32xf32>
    %345 = vector.extract_strided_slice %34 {offsets = [43, 0], sizes = [1, 32], strides = [1, 1]} : vector<49x32xf32> to vector<1x32xf32>
    %346 = vector.shape_cast %345 : vector<1x32xf32> to vector<32xf32>
    %347 = vector.shape_cast %346 : vector<32xf32> to vector<1x1x32xf32>
    %348 = vector.broadcast %347 : vector<1x1x32xf32> to vector<8x8x32xf32>
    %349 = arith.mulf %344, %348 : vector<8x8x32xf32>
    %350 = arith.addf %343, %349 : vector<8x8x32xf32>
    %351 = vector.extract_strided_slice %336 {offsets = [0, 2, 0], sizes = [8, 8, 32], strides = [1, 1, 1]} : vector<8x14x32xf32> to vector<8x8x32xf32>
    %352 = vector.extract_strided_slice %34 {offsets = [44, 0], sizes = [1, 32], strides = [1, 1]} : vector<49x32xf32> to vector<1x32xf32>
    %353 = vector.shape_cast %352 : vector<1x32xf32> to vector<32xf32>
    %354 = vector.shape_cast %353 : vector<32xf32> to vector<1x1x32xf32>
    %355 = vector.broadcast %354 : vector<1x1x32xf32> to vector<8x8x32xf32>
    %356 = arith.mulf %351, %355 : vector<8x8x32xf32>
    %357 = arith.addf %350, %356 : vector<8x8x32xf32>
    %358 = vector.extract_strided_slice %336 {offsets = [0, 3, 0], sizes = [8, 8, 32], strides = [1, 1, 1]} : vector<8x14x32xf32> to vector<8x8x32xf32>
    %359 = vector.extract_strided_slice %34 {offsets = [45, 0], sizes = [1, 32], strides = [1, 1]} : vector<49x32xf32> to vector<1x32xf32>
    %360 = vector.shape_cast %359 : vector<1x32xf32> to vector<32xf32>
    %361 = vector.shape_cast %360 : vector<32xf32> to vector<1x1x32xf32>
    %362 = vector.broadcast %361 : vector<1x1x32xf32> to vector<8x8x32xf32>
    %363 = arith.mulf %358, %362 : vector<8x8x32xf32>
    %364 = arith.addf %357, %363 : vector<8x8x32xf32>
    %365 = vector.extract_strided_slice %336 {offsets = [0, 4, 0], sizes = [8, 8, 32], strides = [1, 1, 1]} : vector<8x14x32xf32> to vector<8x8x32xf32>
    %366 = vector.extract_strided_slice %34 {offsets = [46, 0], sizes = [1, 32], strides = [1, 1]} : vector<49x32xf32> to vector<1x32xf32>
    %367 = vector.shape_cast %366 : vector<1x32xf32> to vector<32xf32>
    %368 = vector.shape_cast %367 : vector<32xf32> to vector<1x1x32xf32>
    %369 = vector.broadcast %368 : vector<1x1x32xf32> to vector<8x8x32xf32>
    %370 = arith.mulf %365, %369 : vector<8x8x32xf32>
    %371 = arith.addf %364, %370 : vector<8x8x32xf32>
    %372 = vector.extract_strided_slice %336 {offsets = [0, 5, 0], sizes = [8, 8, 32], strides = [1, 1, 1]} : vector<8x14x32xf32> to vector<8x8x32xf32>
    %373 = vector.extract_strided_slice %34 {offsets = [47, 0], sizes = [1, 32], strides = [1, 1]} : vector<49x32xf32> to vector<1x32xf32>
    %374 = vector.shape_cast %373 : vector<1x32xf32> to vector<32xf32>
    %375 = vector.shape_cast %374 : vector<32xf32> to vector<1x1x32xf32>
    %376 = vector.broadcast %375 : vector<1x1x32xf32> to vector<8x8x32xf32>
    %377 = arith.mulf %372, %376 : vector<8x8x32xf32>
    %378 = arith.addf %371, %377 : vector<8x8x32xf32>
    %379 = vector.extract_strided_slice %336 {offsets = [0, 6, 0], sizes = [8, 8, 32], strides = [1, 1, 1]} : vector<8x14x32xf32> to vector<8x8x32xf32>
    %380 = vector.extract_strided_slice %34 {offsets = [48, 0], sizes = [1, 32], strides = [1, 1]} : vector<49x32xf32> to vector<1x32xf32>
    %381 = vector.shape_cast %380 : vector<1x32xf32> to vector<32xf32>
    %382 = vector.shape_cast %381 : vector<32xf32> to vector<1x1x32xf32>
    %383 = vector.broadcast %382 : vector<1x1x32xf32> to vector<8x8x32xf32>
    %384 = arith.mulf %379, %383 : vector<8x8x32xf32>
    %385 = arith.addf %378, %384 : vector<8x8x32xf32>
    %c0_66 = arith.constant 0 : index
    %c0_67 = arith.constant 0 : index
    %386 = vector.load %arg5[%c0_66, %c0_67] : memref<1x32xf32, #tpu.memory_space<vmem>>, vector<1x32xf32>
    %387 = vector.shape_cast %386 : vector<1x32xf32> to vector<32xf32>
    %388 = vector.shape_cast %387 : vector<32xf32> to vector<1x1x32xf32>
    %389 = vector.broadcast %388 : vector<1x1x32xf32> to vector<8x8x32xf32>
    %390 = arith.addf %385, %389 : vector<8x8x32xf32>
    %cst_68 = arith.constant 0.000000e+00 : f32
    %391 = vector.broadcast %cst_68 : f32 to vector<8x8x32xf32>
    %392 = arith.cmpf oge, %390, %391 : vector<8x8x32xf32>
    %cst_69 = arith.constant 0.00999999977 : f32
    %393 = vector.broadcast %cst_69 : f32 to vector<8x8x32xf32>
    %394 = arith.mulf %393, %390 : vector<8x8x32xf32>
    %395 = arith.select %392, %390, %394 : vector<8x8x32xi1>, vector<8x8x32xf32>
    %c0_70 = arith.constant 0 : index
    %c0_71 = arith.constant 0 : index
    %c0_72 = arith.constant 0 : index
    %c0_73 = arith.constant 0 : index
    %396 = vector.load %arg6[%c0_70, %c0_71, %c0_72, %c0_73] : memref<1x8x8x32xf32, #tpu.memory_space<vmem>>, vector<1x8x8x32xf32>
    %397 = vector.shape_cast %396 : vector<1x8x8x32xf32> to vector<8x8x32xf32>
    %398 = vector.shape_cast %395 : vector<8x8x32xf32> to vector<1x8x8x32xf32>
    tpu.vector_store %arg6[%c0_70, %c0_71, %c0_72, %c0_73], %398 {strides = array<i32>} : memref<1x8x8x32xf32, #tpu.memory_space<vmem>>, vector<1x8x8x32xf32>,
    return
  }
  func.func @transform_0(%arg0: i32) -> (i32, i32, i32, i32) {
    %c0_i32 = arith.constant 0 : i32
    %c0_i32_0 = arith.constant 0 : i32
    %c0_i32_1 = arith.constant 0 : i32
    %c0_i32_2 = arith.constant 0 : i32
    return %arg0, %c0_i32, %c0_i32_0, %c0_i32_1 : i32, i32, i32, i32
  }
  func.func @transform_1(%arg0: i32) -> (i32, i32) {
    %c0_i32 = arith.constant 0 : i32
    %c0_i32_0 = arith.constant 0 : i32
    %c0_i32_1 = arith.constant 0 : i32
    return %c0_i32, %c0_i32_0 : i32, i32
  }
  func.func @transform_2(%arg0: i32) -> (i32, i32) {
    %c0_i32 = arith.constant 0 : i32
    %c0_i32_0 = arith.constant 0 : i32
    %c0_i32_1 = arith.constant 0 : i32
    return %c0_i32, %c0_i32_0 : i32, i32
  }
  func.func @transform_3(%arg0: i32) -> (i32, i32) {
    %c0_i32 = arith.constant 0 : i32
    %c0_i32_0 = arith.constant 0 : i32
    %c0_i32_1 = arith.constant 0 : i32
    return %c0_i32, %c0_i32_0 : i32, i32
  }
  func.func @transform_4(%arg0: i32) -> (i32, i32) {
    %c0_i32 = arith.constant 0 : i32
    %c0_i32_0 = arith.constant 0 : i32
    %c0_i32_1 = arith.constant 0 : i32
    return %c0_i32, %c0_i32_0 : i32, i32
  }
  func.func @transform_5(%arg0: i32) -> (i32, i32, i32, i32) {
    %c0_i32 = arith.constant 0 : i32
    %c0_i32_0 = arith.constant 0 : i32
    %c0_i32_1 = arith.constant 0 : i32
    %c0_i32_2 = arith.constant 0 : i32
    return %arg0, %c0_i32, %c0_i32_0, %c0_i32_1 : i32, i32, i32, i32
  }
}

module attributes {stable_mosaic.version = 11 : i64} {
  func.func @_stem_tail_kernel(%arg0: i32, %arg1: memref<4x4x4x32xf32, #tpu.memory_space<vmem>>, %arg2: memref<32x32xf32, #tpu.memory_space<vmem>>, %arg3: memref<1x32xf32, #tpu.memory_space<vmem>>, %arg4: memref<288x32xf32, #tpu.memory_space<vmem>>, %arg5: memref<1x32xf32, #tpu.memory_space<vmem>>, %arg6: memref<32x64xf32, #tpu.memory_space<vmem>>, %arg7: memref<32x64xf32, #tpu.memory_space<vmem>>, %arg8: memref<1x64xf32, #tpu.memory_space<vmem>>, %arg9: memref<1x4x4x64xf32, #tpu.memory_space<vmem>>, %arg10: memref<4x5x5x32xf32, #tpu.memory_space<vmem>>) attributes {dimension_semantics = [#tpu.dimension_semantics<parallel>], iteration_bounds = array<i64: 2>, scalar_prefetch = 0 : i64, scratch_operands = 1 : i64, tpu.core_type = #tpu.core_type<tc>, window_params = [{transform_indices = @transform_0, window_bounds = array<i64: 4, 4, 4, 32>}, {pipeline_mode = #tpu.pipeline_mode<synchronous>, transform_indices = @transform_1, window_bounds = array<i64: 32, 32>}, {pipeline_mode = #tpu.pipeline_mode<synchronous>, transform_indices = @transform_2, window_bounds = array<i64: 1, 32>}, {pipeline_mode = #tpu.pipeline_mode<synchronous>, transform_indices = @transform_3, window_bounds = array<i64: 288, 32>}, {pipeline_mode = #tpu.pipeline_mode<synchronous>, transform_indices = @transform_4, window_bounds = array<i64: 1, 32>}, {pipeline_mode = #tpu.pipeline_mode<synchronous>, transform_indices = @transform_5, window_bounds = array<i64: 32, 64>}, {pipeline_mode = #tpu.pipeline_mode<synchronous>, transform_indices = @transform_6, window_bounds = array<i64: 32, 64>}, {pipeline_mode = #tpu.pipeline_mode<synchronous>, transform_indices = @transform_7, window_bounds = array<i64: 1, 64>}, {transform_indices = @transform_8, window_bounds = array<i64: 1, 4, 4, 64>}]} {
    %c0 = arith.constant 0 : index
    %c0_0 = arith.constant 0 : index
    %c0_1 = arith.constant 0 : index
    %c0_2 = arith.constant 0 : index
    %0 = vector.load %arg1[%c0, %c0_0, %c0_1, %c0_2] : memref<4x4x4x32xf32, #tpu.memory_space<vmem>>, vector<4x4x4x32xf32>
    %cst = arith.constant dense<0xFF800000> : vector<4x4x32xf32>
    %1 = vector.multi_reduction <maximumf>, %0, %cst [0] : vector<4x4x4x32xf32> to vector<4x4x32xf32>
    %2 = vector.shape_cast %1 : vector<4x4x32xf32> to vector<16x32xf32>
    %3 = vector.shape_cast %0 : vector<4x4x4x32xf32> to vector<64x32xf32>
    %c0_3 = arith.constant 0 : index
    %c0_4 = arith.constant 0 : index
    %4 = vector.load %arg2[%c0_3, %c0_4] : memref<32x32xf32, #tpu.memory_space<vmem>>, vector<32x32xf32>
    %cst_5 = arith.constant dense<0.000000e+00> : vector<64x32xf32>
    %5 = tpu.matmul %3, %4, %cst_5 {dimension_numbers = #tpu.dot_dimension_numbers<[1], [0], [0], [1], [0, 0, 1, 1], [], []>} : vector<64x32xf32>, vector<32x32xf32>, vector<64x32xf32> -> vector<64x32xf32>
    %c0_6 = arith.constant 0 : index
    %c0_7 = arith.constant 0 : index
    %6 = vector.load %arg3[%c0_6, %c0_7] : memref<1x32xf32, #tpu.memory_space<vmem>>, vector<1x32xf32>
    %7 = vector.broadcast %6 : vector<1x32xf32> to vector<64x32xf32>
    %8 = arith.addf %5, %7 : vector<64x32xf32>
    %cst_8 = arith.constant 0.000000e+00 : f32
    %9 = vector.broadcast %cst_8 : f32 to vector<64x32xf32>
    %10 = arith.cmpf oge, %8, %9 : vector<64x32xf32>
    %cst_9 = arith.constant 0.00999999977 : f32
    %11 = vector.broadcast %cst_9 : f32 to vector<64x32xf32>
    %12 = arith.mulf %11, %8 : vector<64x32xf32>
    %13 = arith.select %10, %8, %12 : vector<64x32xi1>, vector<64x32xf32>
    %14 = vector.shape_cast %13 : vector<64x32xf32> to vector<4x4x4x32xf32>
    %cst_10 = arith.constant 0.000000e+00 : f32
    %15 = vector.broadcast %cst_10 : f32 to vector<4x5x5x32xf32>
    %c0_11 = arith.constant 0 : index
    %c0_12 = arith.constant 0 : index
    %c0_13 = arith.constant 0 : index
    %c0_14 = arith.constant 0 : index
    %16 = vector.load %arg10[%c0_11, %c0_12, %c0_13, %c0_14] : memref<4x5x5x32xf32, #tpu.memory_space<vmem>>, vector<4x5x5x32xf32>
    tpu.vector_store %arg10[%c0_11, %c0_12, %c0_13, %c0_14], %15 {strides = array<i32>} : memref<4x5x5x32xf32, #tpu.memory_space<vmem>>, vector<4x5x5x32xf32>,
    %17 = vector.extract_strided_slice %14 {offsets = [0, 0, 0, 0], sizes = [1, 4, 4, 32], strides = [1, 1, 1, 1]} : vector<4x4x4x32xf32> to vector<1x4x4x32xf32>
    %18 = vector.shape_cast %17 : vector<1x4x4x32xf32> to vector<4x4x32xf32>
    %c0_15 = arith.constant 0 : index
    %c1 = arith.constant 1 : index
    %c1_16 = arith.constant 1 : index
    %c0_17 = arith.constant 0 : index
    %19 = vector.load %arg10[%c0_15, %c1, %c1_16, %c0_17] : memref<4x5x5x32xf32, #tpu.memory_space<vmem>>, vector<1x4x4x32xf32>
    %20 = vector.shape_cast %19 : vector<1x4x4x32xf32> to vector<4x4x32xf32>
    %21 = vector.shape_cast %18 : vector<4x4x32xf32> to vector<1x4x4x32xf32>
    tpu.vector_store %arg10[%c0_15, %c1, %c1_16, %c0_17], %21 {strides = array<i32>} : memref<4x5x5x32xf32, #tpu.memory_space<vmem>>, vector<1x4x4x32xf32>,
    %22 = vector.extract_strided_slice %14 {offsets = [1, 0, 0, 0], sizes = [1, 4, 4, 32], strides = [1, 1, 1, 1]} : vector<4x4x4x32xf32> to vector<1x4x4x32xf32>
    %23 = vector.shape_cast %22 : vector<1x4x4x32xf32> to vector<4x4x32xf32>
    %c1_18 = arith.constant 1 : index
    %c1_19 = arith.constant 1 : index
    %c1_20 = arith.constant 1 : index
    %c0_21 = arith.constant 0 : index
    %24 = vector.load %arg10[%c1_18, %c1_19, %c1_20, %c0_21] : memref<4x5x5x32xf32, #tpu.memory_space<vmem>>, vector<1x4x4x32xf32>
    %25 = vector.shape_cast %24 : vector<1x4x4x32xf32> to vector<4x4x32xf32>
    %26 = vector.shape_cast %23 : vector<4x4x32xf32> to vector<1x4x4x32xf32>
    tpu.vector_store %arg10[%c1_18, %c1_19, %c1_20, %c0_21], %26 {strides = array<i32>} : memref<4x5x5x32xf32, #tpu.memory_space<vmem>>, vector<1x4x4x32xf32>,
    %27 = vector.extract_strided_slice %14 {offsets = [2, 0, 0, 0], sizes = [1, 4, 4, 32], strides = [1, 1, 1, 1]} : vector<4x4x4x32xf32> to vector<1x4x4x32xf32>
    %28 = vector.shape_cast %27 : vector<1x4x4x32xf32> to vector<4x4x32xf32>
    %c2 = arith.constant 2 : index
    %c1_22 = arith.constant 1 : index
    %c1_23 = arith.constant 1 : index
    %c0_24 = arith.constant 0 : index
    %29 = vector.load %arg10[%c2, %c1_22, %c1_23, %c0_24] : memref<4x5x5x32xf32, #tpu.memory_space<vmem>>, vector<1x4x4x32xf32>
    %30 = vector.shape_cast %29 : vector<1x4x4x32xf32> to vector<4x4x32xf32>
    %31 = vector.shape_cast %28 : vector<4x4x32xf32> to vector<1x4x4x32xf32>
    tpu.vector_store %arg10[%c2, %c1_22, %c1_23, %c0_24], %31 {strides = array<i32>} : memref<4x5x5x32xf32, #tpu.memory_space<vmem>>, vector<1x4x4x32xf32>,
    %32 = vector.extract_strided_slice %14 {offsets = [3, 0, 0, 0], sizes = [1, 4, 4, 32], strides = [1, 1, 1, 1]} : vector<4x4x4x32xf32> to vector<1x4x4x32xf32>
    %33 = vector.shape_cast %32 : vector<1x4x4x32xf32> to vector<4x4x32xf32>
    %c3 = arith.constant 3 : index
    %c1_25 = arith.constant 1 : index
    %c1_26 = arith.constant 1 : index
    %c0_27 = arith.constant 0 : index
    %34 = vector.load %arg10[%c3, %c1_25, %c1_26, %c0_27] : memref<4x5x5x32xf32, #tpu.memory_space<vmem>>, vector<1x4x4x32xf32>
    %35 = vector.shape_cast %34 : vector<1x4x4x32xf32> to vector<4x4x32xf32>
    %36 = vector.shape_cast %33 : vector<4x4x32xf32> to vector<1x4x4x32xf32>
    tpu.vector_store %arg10[%c3, %c1_25, %c1_26, %c0_27], %36 {strides = array<i32>} : memref<4x5x5x32xf32, #tpu.memory_space<vmem>>, vector<1x4x4x32xf32>,
    %c3_28 = arith.constant 3 : index
    %c0_29 = arith.constant 0 : index
    %c0_30 = arith.constant 0 : index
    %c0_31 = arith.constant 0 : index
    %37 = vector.load %arg10[%c3_28, %c0_29, %c0_30, %c0_31] : memref<4x5x5x32xf32, #tpu.memory_space<vmem>>, vector<1x4x4x32xf32>
    %38 = vector.shape_cast %37 : vector<1x4x4x32xf32> to vector<4x4x32xf32>
    %c2_32 = arith.constant 2 : index
    %c0_33 = arith.constant 0 : index
    %c1_34 = arith.constant 1 : index
    %c0_35 = arith.constant 0 : index
    %39 = vector.load %arg10[%c2_32, %c0_33, %c1_34, %c0_35] : memref<4x5x5x32xf32, #tpu.memory_space<vmem>>, vector<1x4x4x32xf32>
    %40 = vector.shape_cast %39 : vector<1x4x4x32xf32> to vector<4x4x32xf32>
    %c3_36 = arith.constant 3 : index
    %c0_37 = arith.constant 0 : index
    %c1_38 = arith.constant 1 : index
    %c0_39 = arith.constant 0 : index
    %41 = vector.load %arg10[%c3_36, %c0_37, %c1_38, %c0_39] : memref<4x5x5x32xf32, #tpu.memory_space<vmem>>, vector<1x4x4x32xf32>
    %42 = vector.shape_cast %41 : vector<1x4x4x32xf32> to vector<4x4x32xf32>
    %c1_40 = arith.constant 1 : index
    %c1_41 = arith.constant 1 : index
    %c0_42 = arith.constant 0 : index
    %c0_43 = arith.constant 0 : index
    %43 = vector.load %arg10[%c1_40, %c1_41, %c0_42, %c0_43] : memref<4x5x5x32xf32, #tpu.memory_space<vmem>>, vector<1x4x4x32xf32>
    %44 = vector.shape_cast %43 : vector<1x4x4x32xf32> to vector<4x4x32xf32>
    %c0_44 = arith.constant 0 : index
    %c1_45 = arith.constant 1 : index
    %c1_46 = arith.constant 1 : index
    %c0_47 = arith.constant 0 : index
    %45 = vector.load %arg10[%c0_44, %c1_45, %c1_46, %c0_47] : memref<4x5x5x32xf32, #tpu.memory_space<vmem>>, vector<1x4x4x32xf32>
    %46 = vector.shape_cast %45 : vector<1x4x4x32xf32> to vector<4x4x32xf32>
    %c1_48 = arith.constant 1 : index
    %c1_49 = arith.constant 1 : index
    %c1_50 = arith.constant 1 : index
    %c0_51 = arith.constant 0 : index
    %47 = vector.load %arg10[%c1_48, %c1_49, %c1_50, %c0_51] : memref<4x5x5x32xf32, #tpu.memory_space<vmem>>, vector<1x4x4x32xf32>
    %48 = vector.shape_cast %47 : vector<1x4x4x32xf32> to vector<4x4x32xf32>
    %c3_52 = arith.constant 3 : index
    %c1_53 = arith.constant 1 : index
    %c0_54 = arith.constant 0 : index
    %c0_55 = arith.constant 0 : index
    %49 = vector.load %arg10[%c3_52, %c1_53, %c0_54, %c0_55] : memref<4x5x5x32xf32, #tpu.memory_space<vmem>>, vector<1x4x4x32xf32>
    %50 = vector.shape_cast %49 : vector<1x4x4x32xf32> to vector<4x4x32xf32>
    %c2_56 = arith.constant 2 : index
    %c1_57 = arith.constant 1 : index
    %c1_58 = arith.constant 1 : index
    %c0_59 = arith.constant 0 : index
    %51 = vector.load %arg10[%c2_56, %c1_57, %c1_58, %c0_59] : memref<4x5x5x32xf32, #tpu.memory_space<vmem>>, vector<1x4x4x32xf32>
    %52 = vector.shape_cast %51 : vector<1x4x4x32xf32> to vector<4x4x32xf32>
    %c3_60 = arith.constant 3 : index
    %c1_61 = arith.constant 1 : index
    %c1_62 = arith.constant 1 : index
    %c0_63 = arith.constant 0 : index
    %53 = vector.load %arg10[%c3_60, %c1_61, %c1_62, %c0_63] : memref<4x5x5x32xf32, #tpu.memory_space<vmem>>, vector<1x4x4x32xf32>
    %54 = vector.shape_cast %53 : vector<1x4x4x32xf32> to vector<4x4x32xf32>
    %55 = tpu.concatenate %38, %40, %42, %44, %46, %48, %50, %52, %54 in 2 : vector<4x4x32xf32>, vector<4x4x32xf32>, vector<4x4x32xf32>, vector<4x4x32xf32>, vector<4x4x32xf32>, vector<4x4x32xf32>, vector<4x4x32xf32>, vector<4x4x32xf32>, vector<4x4x32xf32> -> vector<4x4x288xf32>
    %56 = vector.shape_cast %55 : vector<4x4x288xf32> to vector<16x288xf32>
    %c0_64 = arith.constant 0 : index
    %c0_65 = arith.constant 0 : index
    %57 = vector.load %arg4[%c0_64, %c0_65] : memref<288x32xf32, #tpu.memory_space<vmem>>, vector<288x32xf32>
    %cst_66 = arith.constant dense<0.000000e+00> : vector<16x32xf32>
    %58 = tpu.matmul %56, %57, %cst_66 {dimension_numbers = #tpu.dot_dimension_numbers<[1], [0], [0], [1], [0, 0, 1, 1], [], []>} : vector<16x288xf32>, vector<288x32xf32>, vector<16x32xf32> -> vector<16x32xf32>
    %c0_67 = arith.constant 0 : index
    %c0_68 = arith.constant 0 : index
    %59 = vector.load %arg5[%c0_67, %c0_68] : memref<1x32xf32, #tpu.memory_space<vmem>>, vector<1x32xf32>
    %60 = vector.broadcast %59 : vector<1x32xf32> to vector<16x32xf32>
    %61 = arith.addf %58, %60 : vector<16x32xf32>
    %cst_69 = arith.constant 0.000000e+00 : f32
    %62 = vector.broadcast %cst_69 : f32 to vector<16x32xf32>
    %63 = arith.cmpf oge, %61, %62 : vector<16x32xf32>
    %cst_70 = arith.constant 0.00999999977 : f32
    %64 = vector.broadcast %cst_70 : f32 to vector<16x32xf32>
    %65 = arith.mulf %64, %61 : vector<16x32xf32>
    %66 = arith.select %63, %61, %65 : vector<16x32xi1>, vector<16x32xf32>
    %c0_71 = arith.constant 0 : index
    %c0_72 = arith.constant 0 : index
    %67 = vector.load %arg6[%c0_71, %c0_72] : memref<32x64xf32, #tpu.memory_space<vmem>>, vector<32x64xf32>
    %cst_73 = arith.constant dense<0.000000e+00> : vector<16x64xf32>
    %68 = tpu.matmul %66, %67, %cst_73 {dimension_numbers = #tpu.dot_dimension_numbers<[1], [0], [0], [1], [0, 0, 1, 1], [], []>} : vector<16x32xf32>, vector<32x64xf32>, vector<16x64xf32> -> vector<16x64xf32>
    %c0_74 = arith.constant 0 : index
    %c0_75 = arith.constant 0 : index
    %69 = vector.load %arg7[%c0_74, %c0_75] : memref<32x64xf32, #tpu.memory_space<vmem>>, vector<32x64xf32>
    %cst_76 = arith.constant dense<0.000000e+00> : vector<16x64xf32>
    %70 = tpu.matmul %2, %69, %cst_76 {dimension_numbers = #tpu.dot_dimension_numbers<[1], [0], [0], [1], [0, 0, 1, 1], [], []>} : vector<16x32xf32>, vector<32x64xf32>, vector<16x64xf32> -> vector<16x64xf32>
    %71 = arith.addf %68, %70 : vector<16x64xf32>
    %c0_77 = arith.constant 0 : index
    %c0_78 = arith.constant 0 : index
    %72 = vector.load %arg8[%c0_77, %c0_78] : memref<1x64xf32, #tpu.memory_space<vmem>>, vector<1x64xf32>
    %73 = vector.broadcast %72 : vector<1x64xf32> to vector<16x64xf32>
    %74 = arith.addf %71, %73 : vector<16x64xf32>
    %75 = vector.shape_cast %74 : vector<16x64xf32> to vector<4x4x64xf32>
    %c0_79 = arith.constant 0 : index
    %c0_80 = arith.constant 0 : index
    %c0_81 = arith.constant 0 : index
    %c0_82 = arith.constant 0 : index
    %76 = vector.load %arg9[%c0_79, %c0_80, %c0_81, %c0_82] : memref<1x4x4x64xf32, #tpu.memory_space<vmem>>, vector<1x4x4x64xf32>
    %77 = vector.shape_cast %76 : vector<1x4x4x64xf32> to vector<4x4x64xf32>
    %78 = vector.shape_cast %75 : vector<4x4x64xf32> to vector<1x4x4x64xf32>
    tpu.vector_store %arg9[%c0_79, %c0_80, %c0_81, %c0_82], %78 {strides = array<i32>} : memref<1x4x4x64xf32, #tpu.memory_space<vmem>>, vector<1x4x4x64xf32>,
    return
  }
  func.func @transform_0(%arg0: i32) -> (i32, i32, i32, i32) {
    %c0_i32 = arith.constant 0 : i32
    %c0_i32_0 = arith.constant 0 : i32
    %c0_i32_1 = arith.constant 0 : i32
    %c0_i32_2 = arith.constant 0 : i32
    return %arg0, %c0_i32, %c0_i32_0, %c0_i32_1 : i32, i32, i32, i32
  }
  func.func @transform_1(%arg0: i32) -> (i32, i32) {
    %c0_i32 = arith.constant 0 : i32
    %c0_i32_0 = arith.constant 0 : i32
    %c0_i32_1 = arith.constant 0 : i32
    return %c0_i32, %c0_i32_0 : i32, i32
  }
  func.func @transform_2(%arg0: i32) -> (i32, i32) {
    %c0_i32 = arith.constant 0 : i32
    %c0_i32_0 = arith.constant 0 : i32
    %c0_i32_1 = arith.constant 0 : i32
    return %c0_i32, %c0_i32_0 : i32, i32
  }
  func.func @transform_3(%arg0: i32) -> (i32, i32) {
    %c0_i32 = arith.constant 0 : i32
    %c0_i32_0 = arith.constant 0 : i32
    %c0_i32_1 = arith.constant 0 : i32
    return %c0_i32, %c0_i32_0 : i32, i32
  }
  func.func @transform_4(%arg0: i32) -> (i32, i32) {
    %c0_i32 = arith.constant 0 : i32
    %c0_i32_0 = arith.constant 0 : i32
    %c0_i32_1 = arith.constant 0 : i32
    return %c0_i32, %c0_i32_0 : i32, i32
  }
  func.func @transform_5(%arg0: i32) -> (i32, i32) {
    %c0_i32 = arith.constant 0 : i32
    %c0_i32_0 = arith.constant 0 : i32
    %c0_i32_1 = arith.constant 0 : i32
    return %c0_i32, %c0_i32_0 : i32, i32
  }
  func.func @transform_6(%arg0: i32) -> (i32, i32) {
    %c0_i32 = arith.constant 0 : i32
    %c0_i32_0 = arith.constant 0 : i32
    %c0_i32_1 = arith.constant 0 : i32
    return %c0_i32, %c0_i32_0 : i32, i32
  }
  func.func @transform_7(%arg0: i32) -> (i32, i32) {
    %c0_i32 = arith.constant 0 : i32
    %c0_i32_0 = arith.constant 0 : i32
    %c0_i32_1 = arith.constant 0 : i32
    return %c0_i32, %c0_i32_0 : i32, i32
  }
  func.func @transform_8(%arg0: i32) -> (i32, i32, i32, i32) {
    %c0_i32 = arith.constant 0 : i32
    %c0_i32_0 = arith.constant 0 : i32
    %c0_i32_1 = arith.constant 0 : i32
    %c0_i32_2 = arith.constant 0 : i32
    return %arg0, %c0_i32, %c0_i32_0, %c0_i32_1 : i32, i32, i32, i32
  }
}

</mosaic_0001>

<llo_original>
// kernel: stem_forward.3
$region0: #{stem_forward.3}
  #allocation0 [shape = 'u32[]', space=smem, size = 0x4, offset = 0x4, fixed_abs, tag = 'smem constant byte address 0x4 - core index']
  #allocation1 [shape = 'u32[144,128]{1,0:T(1,128)}', space=vmem, size = 0x12000, scoped, tag = 'internal scratch']
  #allocation2 [shape = 'f32[4,5,5,32]{3,2,1,0:T(8,128)}', space=vmem, size = 0x14000, scoped, tag = 'scratch operand']
  %s0 = inlined_call_operand.vmem [shape: f32[8,4,4,32], index: 0, kind: input, shape index: {}]
  %s1 = inlined_call_operand.vmem [shape: f32[32,32], index: 1, kind: input, shape index: {}]
  %s2 = inlined_call_operand.vmem [shape: f32[1,32], index: 2, kind: input, shape index: {}]
  %s3 = inlined_call_operand.vmem [shape: f32[288,32], index: 3, kind: input, shape index: {}]
  %s4 = inlined_call_operand.vmem [shape: f32[1,32], index: 4, kind: input, shape index: {}]
  %s5 = inlined_call_operand.vmem [shape: f32[32,64], index: 5, kind: input, shape index: {}]
  %s6 = inlined_call_operand.vmem [shape: f32[32,64], index: 6, kind: input, shape index: {}]
  %s7 = inlined_call_operand.vmem [shape: f32[1,64], index: 7, kind: input, shape index: {}]
  %s8 = inlined_call_operand.hbm [shape: f32[2,4,4,64], index: 8, kind: output, shape index: {}]
  %s9 = sld [smem:[#allocation0]]
  $region65: #{stem_forward.3} parent=0
    _
  %s11 = ssub.s32 1, %s9
  %s12 = scalar_select 0, %s11, %s9
  $region1: #{stem_forward.3} parent=0
    #allocation3 [shape = 'u8[16384]{0}', space=vmem, size = 0x4000, scoped, tag = 'output window, operand 0']
    #allocation4 [shape = 's32[2]{0}', space=sflag, size = 0x8, scoped, tag = 'scoped memory for stem_forward.3']
    %13 = vsyncpa [#allocation4], 0
    %s14 = scalar_lea.sflag [#allocation4], 1
    %15 = vsyncpa %s14, 0
    loop: start=0, step=1, limit=4
    $region2: #{stem_forward.3} parent=1 // loop_pre_header
      _
    $region3: #{stem_forward.3} parent=1 // loop_header
      %s17 = sphi 0, %s21
      %p18 = scmp.ge.s32.totalorder %s17, 4
      %s27 = sphi 0, %s29
      %s30 = sphi 0, %s27
      %s31 = sphi 0, %s30
      %s47 = sphi 0, %s31
      %s51 = sphi 0, %s51
      %s53 = sphi 0, %s51
      %s54 = sphi 0, %s53
      %s68 = sphi 0, %s54
      %s72 = sphi 0, %s72
      %s74 = sphi 0, %s72
      %s75 = sphi 0, %s74
      %s89 = sphi 0, %s75
      %s93 = sphi 0, %s93
      %s95 = sphi 0, %s93
      %s96 = sphi 0, %s95
      %s110 = sphi 0, %s96
      %s114 = sphi 0, %s114
      %s116 = sphi 0, %s114
      %s117 = sphi 0, %s116
      %s131 = sphi 0, %s117
      %s135 = sphi 0, %s135
      %s137 = sphi 0, %s135
      %s138 = sphi 0, %s137
      %s152 = sphi 0, %s138
      %s156 = sphi 0, %s156
      %s158 = sphi 0, %s156
      %s159 = sphi 0, %s158
      %s173 = sphi 0, %s159
      %s177 = sphi 0, %s177
      %s179 = sphi 0, %s177
      %s180 = sphi 0, %s179
      %s194 = sphi 0, %s180
      %s200 = sphi 0, %s202
      %s203 = sphi 0, %s200
      %s204 = sphi 0, %s203
      %s220 = sphi 0, %s204
    $region4: #{stem_forward.3} parent=1 // loop_header_branch
      %20 = sbr.rel (%p18) target = $region8
    $region5: #{stem_forward.3} parent=1 // loop_body
      %s22 = ssub.s32 %s17, 1
      %s23 = ssub.s32 %s17, 2
      %s24 = sadd.s32 %s17, 1
      %s25 = ssub.s32 %s17, %s24
      %p26 = scmp.eq.s32.totalorder %s25, 0
      %s28 = sadd.s32 %s27, 1
      %s29 = scalar_select %p26, %s27, %s28
      %p32 = pneg %p26
      %p33 = scmp.eq.s32.totalorder %s17, 1
      %p34 = por %p32, %p33
      %p35 = scmp.ne.s32.totalorder %s27, %s30
      %p36 = scmp.eq.s32.totalorder %s17, 0
      %p37 = por %p35, %p36
      %p38 = scmp.ne.s32.totalorder %s27, %s30
      %p39 = scmp.eq.s32.totalorder %s22, 1
      %p40 = por %p38, %p39
      %p41 = scmp.ne.s32.totalorder %s30, %s31
      %p42 = scmp.eq.s32.totalorder %s22, 0
      %p43 = por %p41, %p42
      %p44 = scmp.ne.s32.totalorder %s30, %s31
      %p45 = scmp.eq.s32.totalorder %s23, 1
      %p46 = por %p44, %p45
      %p48 = scmp.ne.s32.totalorder %s31, %s47
      %p49 = scmp.eq.s32.totalorder %s23, 0
      %p50 = por %p48, %p49
      %s52 = sadd.s32 %s51, 1
      %p55 = scmp.eq.s32.totalorder %s17, 1
      %p56 = scmp.ne.s32.totalorder %s51, %s53
      %p57 = scmp.eq.s32.totalorder %s17, 0
      %p58 = por %p56, %p57
      %p59 = scmp.ne.s32.totalorder %s51, %s53
      %p60 = scmp.eq.s32.totalorder %s22, 1
      %p61 = por %p59, %p60
      %p62 = scmp.ne.s32.totalorder %s53, %s54
      %p63 = scmp.eq.s32.totalorder %s22, 0
      %p64 = por %p62, %p63
      %p65 = scmp.ne.s32.totalorder %s53, %s54
      %p66 = scmp.eq.s32.totalorder %s23, 1
      %p67 = por %p65, %p66
      %p69 = scmp.ne.s32.totalorder %s54, %s68
      %p70 = scmp.eq.s32.totalorder %s23, 0
      %p71 = por %p69, %p70
      %s73 = sadd.s32 %s72, 1
      %p76 = scmp.eq.s32.totalorder %s17, 1
      %p77 = scmp.ne.s32.totalorder %s72, %s74
      %p78 = scmp.eq.s32.totalorder %s17, 0
      %p79 = por %p77, %p78
      %p80 = scmp.ne.s32.totalorder %s72, %s74
      %p81 = scmp.eq.s32.totalorder %s22, 1
      %p82 = por %p80, %p81
      %p83 = scmp.ne.s32.totalorder %s74, %s75
      %p84 = scmp.eq.s32.totalorder %s22, 0
      %p85 = por %p83, %p84
      %p86 = scmp.ne.s32.totalorder %s74, %s75
      %p87 = scmp.eq.s32.totalorder %s23, 1
      %p88 = por %p86, %p87
      %p90 = scmp.ne.s32.totalorder %s75, %s89
      %p91 = scmp.eq.s32.totalorder %s23, 0
      %p92 = por %p90, %p91
      %s94 = sadd.s32 %s93, 1
      %p97 = scmp.eq.s32.totalorder %s17, 1
      %p98 = scmp.ne.s32.totalorder %s93, %s95
      %p99 = scmp.eq.s32.totalorder %s17, 0
      %p100 = por %p98, %p99
      %p101 = scmp.ne.s32.totalorder %s93, %s95
      %p102 = scmp.eq.s32.totalorder %s22, 1
      %p103 = por %p101, %p102
      %p104 = scmp.ne.s32.totalorder %s95, %s96
      %p105 = scmp.eq.s32.totalorder %s22, 0
      %p106 = por %p104, %p105
      %p107 = scmp.ne.s32.totalorder %s95, %s96
      %p108 = scmp.eq.s32.totalorder %s23, 1
      %p109 = por %p107, %p108
      %p111 = scmp.ne.s32.totalorder %s96, %s110
      %p112 = scmp.eq.s32.totalorder %s23, 0
      %p113 = por %p111, %p112
      %s115 = sadd.s32 %s114, 1
      %p118 = scmp.eq.s32.totalorder %s17, 1
      %p119 = scmp.ne.s32.totalorder %s114, %s116
      %p120 = scmp.eq.s32.totalorder %s17, 0
      %p121 = por %p119, %p120
      %p122 = scmp.ne.s32.totalorder %s114, %s116
      %p123 = scmp.eq.s32.totalorder %s22, 1
      %p124 = por %p122, %p123
      %p125 = scmp.ne.s32.totalorder %s116, %s117
      %p126 = scmp.eq.s32.totalorder %s22, 0
      %p127 = por %p125, %p126
      %p128 = scmp.ne.s32.totalorder %s116, %s117
      %p129 = scmp.eq.s32.totalorder %s23, 1
      %p130 = por %p128, %p129
      %p132 = scmp.ne.s32.totalorder %s117, %s131
      %p133 = scmp.eq.s32.totalorder %s23, 0
      %p134 = por %p132, %p133
      %s136 = sadd.s32 %s135, 1
      %p139 = scmp.eq.s32.totalorder %s17, 1
      %p140 = scmp.ne.s32.totalorder %s135, %s137
      %p141 = scmp.eq.s32.totalorder %s17, 0
      %p142 = por %p140, %p141
      %p143 = scmp.ne.s32.totalorder %s135, %s137
      %p144 = scmp.eq.s32.totalorder %s22, 1
      %p145 = por %p143, %p144
      %p146 = scmp.ne.s32.totalorder %s137, %s138
      %p147 = scmp.eq.s32.totalorder %s22, 0
      %p148 = por %p146, %p147
      %p149 = scmp.ne.s32.totalorder %s137, %s138
      %p150 = scmp.eq.s32.totalorder %s23, 1
      %p151 = por %p149, %p150
      %p153 = scmp.ne.s32.totalorder %s138, %s152
      %p154 = scmp.eq.s32.totalorder %s23, 0
      %p155 = por %p153, %p154
      %s157 = sadd.s32 %s156, 1
      %p160 = scmp.eq.s32.totalorder %s17, 1
      %p161 = scmp.ne.s32.totalorder %s156, %s158
      %p162 = scmp.eq.s32.totalorder %s17, 0
      %p163 = por %p161, %p162
      %p164 = scmp.ne.s32.totalorder %s156, %s158
      %p165 = scmp.eq.s32.totalorder %s22, 1
      %p166 = por %p164, %p165
      %p167 = scmp.ne.s32.totalorder %s158, %s159
      %p168 = scmp.eq.s32.totalorder %s22, 0
      %p169 = por %p167, %p168
      %p170 = scmp.ne.s32.totalorder %s158, %s159
      %p171 = scmp.eq.s32.totalorder %s23, 1
      %p172 = por %p170, %p171
      %p174 = scmp.ne.s32.totalorder %s159, %s173
      %p175 = scmp.eq.s32.totalorder %s23, 0
      %p176 = por %p174, %p175
      %s178 = sadd.s32 %s177, 1
      %p181 = scmp.eq.s32.totalorder %s17, 1
      %p182 = scmp.ne.s32.totalorder %s177, %s179
      %p183 = scmp.eq.s32.totalorder %s17, 0
      %p184 = por %p182, %p183
      %p185 = scmp.ne.s32.totalorder %s177, %s179
      %p186 = scmp.eq.s32.totalorder %s22, 1
      %p187 = por %p185, %p186
      %p188 = scmp.ne.s32.totalorder %s179, %s180
      %p189 = scmp.eq.s32.totalorder %s22, 0
      %p190 = por %p188, %p189
      %p191 = scmp.ne.s32.totalorder %s179, %s180
      %p192 = scmp.eq.s32.totalorder %s23, 1
      %p193 = por %p191, %p192
      %p195 = scmp.ne.s32.totalorder %s180, %s194
      %p196 = scmp.eq.s32.totalorder %s23, 0
      %p197 = por %p195, %p196
      %s198 = ssub.s32 %s17, %s24
      %p199 = scmp.eq.s32.totalorder %s198, 0
      %s201 = sadd.s32 %s200, 1
      %s202 = scalar_select %p199, %s200, %s201
      %p205 = pneg %p199
      %p206 = scmp.eq.s32.totalorder %s17, 1
      %p207 = por %p205, %p206
      %p208 = scmp.ne.s32.totalorder %s200, %s203
      %p209 = scmp.eq.s32.totalorder %s17, 0
      %p210 = por %p208, %p209
      %p211 = scmp.ne.s32.totalorder %s200, %s203
      %p212 = scmp.eq.s32.totalorder %s22, 1
      %p213 = por %p211, %p212
      %p214 = scmp.ne.s32.totalorder %s203, %s204
      %p215 = scmp.eq.s32.totalorder %s22, 0
      %p216 = por %p214, %p215
      %p217 = scmp.ne.s32.totalorder %s203, %s204
      %p218 = scmp.eq.s32.totalorder %s23, 1
      %p219 = por %p217, %p218
      %p221 = scmp.ne.s32.totalorder %s204, %s220
      %p222 = scmp.eq.s32.totalorder %s23, 0
      %p223 = por %p221, %p222
      %p224 = scmp.le.s32.totalorder 1, %s17
      %p225 = scmp.lt.s32.totalorder %s17, 3
      %p226 = pnand %p224, %p225
      %p227 = pneg %p226
      // Predicated region
      $region9: #{stem_forward.3} parent=5 // pred_check
        _
      $region10: #{stem_forward.3} parent=5 // pred_check_branch
        %229 = sbr.rel (%p226) target = $region12
      $region11: #{stem_forward.3} parent=5 // pred_region
        %s230 = ssub.s32 %s17, 1
        // Predicated region
        $region13: #{stem_forward.3} parent=11 // pred_check
          %p231 = pneg %p64
        $region14: #{stem_forward.3} parent=11 // pred_check_branch
          %233 = sbr.rel (%p231) target = $region16
        $region15: #{stem_forward.3} parent=11 // pred_region
          _
        $region16: #{stem_forward.3} parent=11 // pred_fallthru
          _
        // Predicated region
        $region17: #{stem_forward.3} parent=11 // pred_check
          %p234 = pneg %p85
        $region18: #{stem_forward.3} parent=11 // pred_check_branch
          %236 = sbr.rel (%p234) target = $region20
        $region19: #{stem_forward.3} parent=11 // pred_region
          _
        $region20: #{stem_forward.3} parent=11 // pred_fallthru
          _
        // Predicated region
        $region21: #{stem_forward.3} parent=11 // pred_check
          %p237 = pneg %p106
        $region22: #{stem_forward.3} parent=11 // pred_check_branch
          %239 = sbr.rel (%p237) target = $region24
        $region23: #{stem_forward.3} parent=11 // pred_region
          _
        $region24: #{stem_forward.3} parent=11 // pred_fallthru
          _
        // Predicated region
        $region25: #{stem_forward.3} parent=11 // pred_check
          %p240 = pneg %p127
        $region26: #{stem_forward.3} parent=11 // pred_check_branch
          %242 = sbr.rel (%p240) target = $region28
        $region27: #{stem_forward.3} parent=11 // pred_region
          _
        $region28: #{stem_forward.3} parent=11 // pred_fallthru
          _
        // Predicated region
        $region29: #{stem_forward.3} parent=11 // pred_check
          %p243 = pneg %p148
        $region30: #{stem_forward.3} parent=11 // pred_check_branch
          %245 = sbr.rel (%p243) target = $region32
        $region31: #{stem_forward.3} parent=11 // pred_region
          _
        $region32: #{stem_forward.3} parent=11 // pred_fallthru
          _
        // Predicated region
        $region33: #{stem_forward.3} parent=11 // pred_check
          %p246 = pneg %p169
        $region34: #{stem_forward.3} parent=11 // pred_check_branch
          %248 = sbr.rel (%p246) target = $region36
        $region35: #{stem_forward.3} parent=11 // pred_region
          _
        $region36: #{stem_forward.3} parent=11 // pred_fallthru
          _
        // Predicated region
        $region37: #{stem_forward.3} parent=11 // pred_check
          %p249 = pneg %p190
        $region38: #{stem_forward.3} parent=11 // pred_check_branch
          %251 = sbr.rel (%p249) target = $region40
        $region39: #{stem_forward.3} parent=11 // pred_region
          _
        $region40: #{stem_forward.3} parent=11 // pred_fallthru
          _
      $region12: #{stem_forward.3} parent=5 // pred_fallthru
        _
      %p252 = scmp.lt.s32.totalorder %s17, 2
      // Predicated region
      $region41: #{stem_forward.3} parent=5 // pred_check
        %p253 = pneg %p252
      $region42: #{stem_forward.3} parent=5 // pred_check_branch
        %255 = sbr.rel (%p253) target = $region44
      $region43: #{stem_forward.3} parent=5 // pred_region
        // Predicated region
        $region45: #{stem_forward.3} parent=43 // pred_check
          %p256 = pneg %p37
        $region46: #{stem_forward.3} parent=43 // pred_check_branch
          %258 = sbr.rel (%p256) target = $region48
        $region47: #{stem_forward.3} parent=43 // pred_region
          %s259 = smul.u32 4, %s17
          %p260 = scmp.lt.s32.totalorder %s259, 7
          %s261 = scalar_select %p260, %s259, 7
          %s262 = smul.addr %s261, 4
          %s263 = smul.addr %s262, 4
          %s264 = scalar_lea.vmem %s0, %s263
          %s265 = smul.u32 4, %s17
        $region48: #{stem_forward.3} parent=43 // pred_fallthru
          _
      $region44: #{stem_forward.3} parent=5 // pred_fallthru
        _
      %p266 = scmp.le.s32.totalorder 1, %s17
      %p267 = scmp.lt.s32.totalorder %s17, 3
      %p268 = pnand %p266, %p267
      %p269 = pneg %p268
      // Predicated region
      $region49: #{stem_forward.3} parent=5 // pred_check
        _
      $region50: #{stem_forward.3} parent=5 // pred_check_branch
        %271 = sbr.rel (%p268) target = $region52
      $region51: #{stem_forward.3} parent=5 // pred_region
        %s272 = ssub.s32 %s17, 1
        %s273 = smul.u32 4, %s22
        %p274 = scmp.lt.s32.totalorder %s273, 7
        %s275 = scalar_select %p274, %s273, 7
        %s276 = smul.addr %s275, 4
        %s277 = smul.addr %s276, 4
        %s278 = scalar_lea.vmem %s0, %s277
        %p279 = pneg %p43
        %p280 = pneg %p40
        %p281 = pneg %p64
        %p282 = pneg %p61
        %p283 = pneg %p85
        %p284 = pneg %p82
        %p285 = pneg %p106
        %p286 = pneg %p103
        %p287 = pneg %p127
        %p288 = pneg %p124
        %p289 = pneg %p148
        %p290 = pneg %p145
        %p291 = pneg %p169
        %p292 = pneg %p166
        %p293 = pneg %p190
        %p294 = pneg %p187
        %p295 = pneg %p216
        %p296 = pneg %p213
        %s297 = sand.u32 %s203, 1
        %s298 = scalar_lea.sflag [#allocation4], %s297
        %s299 = sand.u32 %s203, 1
        %s300 = smul.addr %s299, 16
        %s301 = scalar_lea.vmem [#allocation3], %s300
        %s302 = smul.u32 4, %s22
        %p303 = scmp.lt.s32.totalorder %s302, 7
        %s304 = scalar_select %p303, %s302, 7
        %s305 = smul.addr %s304, 4
        %s306 = smul.addr %s305, 4
        %s307 = scalar_lea.vmem %s0, %s306
        %s308 = smul.u32 4, %s22
        %v309 = vld [vmem:[%s307] sm:$0xf]
        %v310 = vld [vmem:[%s307 + $0x4] sm:$0xf]
        %v311 = vld [vmem:[%s307 + $0x8] sm:$0xf]
        %v312 = vld [vmem:[%s307 + $0xc] sm:$0xf]
        %v313 = vld [vmem:[%s307 + $0x10] sm:$0xf]
        %v314 = vld [vmem:[%s307 + $0x14] sm:$0xf]
        %v315 = vld [vmem:[%s307 + $0x18] sm:$0xf]
        %v316 = vld [vmem:[%s307 + $0x1c] sm:$0xf]
        %v317 = vld [vmem:[%s307 + $0x20] sm:$0xf]
        %v318 = vld [vmem:[%s307 + $0x24] sm:$0xf]
        %v319 = vld [vmem:[%s307 + $0x28] sm:$0xf]
        %v320 = vld [vmem:[%s307 + $0x2c] sm:$0xf]
        %v321 = vld [vmem:[%s307 + $0x30] sm:$0xf]
        %v322 = vld [vmem:[%s307 + $0x34] sm:$0xf]
        %v323 = vld [vmem:[%s307 + $0x38] sm:$0xf]
        %v324 = vld [vmem:[%s307 + $0x3c] sm:$0xf]
        %vm325 = vcmask 257024
        %v326 = vsel %vm325, %v309, -inf
        %v327 = vsel %vm325, %v313, -inf
        %v328 = vmax.f32 %v326, %v327
        %v329 = vsel %vm325, %v317, -inf
        %v330 = vmax.f32 %v328, %v329
        %v331 = vsel %vm325, %v321, -inf
        %v332 = vmax.f32 %v330, %v331
        %v333 = vsel %vm325, %v310, -inf
        %v334 = vsel %vm325, %v314, -inf
        %v335 = vmax.f32 %v333, %v334
        %v336 = vsel %vm325, %v318, -inf
        %v337 = vmax.f32 %v335, %v336
        %v338 = vsel %vm325, %v322, -inf
        %v339 = vmax.f32 %v337, %v338
        %v340 = vsel %vm325, %v311, -inf
        %v341 = vsel %vm325, %v315, -inf
        %v342 = vmax.f32 %v340, %v341
        %v343 = vsel %vm325, %v319, -inf
        %v344 = vmax.f32 %v342, %v343
        %v345 = vsel %vm325, %v323, -inf
        %v346 = vmax.f32 %v344, %v345
        %v347 = vsel %vm325, %v312, -inf
        %v348 = vsel %vm325, %v316, -inf
        %v349 = vmax.f32 %v347, %v348
        %v350 = vsel %vm325, %v320, -inf
        %v351 = vmax.f32 %v349, %v350
        %v352 = vsel %vm325, %v324, -inf
        %v353 = vmax.f32 %v351, %v352
        %v354 = vld [vmem:[%s1] sm:$0xff]
        %v355 = vld [vmem:[%s1 + $0x8] sm:$0xff]
        %v356 = vld [vmem:[%s1 + $0x10] sm:$0xff]
        %v357 = vld [vmem:[%s1 + $0x18] sm:$0xff]
        %v358 = vld [vmem:[%s2] sm:$0x1]
        %v360 = vlaneseq
        %v361 = vshrl.u32 %v360, 7
        %v362 = vsub.s32 0, %v361
        %v363 = vrot.slane %v358, %v362
        %v381 = vcombine.low %v309, %v310
        %v382 = vcombine.low %v311, %v312
        %v383 = vcombine.low %v313, %v314
        %v384 = vcombine.low %v315, %v316
        %v385 = vcombine.low %v317, %v318
        %v386 = vcombine.low %v319, %v320
        %v387 = vcombine.low %v321, %v322
        %v388 = vcombine.low %v323, %v324
        %vm389 = vcmask 261120
        %v390 = vsel %vm389, %v381, 0
        %v392 = vsel %vm389, %v382, 0
        %v394 = vsel %vm389, %v383, 0
        %v396 = vsel %vm389, %v384, 0
        %v398 = vsel %vm389, %v385, 0
        %v400 = vsel %vm389, %v386, 0
        %v402 = vsel %vm389, %v387, 0
        %v404 = vsel %vm389, %v388, 0
        %406 = vmatprep.subr.mxu0 0.0
        %407 = vmatpush1.msra.mxu0 0.0
        %408 = vmatprep.subr.mxu0 0.0
        %409 = vmatpush1.msra.mxu0 0.0
        %410 = vmatprep.subr.mxu0 0.0
        %411 = vmatpush1.msra.mxu0 0.0
        %412 = vmatprep.subr.mxu0 0.0
        %413 = vmatpush1.msra.mxu0 0.0
        %414 = vmatprep.subr.mxu0 0.0
        %415 = vmatpush1.msra.mxu0 0.0
        %416 = vmatprep.subr.mxu0 0.0
        %417 = vmatpush1.msra.mxu0 0.0
        %418 = vmatprep.subr.mxu0 0.0
        %419 = vmatpush1.msra.mxu0 0.0
        %420 = vmatprep.subr.mxu0 0.0
        %421 = vmatpush1.msra.mxu0 0.0
        %422 = vmatprep.subr.mxu0 0.0
        %423 = vmatpush1.msra.mxu0 0.0
        %424 = vmatprep.subr.mxu0 0.0
        %425 = vmatpush1.msra.mxu0 0.0
        %426 = vmatprep.subr.mxu0 0.0
        %427 = vmatpush1.msra.mxu0 0.0
        %428 = vmatprep.subr.mxu0 0.0
        %429 = vmatpush1.msra.mxu0 0.0
        %430 = vmatprep.subr.mxu0 0.0
        %431 = vmatpush1.msra.mxu0 %v357
        %432 = vmatprep.subr.mxu0 0.0
        %433 = vmatpush1.msra.mxu0 %v356
        %434 = vmatprep.subr.mxu0 0.0
        %435 = vmatpush1.msra.mxu0 %v355
        %436 = vmatprep.subr.mxu0 0.0
        %437 = vmatpush1.msra.mxu0 %v354
        %438 = vmatprep.subr.mxu0 0.0
        %439 = vmatpush2.msra.mxu0 0.0
        %440 = vmatprep.subr.mxu0 0.0
        %441 = vmatpush2.msra.mxu0 0.0
        %442 = vmatprep.subr.mxu0 0.0
        %443 = vmatpush2.msra.mxu0 0.0
        %444 = vmatprep.subr.mxu0 0.0
        %445 = vmatpush2.msra.mxu0 0.0
        %446 = vmatprep.subr.mxu0 0.0
        %447 = vmatpush2.msra.mxu0 0.0
        %448 = vmatprep.subr.mxu0 0.0
        %449 = vmatpush2.msra.mxu0 0.0
        %450 = vmatprep.subr.mxu0 0.0
        %451 = vmatpush2.msra.mxu0 0.0
        %452 = vmatprep.subr.mxu0 0.0
        %453 = vmatpush2.msra.mxu0 0.0
        %454 = vmatprep.subr.mxu0 0.0
        %455 = vmatpush2.msra.mxu0 0.0
        %456 = vmatprep.subr.mxu0 0.0
        %457 = vmatpush2.msra.mxu0 0.0
        %458 = vmatprep.subr.mxu0 0.0
        %459 = vmatpush2.msra.mxu0 0.0
        %460 = vmatprep.subr.mxu0 0.0
        %461 = vmatpush2.msra.mxu0 0.0
        %462 = vmatprep.subr.mxu0 0.0
        %463 = vmatpush2.msra.mxu0 0.0
        %464 = vmatprep.subr.mxu0 0.0
        %465 = vmatpush2.msra.mxu0 0.0
        %466 = vmatprep.subr.mxu0 0.0
        %467 = vmatpush2.msra.mxu0 0.0
        %468 = vmatprep.subr.mxu0 0.0
        %469 = vmatpush2.msra.mxu0 0.0
        %470 = vmatprep.mubr.f32.mxu0 0.0
        %471 = vmatmul.mubr.f32.gmra.mxu0 %v390
        %v472 = vpop.f32.mrf.mxu0
        %v473 = vadd.f32 %v363, %v472
        %v474 = vpop.f32.mrf.mxu0
        %475 = vmatprep.mubr.f32.mxu0 0.0
        %476 = vmatmul.mubr.f32.gmra.mxu0 %v392
        %v477 = vpop.f32.mrf.mxu0
        %v478 = vadd.f32 %v363, %v477
        %v479 = vpop.f32.mrf.mxu0
        %480 = vmatprep.mubr.f32.mxu0 0.0
        %481 = vmatmul.mubr.f32.gmra.mxu0 %v394
        %v482 = vpop.f32.mrf.mxu0
        %v483 = vadd.f32 %v363, %v482
        %v484 = vpop.f32.mrf.mxu0
        %485 = vmatprep.mubr.f32.mxu0 0.0
        %486 = vmatmul.mubr.f32.gmra.mxu0 %v396
        %v487 = vpop.f32.mrf.mxu0
        %v488 = vadd.f32 %v363, %v487
        %v489 = vpop.f32.mrf.mxu0
        %490 = vmatprep.mubr.f32.mxu0 0.0
        %491 = vmatmul.mubr.f32.gmra.mxu0 %v398
        %v492 = vpop.f32.mrf.mxu0
        %v493 = vadd.f32 %v363, %v492
        %v494 = vpop.f32.mrf.mxu0
        %495 = vmatprep.mubr.f32.mxu0 0.0
        %496 = vmatmul.mubr.f32.gmra.mxu0 %v400
        %v497 = vpop.f32.mrf.mxu0
        %v498 = vadd.f32 %v363, %v497
        %v499 = vpop.f32.mrf.mxu0
        %500 = vmatprep.mubr.f32.mxu0 0.0
        %501 = vmatmul.mubr.f32.gmra.mxu0 %v402
        %v502 = vpop.f32.mrf.mxu0
        %v503 = vadd.f32 %v363, %v502
        %v504 = vpop.f32.mrf.mxu0
        %505 = vmatprep.mubr.f32.mxu0 0.0
        %506 = vmatmul.mubr.f32.gmra.mxu0 %v404
        %v507 = vpop.f32.mrf.mxu0
        %v508 = vadd.f32 %v363, %v507
        %v509 = vpop.f32.mrf.mxu0
        %510 = vdwg.mxu0
        %vm511 = vcmp.ge.f32.partialorder %v473, 0.0
        %vm512 = vcmp.ge.f32.partialorder %v478, 0.0
        %vm513 = vcmp.ge.f32.partialorder %v483, 0.0
        %vm514 = vcmp.ge.f32.partialorder %v488, 0.0
        %vm515 = vcmp.ge.f32.partialorder %v493, 0.0
        %vm516 = vcmp.ge.f32.partialorder %v498, 0.0
        %vm517 = vcmp.ge.f32.partialorder %v503, 0.0
        %vm518 = vcmp.ge.f32.partialorder %v508, 0.0
        %v519 = vmul.f32 %v473, 0.01
        %v520 = vmul.f32 %v478, 0.01
        %v521 = vmul.f32 %v483, 0.01
        %v522 = vmul.f32 %v488, 0.01
        %v523 = vmul.f32 %v493, 0.01
        %v524 = vmul.f32 %v498, 0.01
        %v525 = vmul.f32 %v503, 0.01
        %v526 = vmul.f32 %v508, 0.01
        %v527 = vsel %vm511, %v473, %v519
        %v528 = vsel %vm512, %v478, %v520
        %v529 = vsel %vm513, %v483, %v521
        %v530 = vsel %vm514, %v488, %v522
        %v531 = vsel %vm515, %v493, %v523
        %v532 = vsel %vm516, %v498, %v524
        %v533 = vsel %vm517, %v503, %v525
        %v534 = vsel %vm518, %v508, %v526
        %v543 = vcombine.high %v527, %v527
        %v544 = vcombine.high %v528, %v528
        %v545 = vcombine.high %v529, %v529
        %v546 = vcombine.high %v530, %v530
        %v547 = vcombine.high %v531, %v531
        %v548 = vcombine.high %v532, %v532
        %v549 = vcombine.high %v533, %v533
        %v550 = vcombine.high %v534, %v534
        %vm559 = vcmask 258048
        %560 = vst.msk [vmem:[#allocation2] sm:$0x1f] %vm559, 0.0
        %561 = vst.msk [vmem:[#allocation2 + $0x8] sm:$0x1f] %vm559, 0.0
        %562 = vst.msk [vmem:[#allocation2 + $0x10] sm:$0x1f] %vm559, 0.0
        %563 = vst.msk [vmem:[#allocation2 + $0x18] sm:$0x1f] %vm559, 0.0
        %564 = vst.msk [vmem:[#allocation2 + $0x20] sm:$0x1f] %vm559, 0.0
        %565 = vst.msk [vmem:[#allocation2 + $0x28] sm:$0x1f] %vm559, 0.0
        %566 = vst.msk [vmem:[#allocation2 + $0x30] sm:$0x1f] %vm559, 0.0
        %567 = vst.msk [vmem:[#allocation2 + $0x38] sm:$0x1f] %vm559, 0.0
        %568 = vst.msk [vmem:[#allocation2 + $0x40] sm:$0x1f] %vm559, 0.0
        %569 = vst.msk [vmem:[#allocation2 + $0x48] sm:$0x1f] %vm559, 0.0
        %570 = vst.msk [vmem:[#allocation2 + $0x50] sm:$0x1f] %vm559, 0.0
        %571 = vst.msk [vmem:[#allocation2 + $0x58] sm:$0x1f] %vm559, 0.0
        %572 = vst.msk [vmem:[#allocation2 + $0x60] sm:$0x1f] %vm559, 0.0
        %573 = vst.msk [vmem:[#allocation2 + $0x68] sm:$0x1f] %vm559, 0.0
        %574 = vst.msk [vmem:[#allocation2 + $0x70] sm:$0x1f] %vm559, 0.0
        %575 = vst.msk [vmem:[#allocation2 + $0x78] sm:$0x1f] %vm559, 0.0
        %576 = vst.msk [vmem:[#allocation2 + $0x80] sm:$0x1f] %vm559, 0.0
        %577 = vst.msk [vmem:[#allocation2 + $0x88] sm:$0x1f] %vm559, 0.0
        %578 = vst.msk [vmem:[#allocation2 + $0x90] sm:$0x1f] %vm559, 0.0
        %579 = vst.msk [vmem:[#allocation2 + $0x98] sm:$0x1f] %vm559, 0.0
        %s580 = scalar_lea.vmem [#allocation2], 8
        %581 = vst.msk [vmem:[%s580 + $0x1] sm:$0xf] %vm325, %v527
        %582 = vst.msk [vmem:[%s580 + $0x9] sm:$0xf] %vm325, %v543
        %583 = vst.msk [vmem:[%s580 + $0x11] sm:$0xf] %vm325, %v528
        %584 = vst.msk [vmem:[%s580 + $0x19] sm:$0xf] %vm325, %v544
        %s585 = scalar_lea.vmem [#allocation2], 48
        %586 = vst.msk [vmem:[%s585 + $0x1] sm:$0xf] %vm325, %v529
        %587 = vst.msk [vmem:[%s585 + $0x9] sm:$0xf] %vm325, %v545
        %588 = vst.msk [vmem:[%s585 + $0x11] sm:$0xf] %vm325, %v530
        %589 = vst.msk [vmem:[%s585 + $0x19] sm:$0xf] %vm325, %v546
        %s590 = scalar_lea.vmem [#allocation2], 88
        %591 = vst.msk [vmem:[%s590 + $0x1] sm:$0xf] %vm325, %v531
        %592 = vst.msk [vmem:[%s590 + $0x9] sm:$0xf] %vm325, %v547
        %593 = vst.msk [vmem:[%s590 + $0x11] sm:$0xf] %vm325, %v532
        %594 = vst.msk [vmem:[%s590 + $0x19] sm:$0xf] %vm325, %v548
        %s595 = scalar_lea.vmem [#allocation2], 128
        %596 = vst.msk [vmem:[%s595 + $0x1] sm:$0xf] %vm325, %v533
        %597 = vst.msk [vmem:[%s595 + $0x9] sm:$0xf] %vm325, %v549
        %598 = vst.msk [vmem:[%s595 + $0x11] sm:$0xf] %vm325, %v534
        %599 = vst.msk [vmem:[%s595 + $0x19] sm:$0xf] %vm325, %v550
        %s600 = scalar_lea.vmem [#allocation2], 120
        %v601 = vld [vmem:[%s600] sm:$0xf]
        %v602 = vld [vmem:[%s600 + $0x8] sm:$0xf]
        %v603 = vld [vmem:[%s600 + $0x10] sm:$0xf]
        %v604 = vld [vmem:[%s600 + $0x18] sm:$0xf]
        %s605 = scalar_lea.vmem [#allocation2], 80
        %v606 = vld [vmem:[%s605 + $0x1] sm:$0xf]
        %v607 = vld [vmem:[%s605 + $0x9] sm:$0xf]
        %v608 = vld [vmem:[%s605 + $0x11] sm:$0xf]
        %v609 = vld [vmem:[%s605 + $0x19] sm:$0xf]
        %v610 = vld [vmem:[%s600 + $0x1] sm:$0xf]
        %v611 = vld [vmem:[%s600 + $0x9] sm:$0xf]
        %v612 = vld [vmem:[%s600 + $0x11] sm:$0xf]
        %v613 = vld [vmem:[%s600 + $0x19] sm:$0xf]
        %v614 = vld [vmem:[%s585] sm:$0xf]
        %v615 = vld [vmem:[%s585 + $0x8] sm:$0xf]
        %v616 = vld [vmem:[%s585 + $0x10] sm:$0xf]
        %v617 = vld [vmem:[%s585 + $0x18] sm:$0xf]
        %v618 = vld [vmem:[%s580 + $0x1] sm:$0xf]
        %v619 = vld [vmem:[%s580 + $0x9] sm:$0xf]
        %v620 = vld [vmem:[%s580 + $0x11] sm:$0xf]
        %v621 = vld [vmem:[%s580 + $0x19] sm:$0xf]
        %v622 = vld [vmem:[%s585 + $0x1] sm:$0xf]
        %v623 = vld [vmem:[%s585 + $0x9] sm:$0xf]
        %v624 = vld [vmem:[%s585 + $0x11] sm:$0xf]
        %v625 = vld [vmem:[%s585 + $0x19] sm:$0xf]
        %v626 = vld [vmem:[%s595] sm:$0xf]
        %v627 = vld [vmem:[%s595 + $0x8] sm:$0xf]
        %v628 = vld [vmem:[%s595 + $0x10] sm:$0xf]
        %v629 = vld [vmem:[%s595 + $0x18] sm:$0xf]
        %v630 = vld [vmem:[%s590 + $0x1] sm:$0xf]
        %v631 = vld [vmem:[%s590 + $0x9] sm:$0xf]
        %v632 = vld [vmem:[%s590 + $0x11] sm:$0xf]
        %v633 = vld [vmem:[%s590 + $0x19] sm:$0xf]
        %v634 = vld [vmem:[%s595 + $0x1] sm:$0xf]
        %v635 = vld [vmem:[%s595 + $0x9] sm:$0xf]
        %v636 = vld [vmem:[%s595 + $0x11] sm:$0xf]
        %v637 = vld [vmem:[%s595 + $0x19] sm:$0xf]
        %642 = vrot.lane.b32.xlu0 %v606, 32
        %v643 = vpop.permute.xlu0 %642
        %644 = vrot.lane.b32.xlu0 %v607, 32
        %v645 = vpop.permute.xlu0 %644
        %646 = vrot.lane.b32.xlu0 %v608, 32
        %v647 = vpop.permute.xlu0 %646
        %648 = vrot.lane.b32.xlu0 %v609, 32
        %v649 = vpop.permute.xlu0 %648
        %658 = vrot.lane.b32.xlu0 %v610, 64
        %v659 = vpop.permute.xlu0 %658
        %660 = vrot.lane.b32.xlu0 %v611, 64
        %v661 = vpop.permute.xlu0 %660
        %662 = vrot.lane.b32.xlu0 %v612, 64
        %v663 = vpop.permute.xlu0 %662
        %664 = vrot.lane.b32.xlu0 %v613, 64
        %v665 = vpop.permute.xlu0 %664
        %674 = vrot.lane.b32.xlu0 %v614, 96
        %v675 = vpop.permute.xlu0 %674
        %676 = vrot.lane.b32.xlu0 %v615, 96
        %v677 = vpop.permute.xlu0 %676
        %678 = vrot.lane.b32.xlu0 %v616, 96
        %v679 = vpop.permute.xlu0 %678
        %680 = vrot.lane.b32.xlu0 %v617, 96
        %v681 = vpop.permute.xlu0 %680
        %690 = vrot.lane.b32.xlu0 %v622, 32
        %v691 = vpop.permute.xlu0 %690
        %692 = vrot.lane.b32.xlu0 %v623, 32
        %v693 = vpop.permute.xlu0 %692
        %694 = vrot.lane.b32.xlu0 %v624, 32
        %v695 = vpop.permute.xlu0 %694
        %696 = vrot.lane.b32.xlu0 %v625, 32
        %v697 = vpop.permute.xlu0 %696
        %706 = vrot.lane.b32.xlu0 %v626, 64
        %v707 = vpop.permute.xlu0 %706
        %708 = vrot.lane.b32.xlu0 %v627, 64
        %v709 = vpop.permute.xlu0 %708
        %710 = vrot.lane.b32.xlu0 %v628, 64
        %v711 = vpop.permute.xlu0 %710
        %712 = vrot.lane.b32.xlu0 %v629, 64
        %v713 = vpop.permute.xlu0 %712
        %722 = vrot.lane.b32.xlu0 %v630, 96
        %v723 = vpop.permute.xlu0 %722
        %724 = vrot.lane.b32.xlu0 %v631, 96
        %v725 = vpop.permute.xlu0 %724
        %726 = vrot.lane.b32.xlu0 %v632, 96
        %v727 = vpop.permute.xlu0 %726
        %728 = vrot.lane.b32.xlu0 %v633, 96
        %v729 = vpop.permute.xlu0 %728
        %v734 = vsel %vm389, %v601, %v643
        %v735 = vsel %vm389, %v602, %v645
        %v736 = vsel %vm389, %v603, %v647
        %v737 = vsel %vm389, %v604, %v649
        %vm738 = vcmask 523264
        %v739 = vsel %vm738, %v734, %v659
        %v740 = vsel %vm738, %v735, %v661
        %v741 = vsel %vm738, %v736, %v663
        %v742 = vsel %vm738, %v737, %v665
        %vm743 = vcmask 785408
        %v744 = vsel %vm743, %v739, %v675
        %v745 = vsel %vm743, %v740, %v677
        %v746 = vsel %vm743, %v741, %v679
        %v747 = vsel %vm743, %v742, %v681
        %v748 = vsel %vm389, %v618, %v691
        %v749 = vsel %vm389, %v619, %v693
        %v750 = vsel %vm389, %v620, %v695
        %v751 = vsel %vm389, %v621, %v697
        %v752 = vsel %vm738, %v748, %v707
        %v753 = vsel %vm738, %v749, %v709
        %v754 = vsel %vm738, %v750, %v711
        %v755 = vsel %vm738, %v751, %v713
        %v756 = vsel %vm743, %v752, %v723
        %v757 = vsel %vm743, %v753, %v725
        %v758 = vsel %vm743, %v754, %v727
        %v759 = vsel %vm743, %v755, %v729
        %v772 = vcombine.low %v744, %v756
        %v773 = vcombine.low %v745, %v757
        %v774 = vcombine.low %v746, %v758
        %v775 = vcombine.low %v747, %v759
        %v776 = vld [vmem:[%s3] sm:$0xff]
        %v777 = vld [vmem:[%s3 + $0x8] sm:$0xff]
        %v778 = vld [vmem:[%s3 + $0x10] sm:$0xff]
        %v779 = vld [vmem:[%s3 + $0x18] sm:$0xff]
        %v780 = vld [vmem:[%s3 + $0x20] sm:$0xff]
        %v781 = vld [vmem:[%s3 + $0x28] sm:$0xff]
        %v782 = vld [vmem:[%s3 + $0x30] sm:$0xff]
        %v783 = vld [vmem:[%s3 + $0x38] sm:$0xff]
        %v784 = vld [vmem:[%s3 + $0x40] sm:$0xff]
        %v785 = vld [vmem:[%s3 + $0x48] sm:$0xff]
        %v786 = vld [vmem:[%s3 + $0x50] sm:$0xff]
        %v787 = vld [vmem:[%s3 + $0x58] sm:$0xff]
        %v788 = vld [vmem:[%s3 + $0x60] sm:$0xff]
        %v789 = vld [vmem:[%s3 + $0x68] sm:$0xff]
        %v790 = vld [vmem:[%s3 + $0x70] sm:$0xff]
        %v791 = vld [vmem:[%s3 + $0x78] sm:$0xff]
        %v792 = vld [vmem:[%s3 + $0x80] sm:$0xff]
        %v793 = vld [vmem:[%s3 + $0x88] sm:$0xff]
        %v794 = vld [vmem:[%s3 + $0x90] sm:$0xff]
        %v795 = vld [vmem:[%s3 + $0x98] sm:$0xff]
        %v796 = vld [vmem:[%s3 + $0xa0] sm:$0xff]
        %v797 = vld [vmem:[%s3 + $0xa8] sm:$0xff]
        %v798 = vld [vmem:[%s3 + $0xb0] sm:$0xff]
        %v799 = vld [vmem:[%s3 + $0xb8] sm:$0xff]
        %v800 = vld [vmem:[%s3 + $0xc0] sm:$0xff]
        %v801 = vld [vmem:[%s3 + $0xc8] sm:$0xff]
        %v802 = vld [vmem:[%s3 + $0xd0] sm:$0xff]
        %v803 = vld [vmem:[%s3 + $0xd8] sm:$0xff]
        %v804 = vld [vmem:[%s3 + $0xe0] sm:$0xff]
        %v805 = vld [vmem:[%s3 + $0xe8] sm:$0xff]
        %v806 = vld [vmem:[%s3 + $0xf0] sm:$0xff]
        %v807 = vld [vmem:[%s3 + $0xf8] sm:$0xff]
        %v808 = vld [vmem:[%s3 + $0x100] sm:$0xff]
        %v809 = vld [vmem:[%s3 + $0x108] sm:$0xff]
        %v810 = vld [vmem:[%s3 + $0x110] sm:$0xff]
        %v811 = vld [vmem:[%s3 + $0x118] sm:$0xff]
        %v812 = vld [vmem:[%s4] sm:$0x1]
        %v814 = vlaneseq
        %v815 = vshrl.u32 %v814, 7
        %v816 = vsub.s32 0, %v815
        %v817 = vrot.slane %v812, %v816
        %v819 = vcombine.low %v772, %v773
        %v820 = vcombine.high %v772, %v773
        %v821 = vcombine.low %v634, %v635
        %v822 = vcombine.low %v774, %v775
        %v823 = vcombine.high %v774, %v775
        %v824 = vcombine.low %v636, %v637
        %v829 = vsel %vm389, %v821, 0
        %v831 = vsel %vm389, %v824, 0
        %833 = vmatprep.subr.mxu0 0.0
        %834 = vmatpush1.msra.mxu0 %v791
        %835 = vmatprep.subr.mxu0 0.0
        %836 = vmatpush1.msra.mxu0 %v790
        %837 = vmatprep.subr.mxu0 0.0
        %838 = vmatpush1.msra.mxu0 %v789
        %839 = vmatprep.subr.mxu0 0.0
        %840 = vmatpush1.msra.mxu0 %v788
        %841 = vmatprep.subr.mxu0 0.0
        %842 = vmatpush1.msra.mxu0 %v787
        %843 = vmatprep.subr.mxu0 0.0
        %844 = vmatpush1.msra.mxu0 %v786
        %845 = vmatprep.subr.mxu0 0.0
        %846 = vmatpush1.msra.mxu0 %v785
        %847 = vmatprep.subr.mxu0 0.0
        %848 = vmatpush1.msra.mxu0 %v784
        %849 = vmatprep.subr.mxu0 0.0
        %850 = vmatpush1.msra.mxu0 %v783
        %851 = vmatprep.subr.mxu0 0.0
        %852 = vmatpush1.msra.mxu0 %v782
        %853 = vmatprep.subr.mxu0 0.0
        %854 = vmatpush1.msra.mxu0 %v781
        %855 = vmatprep.subr.mxu0 0.0
        %856 = vmatpush1.msra.mxu0 %v780
        %857 = vmatprep.subr.mxu0 0.0
        %858 = vmatpush1.msra.mxu0 %v779
        %859 = vmatprep.subr.mxu0 0.0
        %860 = vmatpush1.msra.mxu0 %v778
        %861 = vmatprep.subr.mxu0 0.0
        %862 = vmatpush1.msra.mxu0 %v777
        %863 = vmatprep.subr.mxu0 0.0
        %864 = vmatpush1.msra.mxu0 %v776
        %865 = vmatprep.subr.mxu0 0.0
        %866 = vmatpush2.msra.mxu0 %v807
        %867 = vmatprep.subr.mxu0 0.0
        %868 = vmatpush2.msra.mxu0 %v806
        %869 = vmatprep.subr.mxu0 0.0
        %870 = vmatpush2.msra.mxu0 %v805
        %871 = vmatprep.subr.mxu0 0.0
        %872 = vmatpush2.msra.mxu0 %v804
        %873 = vmatprep.subr.mxu0 0.0
        %874 = vmatpush2.msra.mxu0 %v803
        %875 = vmatprep.subr.mxu0 0.0
        %876 = vmatpush2.msra.mxu0 %v802
        %877 = vmatprep.subr.mxu0 0.0
        %878 = vmatpush2.msra.mxu0 %v801
        %879 = vmatprep.subr.mxu0 0.0
        %880 = vmatpush2.msra.mxu0 %v800
        %881 = vmatprep.subr.mxu0 0.0
        %882 = vmatpush2.msra.mxu0 %v799
        %883 = vmatprep.subr.mxu0 0.0
        %884 = vmatpush2.msra.mxu0 %v798
        %885 = vmatprep.subr.mxu0 0.0
        %886 = vmatpush2.msra.mxu0 %v797
        %887 = vmatprep.subr.mxu0 0.0
        %888 = vmatpush2.msra.mxu0 %v796
        %889 = vmatprep.subr.mxu0 0.0
        %890 = vmatpush2.msra.mxu0 %v795
        %891 = vmatprep.subr.mxu0 0.0
        %892 = vmatpush2.msra.mxu0 %v794
        %893 = vmatprep.subr.mxu0 0.0
        %894 = vmatpush2.msra.mxu0 %v793
        %895 = vmatprep.subr.mxu0 0.0
        %896 = vmatpush2.msra.mxu0 %v792
        %897 = vmatprep.mubr.f32.mxu0 %v820
        %898 = vmatmul.mubr.f32.gmra.mxu0 %v819
        %v899 = vpop.f32.mrf.mxu0
        %v900 = vadd.f32 %v817, %v899
        %v901 = vpop.f32.mrf.mxu0
        %902 = vmatprep.mubr.f32.mxu0 %v823
        %903 = vmatmul.mubr.f32.gmra.mxu0 %v822
        %v904 = vpop.f32.mrf.mxu0
        %v905 = vadd.f32 %v817, %v904
        %v906 = vpop.f32.mrf.mxu0
        %907 = vdwg.mxu0
        %908 = vmatprep.subr.mxu0 0.0
        %909 = vmatpush1.msra.mxu0 0.0
        %910 = vmatprep.subr.mxu0 0.0
        %911 = vmatpush1.msra.mxu0 0.0
        %912 = vmatprep.subr.mxu0 0.0
        %913 = vmatpush1.msra.mxu0 0.0
        %914 = vmatprep.subr.mxu0 0.0
        %915 = vmatpush1.msra.mxu0 0.0
        %916 = vmatprep.subr.mxu0 0.0
        %917 = vmatpush1.msra.mxu0 0.0
        %918 = vmatprep.subr.mxu0 0.0
        %919 = vmatpush1.msra.mxu0 0.0
        %920 = vmatprep.subr.mxu0 0.0
        %921 = vmatpush1.msra.mxu0 0.0
        %922 = vmatprep.subr.mxu0 0.0
        %923 = vmatpush1.msra.mxu0 0.0
        %924 = vmatprep.subr.mxu0 0.0
        %925 = vmatpush1.msra.mxu0 0.0
        %926 = vmatprep.subr.mxu0 0.0
        %927 = vmatpush1.msra.mxu0 0.0
        %928 = vmatprep.subr.mxu0 0.0
        %929 = vmatpush1.msra.mxu0 0.0
        %930 = vmatprep.subr.mxu0 0.0
        %931 = vmatpush1.msra.mxu0 0.0
        %932 = vmatprep.subr.mxu0 0.0
        %933 = vmatpush1.msra.mxu0 %v811
        %934 = vmatprep.subr.mxu0 0.0
        %935 = vmatpush1.msra.mxu0 %v810
        %936 = vmatprep.subr.mxu0 0.0
        %937 = vmatpush1.msra.mxu0 %v809
        %938 = vmatprep.subr.mxu0 0.0
        %939 = vmatpush1.msra.mxu0 %v808
        %940 = vmatprep.subr.mxu0 0.0
        %941 = vmatpush2.msra.mxu0 0.0
        %942 = vmatprep.subr.mxu0 0.0
        %943 = vmatpush2.msra.mxu0 0.0
        %944 = vmatprep.subr.mxu0 0.0
        %945 = vmatpush2.msra.mxu0 0.0
        %946 = vmatprep.subr.mxu0 0.0
        %947 = vmatpush2.msra.mxu0 0.0
        %948 = vmatprep.subr.mxu0 0.0
        %949 = vmatpush2.msra.mxu0 0.0
        %950 = vmatprep.subr.mxu0 0.0
        %951 = vmatpush2.msra.mxu0 0.0
        %952 = vmatprep.subr.mxu0 0.0
        %953 = vmatpush2.msra.mxu0 0.0
        %954 = vmatprep.subr.mxu0 0.0
        %955 = vmatpush2.msra.mxu0 0.0
        %956 = vmatprep.subr.mxu0 0.0
        %957 = vmatpush2.msra.mxu0 0.0
        %958 = vmatprep.subr.mxu0 0.0
        %959 = vmatpush2.msra.mxu0 0.0
        %960 = vmatprep.subr.mxu0 0.0
        %961 = vmatpush2.msra.mxu0 0.0
        %962 = vmatprep.subr.mxu0 0.0
        %963 = vmatpush2.msra.mxu0 0.0
        %964 = vmatprep.subr.mxu0 0.0
        %965 = vmatpush2.msra.mxu0 0.0
        %966 = vmatprep.subr.mxu0 0.0
        %967 = vmatpush2.msra.mxu0 0.0
        %968 = vmatprep.subr.mxu0 0.0
        %969 = vmatpush2.msra.mxu0 0.0
        %970 = vmatprep.subr.mxu0 0.0
        %971 = vmatpush2.msra.mxu0 0.0
        %972 = vmatprep.mubr.f32.mxu0 0.0
        %973 = vmatmul.mubr.f32.gmra.mxu0 %v829
        %v974 = vpop.f32.mrf.mxu0
        %v975 = vadd.f32 %v900, %v974
        %v976 = vpop.f32.mrf.mxu0
        %977 = vmatprep.mubr.f32.mxu0 0.0
        %978 = vmatmul.mubr.f32.gmra.mxu0 %v831
        %v979 = vpop.f32.mrf.mxu0
        %v980 = vadd.f32 %v905, %v979
        %v981 = vpop.f32.mrf.mxu0
        %982 = vdwg.mxu0
        %vm983 = vcmp.ge.f32.partialorder %v975, 0.0
        %vm984 = vcmp.ge.f32.partialorder %v980, 0.0
        %v985 = vmul.f32 %v975, 0.01
        %v986 = vmul.f32 %v980, 0.01
        %v987 = vsel %vm983, %v975, %v985
        %v988 = vsel %vm984, %v980, %v986
        %v989 = vld [vmem:[%s5] sm:$0xff]
        %v990 = vld [vmem:[%s5 + $0x8] sm:$0xff]
        %v991 = vld [vmem:[%s5 + $0x10] sm:$0xff]
        %v992 = vld [vmem:[%s5 + $0x18] sm:$0xff]
        %v993 = vld [vmem:[%s6] sm:$0xff]
        %v994 = vld [vmem:[%s6 + $0x8] sm:$0xff]
        %v995 = vld [vmem:[%s6 + $0x10] sm:$0xff]
        %v996 = vld [vmem:[%s6 + $0x18] sm:$0xff]
        %v1001 = vcombine.low %v332, %v339
        %v1002 = vcombine.low %v346, %v353
        %v1003 = vsel %vm389, %v1001, 0
        %v1005 = vsel %vm389, %v1002, 0
        %1007 = vmatprep.subr.mxu0 0.0
        %1008 = vmatpush1.msra.mxu0 0.0
        %1009 = vmatprep.subr.mxu0 0.0
        %1010 = vmatpush1.msra.mxu0 0.0
        %1011 = vmatprep.subr.mxu0 0.0
        %1012 = vmatpush1.msra.mxu0 0.0
        %1013 = vmatprep.subr.mxu0 0.0
        %1014 = vmatpush1.msra.mxu0 0.0
        %1015 = vmatprep.subr.mxu0 0.0
        %1016 = vmatpush1.msra.mxu0 0.0
        %1017 = vmatprep.subr.mxu0 0.0
        %1018 = vmatpush1.msra.mxu0 0.0
        %1019 = vmatprep.subr.mxu0 0.0
        %1020 = vmatpush1.msra.mxu0 0.0
        %1021 = vmatprep.subr.mxu0 0.0
        %1022 = vmatpush1.msra.mxu0 0.0
        %1023 = vmatprep.subr.mxu0 0.0
        %1024 = vmatpush1.msra.mxu0 0.0
        %1025 = vmatprep.subr.mxu0 0.0
        %1026 = vmatpush1.msra.mxu0 0.0
        %1027 = vmatprep.subr.mxu0 0.0
        %1028 = vmatpush1.msra.mxu0 0.0
        %1029 = vmatprep.subr.mxu0 0.0
        %1030 = vmatpush1.msra.mxu0 0.0
        %1031 = vmatprep.subr.mxu0 0.0
        %1032 = vmatpush1.msra.mxu0 %v996
        %1033 = vmatprep.subr.mxu0 0.0
        %1034 = vmatpush1.msra.mxu0 %v995
        %1035 = vmatprep.subr.mxu0 0.0
        %1036 = vmatpush1.msra.mxu0 %v994
        %1037 = vmatprep.subr.mxu0 0.0
        %1038 = vmatpush1.msra.mxu0 %v993
        %1039 = vmatprep.subr.mxu0 0.0
        %1040 = vmatpush2.msra.mxu0 0.0
        %1041 = vmatprep.subr.mxu0 0.0
        %1042 = vmatpush2.msra.mxu0 0.0
        %1043 = vmatprep.subr.mxu0 0.0
        %1044 = vmatpush2.msra.mxu0 0.0
        %1045 = vmatprep.subr.mxu0 0.0
        %1046 = vmatpush2.msra.mxu0 0.0
        %1047 = vmatprep.subr.mxu0 0.0
        %1048 = vmatpush2.msra.mxu0 0.0
        %1049 = vmatprep.subr.mxu0 0.0
        %1050 = vmatpush2.msra.mxu0 0.0
        %1051 = vmatprep.subr.mxu0 0.0
        %1052 = vmatpush2.msra.mxu0 0.0
        %1053 = vmatprep.subr.mxu0 0.0
        %1054 = vmatpush2.msra.mxu0 0.0
        %1055 = vmatprep.subr.mxu0 0.0
        %1056 = vmatpush2.msra.mxu0 0.0
        %1057 = vmatprep.subr.mxu0 0.0
        %1058 = vmatpush2.msra.mxu0 0.0
        %1059 = vmatprep.subr.mxu0 0.0
        %1060 = vmatpush2.msra.mxu0 0.0
        %1061 = vmatprep.subr.mxu0 0.0
        %1062 = vmatpush2.msra.mxu0 0.0
        %1063 = vmatprep.subr.mxu0 0.0
        %1064 = vmatpush2.msra.mxu0 0.0
        %1065 = vmatprep.subr.mxu0 0.0
        %1066 = vmatpush2.msra.mxu0 0.0
        %1067 = vmatprep.subr.mxu0 0.0
        %1068 = vmatpush2.msra.mxu0 0.0
        %1069 = vmatprep.subr.mxu0 0.0
        %1070 = vmatpush2.msra.mxu0 0.0
        %1071 = vmatprep.mubr.f32.mxu0 0.0
        %1072 = vmatmul.mubr.f32.gmra.mxu0 %v1003
        %v1073 = vpop.f32.mrf.mxu0
        %v1074 = vadd.f32 0.0, %v1073
        %v1075 = vpop.f32.mrf.mxu0
        %1076 = vmatprep.mubr.f32.mxu0 0.0
        %1077 = vmatmul.mubr.f32.gmra.mxu0 %v1005
        %v1078 = vpop.f32.mrf.mxu0
        %v1079 = vadd.f32 0.0, %v1078
        %v1080 = vpop.f32.mrf.mxu0
        %1081 = vdwg.mxu0
        %v1083 = vsel %vm389, %v987, 0
        %v1086 = vsel %vm389, %v988, 0
        %1088 = vmatprep.subr.mxu0 0.0
        %1089 = vmatpush1.msra.mxu0 0.0
        %1090 = vmatprep.subr.mxu0 0.0
        %1091 = vmatpush1.msra.mxu0 0.0
        %1092 = vmatprep.subr.mxu0 0.0
        %1093 = vmatpush1.msra.mxu0 0.0
        %1094 = vmatprep.subr.mxu0 0.0
        %1095 = vmatpush1.msra.mxu0 0.0
        %1096 = vmatprep.subr.mxu0 0.0
        %1097 = vmatpush1.msra.mxu0 0.0
        %1098 = vmatprep.subr.mxu0 0.0
        %1099 = vmatpush1.msra.mxu0 0.0
        %1100 = vmatprep.subr.mxu0 0.0
        %1101 = vmatpush1.msra.mxu0 0.0
        %1102 = vmatprep.subr.mxu0 0.0
        %1103 = vmatpush1.msra.mxu0 0.0
        %1104 = vmatprep.subr.mxu0 0.0
        %1105 = vmatpush1.msra.mxu0 0.0
        %1106 = vmatprep.subr.mxu0 0.0
        %1107 = vmatpush1.msra.mxu0 0.0
        %1108 = vmatprep.subr.mxu0 0.0
        %1109 = vmatpush1.msra.mxu0 0.0
        %1110 = vmatprep.subr.mxu0 0.0
        %1111 = vmatpush1.msra.mxu0 0.0
        %1112 = vmatprep.subr.mxu0 0.0
        %1113 = vmatpush1.msra.mxu0 %v992
        %1114 = vmatprep.subr.mxu0 0.0
        %1115 = vmatpush1.msra.mxu0 %v991
        %1116 = vmatprep.subr.mxu0 0.0
        %1117 = vmatpush1.msra.mxu0 %v990
        %1118 = vmatprep.subr.mxu0 0.0
        %1119 = vmatpush1.msra.mxu0 %v989
        %1120 = vmatprep.subr.mxu0 0.0
        %1121 = vmatpush2.msra.mxu0 0.0
        %1122 = vmatprep.subr.mxu0 0.0
        %1123 = vmatpush2.msra.mxu0 0.0
        %1124 = vmatprep.subr.mxu0 0.0
        %1125 = vmatpush2.msra.mxu0 0.0
        %1126 = vmatprep.subr.mxu0 0.0
        %1127 = vmatpush2.msra.mxu0 0.0
        %1128 = vmatprep.subr.mxu0 0.0
        %1129 = vmatpush2.msra.mxu0 0.0
        %1130 = vmatprep.subr.mxu0 0.0
        %1131 = vmatpush2.msra.mxu0 0.0
        %1132 = vmatprep.subr.mxu0 0.0
        %1133 = vmatpush2.msra.mxu0 0.0
        %1134 = vmatprep.subr.mxu0 0.0
        %1135 = vmatpush2.msra.mxu0 0.0
        %1136 = vmatprep.subr.mxu0 0.0
        %1137 = vmatpush2.msra.mxu0 0.0
        %1138 = vmatprep.subr.mxu0 0.0
        %1139 = vmatpush2.msra.mxu0 0.0
        %1140 = vmatprep.subr.mxu0 0.0
        %1141 = vmatpush2.msra.mxu0 0.0
        %1142 = vmatprep.subr.mxu0 0.0
        %1143 = vmatpush2.msra.mxu0 0.0
        %1144 = vmatprep.subr.mxu0 0.0
        %1145 = vmatpush2.msra.mxu0 0.0
        %1146 = vmatprep.subr.mxu0 0.0
        %1147 = vmatpush2.msra.mxu0 0.0
        %1148 = vmatprep.subr.mxu0 0.0
        %1149 = vmatpush2.msra.mxu0 0.0
        %1150 = vmatprep.subr.mxu0 0.0
        %1151 = vmatpush2.msra.mxu0 0.0
        %1152 = vmatprep.mubr.f32.mxu0 0.0
        %1153 = vmatmul.mubr.f32.gmra.mxu0 %v1083
        %v1154 = vpop.f32.mrf.mxu0
        %v1155 = vadd.f32 %v1074, %v1154
        %v1156 = vpop.f32.mrf.mxu0
        %1157 = vmatprep.mubr.f32.mxu0 0.0
        %1158 = vmatmul.mubr.f32.gmra.mxu0 %v1086
        %v1159 = vpop.f32.mrf.mxu0
        %v1160 = vadd.f32 %v1079, %v1159
        %v1161 = vpop.f32.mrf.mxu0
        %1162 = vdwg.mxu0
        %v1163 = vld [vmem:[%s7] sm:$0x1]
        %v1165 = vlaneseq
        %v1166 = vshrl.u32 %v1165, 7
        %v1167 = vsub.s32 0, %v1166
        %v1168 = vrot.slane %v1163, %v1167
        %v1170 = vadd.f32 %v1155, %v1168
        %v1171 = vadd.f32 %v1160, %v1168
        %v1174 = vcombine.high %v1170, %v1170
        %v1175 = vcombine.high %v1171, %v1171
        %vm1178 = vcmask 519168
        %1179 = vst.msk [vmem:[%s301] sm:$0xf] %vm1178, %v1170
        %1180 = vst.msk [vmem:[%s301 + $0x4] sm:$0xf] %vm1178, %v1174
        %1181 = vst.msk [vmem:[%s301 + $0x8] sm:$0xf] %vm1178, %v1171
        %1182 = vst.msk [vmem:[%s301 + $0xc] sm:$0xf] %vm1178, %v1175
        %s1183 = sand.u32 %s203, 1
        %s1184 = scalar_lea.sflag [#allocation4], %s1183
        %s1185 = sand.u32 %s203, 1
        %s1186 = smul.addr %s1185, 16
        %s1187 = scalar_lea.vmem [#allocation3], %s1186
        // Predicated region
        $region53: #{stem_forward.3} parent=51 // pred_check
          %p1188 = pneg %p213
        $region54: #{stem_forward.3} parent=51 // pred_check_branch
          %1190 = sbr.rel (%p1188) target = $region56
        $region55: #{stem_forward.3} parent=51 // pred_region
          %s1192 = ssub.s32 256, 256
          %1193 = vsyncadd %s1184, %s1192
          %s1194 = smul.addr %s22, 4
          %s1195 = smul.addr %s1194, 64
          %s1196 = scalar_lea.hbm %s8, %s1195
          %s1197 = sshll.u32 %s1187, 4
          %s1198 = int_to_ptr.vmem [resolvable:$true] %s1197
          %1203 = dma.vmem_to_hbm [thread:$0]  %s1198, 256, %s1196, %s1184, 64, 64, 4
        $region56: #{stem_forward.3} parent=51 // pred_fallthru
          _
      $region52: #{stem_forward.3} parent=5 // pred_fallthru
        _
      %p1204 = scmp.le.s32.totalorder 2, %s17
      // Predicated region
      $region57: #{stem_forward.3} parent=5 // pred_check
        %p1205 = pneg %p1204
      $region58: #{stem_forward.3} parent=5 // pred_check_branch
        %1207 = sbr.rel (%p1205) target = $region60
      $region59: #{stem_forward.3} parent=5 // pred_region
        %s1208 = ssub.s32 %s17, 2
        // Predicated region
        $region61: #{stem_forward.3} parent=59 // pred_check
          %p1209 = pneg %p219
        $region62: #{stem_forward.3} parent=59 // pred_check_branch
          %1211 = sbr.rel (%p1209) target = $region64
        $region63: #{stem_forward.3} parent=59 // pred_region
          %s1212 = sand.u32 %s204, 1
          %s1213 = scalar_lea.sflag [#allocation4], %s1212
          %s1214 = sand.u32 %s204, 1
          %s1215 = smul.addr %s1214, 16
          %s1216 = scalar_lea.vmem [#allocation3], %s1215
          %1217 = dma.done %s1213, 256
        $region64: #{stem_forward.3} parent=59 // pred_fallthru
          _
      $region60: #{stem_forward.3} parent=5 // pred_fallthru
        _
    $region6: #{stem_forward.3} parent=1 // loop_footer
      %s21 = sadd.s32 1, %s17
    $region7: #{stem_forward.3} parent=1 // loop_footer_branch
      %16 = sbr.rel target = $region3
    $region8: #{stem_forward.3} parent=1 // loop_exit
      _
    %1218 = vsyncpa [#allocation4], 1
    %s1219 = scalar_lea.sflag [#allocation4], 1
    %1220 = vsyncpa %s1219, 1

// kernel: stem_forward.2
$region0: #{stem_forward.2}
  #allocation0 [shape = 'u32[]', space=smem, size = 0x4, offset = 0x4, fixed_abs, tag = 'smem constant byte address 0x4 - core index']
  #allocation1 [shape = 'u32[144,128]{1,0:T(1,128)}', space=vmem, size = 0x12000, scoped, tag = 'internal scratch']
  #allocation2 [shape = 'f32[14,14,32]{2,1,0:T(8,128)}', space=vmem, size = 0x1c000, scoped, tag = 'scratch operand']
  %s0 = inlined_call_operand.vmem [shape: f32[8,9,9,3], index: 0, kind: input, shape index: {}]
  %s1 = inlined_call_operand.vmem [shape: f32[27,32], index: 1, kind: input, shape index: {}]
  %s2 = inlined_call_operand.vmem [shape: f32[1,32], index: 2, kind: input, shape index: {}]
  %s3 = inlined_call_operand.vmem [shape: f32[49,32], index: 3, kind: input, shape index: {}]
  %s4 = inlined_call_operand.vmem [shape: f32[1,32], index: 4, kind: input, shape index: {}]
  %s5 = inlined_call_operand.vmem [shape: f32[2,8,8,32], index: 5, kind: output, shape index: {}]
  %s6 = sld [smem:[#allocation0]]
  $region53: #{stem_forward.2} parent=0
    _
  %s8 = ssub.s32 1, %s6
  %s9 = scalar_select 0, %s8, %s6
  loop: start=0, step=1, limit=4
  $region2: #{stem_forward.2} parent=0 // loop_pre_header
    _
  $region3: #{stem_forward.2} parent=0 // loop_header
    %s11 = sphi 0, %s15
    %p12 = scmp.ge.s32.totalorder %s11, 4
    %s21 = sphi 0, %s23
    %s24 = sphi 0, %s21
    %s25 = sphi 0, %s24
    %s41 = sphi 0, %s25
    %s45 = sphi 0, %s45
    %s47 = sphi 0, %s45
    %s48 = sphi 0, %s47
    %s62 = sphi 0, %s48
    %s66 = sphi 0, %s66
    %s68 = sphi 0, %s66
    %s69 = sphi 0, %s68
    %s83 = sphi 0, %s69
    %s87 = sphi 0, %s87
    %s89 = sphi 0, %s87
    %s90 = sphi 0, %s89
    %s104 = sphi 0, %s90
    %s108 = sphi 0, %s108
    %s110 = sphi 0, %s108
    %s111 = sphi 0, %s110
    %s125 = sphi 0, %s111
    %s131 = sphi 0, %s133
    %s134 = sphi 0, %s131
    %s135 = sphi 0, %s134
    %s151 = sphi 0, %s135
  $region4: #{stem_forward.2} parent=0 // loop_header_branch
    %14 = sbr.rel (%p12) target = $region8
  $region5: #{stem_forward.2} parent=0 // loop_body
    %s16 = ssub.s32 %s11, 1
    %s17 = ssub.s32 %s11, 2
    %s18 = sadd.s32 %s11, 1
    %s19 = ssub.s32 %s11, %s18
    %p20 = scmp.eq.s32.totalorder %s19, 0
    %s22 = sadd.s32 %s21, 1
    %s23 = scalar_select %p20, %s21, %s22
    %p26 = pneg %p20
    %p27 = scmp.eq.s32.totalorder %s11, 1
    %p28 = por %p26, %p27
    %p29 = scmp.ne.s32.totalorder %s21, %s24
    %p30 = scmp.eq.s32.totalorder %s11, 0
    %p31 = por %p29, %p30
    %p32 = scmp.ne.s32.totalorder %s21, %s24
    %p33 = scmp.eq.s32.totalorder %s16, 1
    %p34 = por %p32, %p33
    %p35 = scmp.ne.s32.totalorder %s24, %s25
    %p36 = scmp.eq.s32.totalorder %s16, 0
    %p37 = por %p35, %p36
    %p38 = scmp.ne.s32.totalorder %s24, %s25
    %p39 = scmp.eq.s32.totalorder %s17, 1
    %p40 = por %p38, %p39
    %p42 = scmp.ne.s32.totalorder %s25, %s41
    %p43 = scmp.eq.s32.totalorder %s17, 0
    %p44 = por %p42, %p43
    %s46 = sadd.s32 %s45, 1
    %p49 = scmp.eq.s32.totalorder %s11, 1
    %p50 = scmp.ne.s32.totalorder %s45, %s47
    %p51 = scmp.eq.s32.totalorder %s11, 0
    %p52 = por %p50, %p51
    %p53 = scmp.ne.s32.totalorder %s45, %s47
    %p54 = scmp.eq.s32.totalorder %s16, 1
    %p55 = por %p53, %p54
    %p56 = scmp.ne.s32.totalorder %s47, %s48
    %p57 = scmp.eq.s32.totalorder %s16, 0
    %p58 = por %p56, %p57
    %p59 = scmp.ne.s32.totalorder %s47, %s48
    %p60 = scmp.eq.s32.totalorder %s17, 1
    %p61 = por %p59, %p60
    %p63 = scmp.ne.s32.totalorder %s48, %s62
    %p64 = scmp.eq.s32.totalorder %s17, 0
    %p65 = por %p63, %p64
    %s67 = sadd.s32 %s66, 1
    %p70 = scmp.eq.s32.totalorder %s11, 1
    %p71 = scmp.ne.s32.totalorder %s66, %s68
    %p72 = scmp.eq.s32.totalorder %s11, 0
    %p73 = por %p71, %p72
    %p74 = scmp.ne.s32.totalorder %s66, %s68
    %p75 = scmp.eq.s32.totalorder %s16, 1
    %p76 = por %p74, %p75
    %p77 = scmp.ne.s32.totalorder %s68, %s69
    %p78 = scmp.eq.s32.totalorder %s16, 0
    %p79 = por %p77, %p78
    %p80 = scmp.ne.s32.totalorder %s68, %s69
    %p81 = scmp.eq.s32.totalorder %s17, 1
    %p82 = por %p80, %p81
    %p84 = scmp.ne.s32.totalorder %s69, %s83
    %p85 = scmp.eq.s32.totalorder %s17, 0
    %p86 = por %p84, %p85
    %s88 = sadd.s32 %s87, 1
    %p91 = scmp.eq.s32.totalorder %s11, 1
    %p92 = scmp.ne.s32.totalorder %s87, %s89
    %p93 = scmp.eq.s32.totalorder %s11, 0
    %p94 = por %p92, %p93
    %p95 = scmp.ne.s32.totalorder %s87, %s89
    %p96 = scmp.eq.s32.totalorder %s16, 1
    %p97 = por %p95, %p96
    %p98 = scmp.ne.s32.totalorder %s89, %s90
    %p99 = scmp.eq.s32.totalorder %s16, 0
    %p100 = por %p98, %p99
    %p101 = scmp.ne.s32.totalorder %s89, %s90
    %p102 = scmp.eq.s32.totalorder %s17, 1
    %p103 = por %p101, %p102
    %p105 = scmp.ne.s32.totalorder %s90, %s104
    %p106 = scmp.eq.s32.totalorder %s17, 0
    %p107 = por %p105, %p106
    %s109 = sadd.s32 %s108, 1
    %p112 = scmp.eq.s32.totalorder %s11, 1
    %p113 = scmp.ne.s32.totalorder %s108, %s110
    %p114 = scmp.eq.s32.totalorder %s11, 0
    %p115 = por %p113, %p114
    %p116 = scmp.ne.s32.totalorder %s108, %s110
    %p117 = scmp.eq.s32.totalorder %s16, 1
    %p118 = por %p116, %p117
    %p119 = scmp.ne.s32.totalorder %s110, %s111
    %p120 = scmp.eq.s32.totalorder %s16, 0
    %p121 = por %p119, %p120
    %p122 = scmp.ne.s32.totalorder %s110, %s111
    %p123 = scmp.eq.s32.totalorder %s17, 1
    %p124 = por %p122, %p123
    %p126 = scmp.ne.s32.totalorder %s111, %s125
    %p127 = scmp.eq.s32.totalorder %s17, 0
    %p128 = por %p126, %p127
    %s129 = ssub.s32 %s11, %s18
    %p130 = scmp.eq.s32.totalorder %s129, 0
    %s132 = sadd.s32 %s131, 1
    %s133 = scalar_select %p130, %s131, %s132
    %p136 = pneg %p130
    %p137 = scmp.eq.s32.totalorder %s11, 1
    %p138 = por %p136, %p137
    %p139 = scmp.ne.s32.totalorder %s131, %s134
    %p140 = scmp.eq.s32.totalorder %s11, 0
    %p141 = por %p139, %p140
    %p142 = scmp.ne.s32.totalorder %s131, %s134
    %p143 = scmp.eq.s32.totalorder %s16, 1
    %p144 = por %p142, %p143
    %p145 = scmp.ne.s32.totalorder %s134, %s135
    %p146 = scmp.eq.s32.totalorder %s16, 0
    %p147 = por %p145, %p146
    %p148 = scmp.ne.s32.totalorder %s134, %s135
    %p149 = scmp.eq.s32.totalorder %s17, 1
    %p150 = por %p148, %p149
    %p152 = scmp.ne.s32.totalorder %s135, %s151
    %p153 = scmp.eq.s32.totalorder %s17, 0
    %p154 = por %p152, %p153
    %p155 = scmp.le.s32.totalorder 1, %s11
    %p156 = scmp.lt.s32.totalorder %s11, 3
    %p157 = pnand %p155, %p156
    %p158 = pneg %p157
    // Predicated region
    $region9: #{stem_forward.2} parent=5 // pred_check
      _
    $region10: #{stem_forward.2} parent=5 // pred_check_branch
      %160 = sbr.rel (%p157) target = $region12
    $region11: #{stem_forward.2} parent=5 // pred_region
      %s161 = ssub.s32 %s11, 1
      // Predicated region
      $region13: #{stem_forward.2} parent=11 // pred_check
        %p162 = pneg %p58
      $region14: #{stem_forward.2} parent=11 // pred_check_branch
        %164 = sbr.rel (%p162) target = $region16
      $region15: #{stem_forward.2} parent=11 // pred_region
        _
      $region16: #{stem_forward.2} parent=11 // pred_fallthru
        _
      // Predicated region
      $region17: #{stem_forward.2} parent=11 // pred_check
        %p165 = pneg %p79
      $region18: #{stem_forward.2} parent=11 // pred_check_branch
        %167 = sbr.rel (%p165) target = $region20
      $region19: #{stem_forward.2} parent=11 // pred_region
        _
      $region20: #{stem_forward.2} parent=11 // pred_fallthru
        _
      // Predicated region
      $region21: #{stem_forward.2} parent=11 // pred_check
        %p168 = pneg %p100
      $region22: #{stem_forward.2} parent=11 // pred_check_branch
        %170 = sbr.rel (%p168) target = $region24
      $region23: #{stem_forward.2} parent=11 // pred_region
        _
      $region24: #{stem_forward.2} parent=11 // pred_fallthru
        _
      // Predicated region
      $region25: #{stem_forward.2} parent=11 // pred_check
        %p171 = pneg %p121
      $region26: #{stem_forward.2} parent=11 // pred_check_branch
        %173 = sbr.rel (%p171) target = $region28
      $region27: #{stem_forward.2} parent=11 // pred_region
        _
      $region28: #{stem_forward.2} parent=11 // pred_fallthru
        _
    $region12: #{stem_forward.2} parent=5 // pred_fallthru
      _
    %p174 = scmp.lt.s32.totalorder %s11, 2
    // Predicated region
    $region29: #{stem_forward.2} parent=5 // pred_check
      %p175 = pneg %p174
    $region30: #{stem_forward.2} parent=5 // pred_check_branch
      %177 = sbr.rel (%p175) target = $region32
    $region31: #{stem_forward.2} parent=5 // pred_region
      // Predicated region
      $region33: #{stem_forward.2} parent=31 // pred_check
        %p178 = pneg %p31
      $region34: #{stem_forward.2} parent=31 // pred_check_branch
        %180 = sbr.rel (%p178) target = $region36
      $region35: #{stem_forward.2} parent=31 // pred_region
        %s181 = smul.u32 4, %s11
        %p182 = scmp.lt.s32.totalorder %s181, 7
        %s183 = scalar_select %p182, %s181, 7
        %s184 = smul.addr %s183, 18
        %s185 = smul.addr %s184, 8
        %s186 = scalar_lea.vmem %s0, %s185
        %s187 = smul.u32 4, %s11
      $region36: #{stem_forward.2} parent=31 // pred_fallthru
        _
    $region32: #{stem_forward.2} parent=5 // pred_fallthru
      _
    %p188 = scmp.le.s32.totalorder 1, %s11
    %p189 = scmp.lt.s32.totalorder %s11, 3
    %p190 = pnand %p188, %p189
    %p191 = pneg %p190
    // Predicated region
    $region37: #{stem_forward.2} parent=5 // pred_check
      _
    $region38: #{stem_forward.2} parent=5 // pred_check_branch
      %193 = sbr.rel (%p190) target = $region40
    $region39: #{stem_forward.2} parent=5 // pred_region
      %s194 = ssub.s32 %s11, 1
      %s195 = smul.u32 4, %s16
      %p196 = scmp.lt.s32.totalorder %s195, 7
      %s197 = scalar_select %p196, %s195, 7
      %s198 = smul.addr %s197, 18
      %s199 = smul.addr %s198, 8
      %s200 = scalar_lea.vmem %s0, %s199
      %p201 = pneg %p37
      %p202 = pneg %p34
      %p203 = pneg %p58
      %p204 = pneg %p55
      %p205 = pneg %p79
      %p206 = pneg %p76
      %p207 = pneg %p100
      %p208 = pneg %p97
      %p209 = pneg %p121
      %p210 = pneg %p118
      %p211 = pneg %p147
      %p212 = pneg %p144
      %p213 = scmp.lt.s32.totalorder %s16, 1
      %s214 = scalar_select %p213, %s16, 1
      %s215 = smul.addr %s214, 8
      %s216 = smul.addr %s215, 8
      %s217 = scalar_lea.vmem %s5, %s216
      %s218 = smul.u32 4, %s16
      %p219 = scmp.lt.s32.totalorder %s218, 7
      %s220 = scalar_select %p219, %s218, 7
      %s221 = smul.addr %s220, 18
      %s222 = smul.addr %s221, 8
      %s223 = scalar_lea.vmem %s0, %s222
      %s224 = smul.u32 4, %s16
      %p225 = scmp.lt.s32.totalorder %s16, 1
      %s226 = scalar_select %p225, %s16, 1
      %s227 = smul.addr %s226, 8
      %s228 = smul.addr %s227, 8
      %s229 = scalar_lea.vmem %s5, %s228
      %v230 = vld [vmem:[%s223] sm:$0xff]
      %v231 = vld [vmem:[%s223 + $0x10] sm:$0xff]
      %v232 = vld [vmem:[%s223 + $0x20] sm:$0xff]
      %v233 = vld [vmem:[%s223 + $0x30] sm:$0xff]
      %v234 = vld [vmem:[%s223 + $0x40] sm:$0xff]
      %v235 = vld [vmem:[%s223 + $0x50] sm:$0xff]
      %v236 = vld [vmem:[%s223 + $0x60] sm:$0xff]
      %v237 = vld [vmem:[%s223 + $0x70] sm:$0xff]
      %s238 = scalar_lea.vmem %s223, 144
      %v239 = vld [vmem:[%s238] sm:$0xff]
      %v240 = vld [vmem:[%s238 + $0x10] sm:$0xff]
      %v241 = vld [vmem:[%s238 + $0x20] sm:$0xff]
      %v242 = vld [vmem:[%s238 + $0x30] sm:$0xff]
      %v243 = vld [vmem:[%s238 + $0x40] sm:$0xff]
      %v244 = vld [vmem:[%s238 + $0x50] sm:$0xff]
      %v245 = vld [vmem:[%s238 + $0x60] sm:$0xff]
      %v246 = vld [vmem:[%s238 + $0x70] sm:$0xff]
      %v247 = vld [vmem:[%s223 + $0x1] sm:$0xff]
      %v248 = vld [vmem:[%s223 + $0x11] sm:$0xff]
      %v249 = vld [vmem:[%s223 + $0x21] sm:$0xff]
      %v250 = vld [vmem:[%s223 + $0x31] sm:$0xff]
      %v251 = vld [vmem:[%s223 + $0x41] sm:$0xff]
      %v252 = vld [vmem:[%s223 + $0x51] sm:$0xff]
      %v253 = vld [vmem:[%s223 + $0x61] sm:$0xff]
      %v254 = vld [vmem:[%s223 + $0x71] sm:$0xff]
      %s255 = scalar_lea.vmem %s223, 288
      %v256 = vld [vmem:[%s255] sm:$0xff]
      %v257 = vld [vmem:[%s255 + $0x10] sm:$0xff]
      %v258 = vld [vmem:[%s255 + $0x20] sm:$0xff]
      %v259 = vld [vmem:[%s255 + $0x30] sm:$0xff]
      %v260 = vld [vmem:[%s255 + $0x40] sm:$0xff]
      %v261 = vld [vmem:[%s255 + $0x50] sm:$0xff]
      %v262 = vld [vmem:[%s255 + $0x60] sm:$0xff]
      %v263 = vld [vmem:[%s255 + $0x70] sm:$0xff]
      %s264 = scalar_lea.vmem %s223, 432
      %v265 = vld [vmem:[%s264] sm:$0xff]
      %v266 = vld [vmem:[%s264 + $0x10] sm:$0xff]
      %v267 = vld [vmem:[%s264 + $0x20] sm:$0xff]
      %v268 = vld [vmem:[%s264 + $0x30] sm:$0xff]
      %v269 = vld [vmem:[%s264 + $0x40] sm:$0xff]
      %v270 = vld [vmem:[%s264 + $0x50] sm:$0xff]
      %v271 = vld [vmem:[%s264 + $0x60] sm:$0xff]
      %v272 = vld [vmem:[%s264 + $0x70] sm:$0xff]
      %v273 = vld [vmem:[%s255 + $0x1] sm:$0xff]
      %v274 = vld [vmem:[%s255 + $0x11] sm:$0xff]
      %v275 = vld [vmem:[%s255 + $0x21] sm:$0xff]
      %v276 = vld [vmem:[%s255 + $0x31] sm:$0xff]
      %v277 = vld [vmem:[%s255 + $0x41] sm:$0xff]
      %v278 = vld [vmem:[%s255 + $0x51] sm:$0xff]
      %v279 = vld [vmem:[%s255 + $0x61] sm:$0xff]
      %v280 = vld [vmem:[%s255 + $0x71] sm:$0xff]
      %s281 = scalar_lea.vmem %s223, 16
      %v282 = vld [vmem:[%s281] sm:$0xff]
      %v283 = vld [vmem:[%s281 + $0x10] sm:$0xff]
      %v284 = vld [vmem:[%s281 + $0x20] sm:$0xff]
      %v285 = vld [vmem:[%s281 + $0x30] sm:$0xff]
      %v286 = vld [vmem:[%s281 + $0x40] sm:$0xff]
      %v287 = vld [vmem:[%s281 + $0x50] sm:$0xff]
      %v288 = vld [vmem:[%s281 + $0x60] sm:$0xff]
      %v289 = vld [vmem:[%s281 + $0x70] sm:$0xff]
      %s290 = scalar_lea.vmem %s223, 160
      %v291 = vld [vmem:[%s290] sm:$0xff]
      %v292 = vld [vmem:[%s290 + $0x10] sm:$0xff]
      %v293 = vld [vmem:[%s290 + $0x20] sm:$0xff]
      %v294 = vld [vmem:[%s290 + $0x30] sm:$0xff]
      %v295 = vld [vmem:[%s290 + $0x40] sm:$0xff]
      %v296 = vld [vmem:[%s290 + $0x50] sm:$0xff]
      %v297 = vld [vmem:[%s290 + $0x60] sm:$0xff]
      %v298 = vld [vmem:[%s290 + $0x70] sm:$0xff]
      %v299 = vld [vmem:[%s281 + $0x1] sm:$0xff]
      %v300 = vld [vmem:[%s281 + $0x11] sm:$0xff]
      %v301 = vld [vmem:[%s281 + $0x21] sm:$0xff]
      %v302 = vld [vmem:[%s281 + $0x31] sm:$0xff]
      %v303 = vld [vmem:[%s281 + $0x41] sm:$0xff]
      %v304 = vld [vmem:[%s281 + $0x51] sm:$0xff]
      %v305 = vld [vmem:[%s281 + $0x61] sm:$0xff]
      %v306 = vld [vmem:[%s281 + $0x71] sm:$0xff]
      %315 = vrot.lane.b32.xlu0 %v239, 3
      %v316 = vpop.permute.xlu0 %315
      %317 = vrot.lane.b32.xlu0 %v240, 3
      %v318 = vpop.permute.xlu0 %317
      %319 = vrot.lane.b32.xlu0 %v241, 3
      %v320 = vpop.permute.xlu0 %319
      %321 = vrot.lane.b32.xlu0 %v242, 3
      %v322 = vpop.permute.xlu0 %321
      %323 = vrot.lane.b32.xlu0 %v243, 3
      %v324 = vpop.permute.xlu0 %323
      %325 = vrot.lane.b32.xlu0 %v244, 3
      %v326 = vpop.permute.xlu0 %325
      %327 = vrot.lane.b32.xlu0 %v245, 3
      %v328 = vpop.permute.xlu0 %327
      %329 = vrot.lane.b32.xlu0 %v246, 3
      %v330 = vpop.permute.xlu0 %329
      %347 = vrot.lane.b32.xlu0 %v247, 6
      %v348 = vpop.permute.xlu0 %347
      %349 = vrot.lane.b32.xlu0 %v248, 6
      %v350 = vpop.permute.xlu0 %349
      %351 = vrot.lane.b32.xlu0 %v249, 6
      %v352 = vpop.permute.xlu0 %351
      %353 = vrot.lane.b32.xlu0 %v250, 6
      %v354 = vpop.permute.xlu0 %353
      %355 = vrot.lane.b32.xlu0 %v251, 6
      %v356 = vpop.permute.xlu0 %355
      %357 = vrot.lane.b32.xlu0 %v252, 6
      %v358 = vpop.permute.xlu0 %357
      %359 = vrot.lane.b32.xlu0 %v253, 6
      %v360 = vpop.permute.xlu0 %359
      %361 = vrot.lane.b32.xlu0 %v254, 6
      %v362 = vpop.permute.xlu0 %361
      %379 = vrot.lane.b32.xlu0 %v256, 9
      %v380 = vpop.permute.xlu0 %379
      %381 = vrot.lane.b32.xlu0 %v257, 9
      %v382 = vpop.permute.xlu0 %381
      %383 = vrot.lane.b32.xlu0 %v258, 9
      %v384 = vpop.permute.xlu0 %383
      %385 = vrot.lane.b32.xlu0 %v259, 9
      %v386 = vpop.permute.xlu0 %385
      %387 = vrot.lane.b32.xlu0 %v260, 9
      %v388 = vpop.permute.xlu0 %387
      %389 = vrot.lane.b32.xlu0 %v261, 9
      %v390 = vpop.permute.xlu0 %389
      %391 = vrot.lane.b32.xlu0 %v262, 9
      %v392 = vpop.permute.xlu0 %391
      %393 = vrot.lane.b32.xlu0 %v263, 9
      %v394 = vpop.permute.xlu0 %393
      %411 = vrot.lane.b32.xlu0 %v265, 12
      %v412 = vpop.permute.xlu0 %411
      %413 = vrot.lane.b32.xlu0 %v266, 12
      %v414 = vpop.permute.xlu0 %413
      %415 = vrot.lane.b32.xlu0 %v267, 12
      %v416 = vpop.permute.xlu0 %415
      %417 = vrot.lane.b32.xlu0 %v268, 12
      %v418 = vpop.permute.xlu0 %417
      %419 = vrot.lane.b32.xlu0 %v269, 12
      %v420 = vpop.permute.xlu0 %419
      %421 = vrot.lane.b32.xlu0 %v270, 12
      %v422 = vpop.permute.xlu0 %421
      %423 = vrot.lane.b32.xlu0 %v271, 12
      %v424 = vpop.permute.xlu0 %423
      %425 = vrot.lane.b32.xlu0 %v272, 12
      %v426 = vpop.permute.xlu0 %425
      %443 = vrot.lane.b32.xlu0 %v273, 15
      %v444 = vpop.permute.xlu0 %443
      %445 = vrot.lane.b32.xlu0 %v274, 15
      %v446 = vpop.permute.xlu0 %445
      %447 = vrot.lane.b32.xlu0 %v275, 15
      %v448 = vpop.permute.xlu0 %447
      %449 = vrot.lane.b32.xlu0 %v276, 15
      %v450 = vpop.permute.xlu0 %449
      %451 = vrot.lane.b32.xlu0 %v277, 15
      %v452 = vpop.permute.xlu0 %451
      %453 = vrot.lane.b32.xlu0 %v278, 15
      %v454 = vpop.permute.xlu0 %453
      %455 = vrot.lane.b32.xlu0 %v279, 15
      %v456 = vpop.permute.xlu0 %455
      %457 = vrot.lane.b32.xlu0 %v280, 15
      %v458 = vpop.permute.xlu0 %457
      %475 = vrot.lane.b32.xlu0 %v282, 18
      %v476 = vpop.permute.xlu0 %475
      %477 = vrot.lane.b32.xlu0 %v283, 18
      %v478 = vpop.permute.xlu0 %477
      %479 = vrot.lane.b32.xlu0 %v284, 18
      %v480 = vpop.permute.xlu0 %479
      %481 = vrot.lane.b32.xlu0 %v285, 18
      %v482 = vpop.permute.xlu0 %481
      %483 = vrot.lane.b32.xlu0 %v286, 18
      %v484 = vpop.permute.xlu0 %483
      %485 = vrot.lane.b32.xlu0 %v287, 18
      %v486 = vpop.permute.xlu0 %485
      %487 = vrot.lane.b32.xlu0 %v288, 18
      %v488 = vpop.permute.xlu0 %487
      %489 = vrot.lane.b32.xlu0 %v289, 18
      %v490 = vpop.permute.xlu0 %489
      %507 = vrot.lane.b32.xlu0 %v291, 21
      %v508 = vpop.permute.xlu0 %507
      %509 = vrot.lane.b32.xlu0 %v292, 21
      %v510 = vpop.permute.xlu0 %509
      %511 = vrot.lane.b32.xlu0 %v293, 21
      %v512 = vpop.permute.xlu0 %511
      %513 = vrot.lane.b32.xlu0 %v294, 21
      %v514 = vpop.permute.xlu0 %513
      %515 = vrot.lane.b32.xlu0 %v295, 21
      %v516 = vpop.permute.xlu0 %515
      %517 = vrot.lane.b32.xlu0 %v296, 21
      %v518 = vpop.permute.xlu0 %517
      %519 = vrot.lane.b32.xlu0 %v297, 21
      %v520 = vpop.permute.xlu0 %519
      %521 = vrot.lane.b32.xlu0 %v298, 21
      %v522 = vpop.permute.xlu0 %521
      %539 = vrot.lane.b32.xlu0 %v299, 24
      %v540 = vpop.permute.xlu0 %539
      %541 = vrot.lane.b32.xlu0 %v300, 24
      %v542 = vpop.permute.xlu0 %541
      %543 = vrot.lane.b32.xlu0 %v301, 24
      %v544 = vpop.permute.xlu0 %543
      %545 = vrot.lane.b32.xlu0 %v302, 24
      %v546 = vpop.permute.xlu0 %545
      %547 = vrot.lane.b32.xlu0 %v303, 24
      %v548 = vpop.permute.xlu0 %547
      %549 = vrot.lane.b32.xlu0 %v304, 24
      %v550 = vpop.permute.xlu0 %549
      %551 = vrot.lane.b32.xlu0 %v305, 24
      %v552 = vpop.permute.xlu0 %551
      %553 = vrot.lane.b32.xlu0 %v306, 24
      %v554 = vpop.permute.xlu0 %553
      %vm563 = vcmask 23552
      %v564 = vsel %vm563, %v230, %v316
      %v565 = vsel %vm563, %v231, %v318
      %v566 = vsel %vm563, %v232, %v320
      %v567 = vsel %vm563, %v233, %v322
      %v568 = vsel %vm563, %v234, %v324
      %v569 = vsel %vm563, %v235, %v326
      %v570 = vsel %vm563, %v236, %v328
      %v571 = vsel %vm563, %v237, %v330
      %vm572 = vcmask 48128
      %v573 = vsel %vm572, %v564, %v348
      %v574 = vsel %vm572, %v565, %v350
      %v575 = vsel %vm572, %v566, %v352
      %v576 = vsel %vm572, %v567, %v354
      %v577 = vsel %vm572, %v568, %v356
      %v578 = vsel %vm572, %v569, %v358
      %v579 = vsel %vm572, %v570, %v360
      %v580 = vsel %vm572, %v571, %v362
      %vm581 = vcmask 72704
      %v582 = vsel %vm581, %v573, %v380
      %v583 = vsel %vm581, %v574, %v382
      %v584 = vsel %vm581, %v575, %v384
      %v585 = vsel %vm581, %v576, %v386
      %v586 = vsel %vm581, %v577, %v388
      %v587 = vsel %vm581, %v578, %v390
      %v588 = vsel %vm581, %v579, %v392
      %v589 = vsel %vm581, %v580, %v394
      %vm590 = vcmask 97280
      %v591 = vsel %vm590, %v582, %v412
      %v592 = vsel %vm590, %v583, %v414
      %v593 = vsel %vm590, %v584, %v416
      %v594 = vsel %vm590, %v585, %v418
      %v595 = vsel %vm590, %v586, %v420
      %v596 = vsel %vm590, %v587, %v422
      %v597 = vsel %vm590, %v588, %v424
      %v598 = vsel %vm590, %v589, %v426
      %vm599 = vcmask 121856
      %v600 = vsel %vm599, %v591, %v444
      %v601 = vsel %vm599, %v592, %v446
      %v602 = vsel %vm599, %v593, %v448
      %v603 = vsel %vm599, %v594, %v450
      %v604 = vsel %vm599, %v595, %v452
      %v605 = vsel %vm599, %v596, %v454
      %v606 = vsel %vm599, %v597, %v456
      %v607 = vsel %vm599, %v598, %v458
      %vm608 = vcmask 146432
      %v609 = vsel %vm608, %v600, %v476
      %v610 = vsel %vm608, %v601, %v478
      %v611 = vsel %vm608, %v602, %v480
      %v612 = vsel %vm608, %v603, %v482
      %v613 = vsel %vm608, %v604, %v484
      %v614 = vsel %vm608, %v605, %v486
      %v615 = vsel %vm608, %v606, %v488
      %v616 = vsel %vm608, %v607, %v490
      %vm617 = vcmask 171008
      %v618 = vsel %vm617, %v609, %v508
      %v619 = vsel %vm617, %v610, %v510
      %v620 = vsel %vm617, %v611, %v512
      %v621 = vsel %vm617, %v612, %v514
      %v622 = vsel %vm617, %v613, %v516
      %v623 = vsel %vm617, %v614, %v518
      %v624 = vsel %vm617, %v615, %v520
      %v625 = vsel %vm617, %v616, %v522
      %vm626 = vcmask 195584
      %v627 = vsel %vm626, %v618, %v540
      %v628 = vsel %vm626, %v619, %v542
      %v629 = vsel %vm626, %v620, %v544
      %v630 = vsel %vm626, %v621, %v546
      %v631 = vsel %vm626, %v622, %v548
      %v632 = vsel %vm626, %v623, %v550
      %v633 = vsel %vm626, %v624, %v552
      %v634 = vsel %vm626, %v625, %v554
      %v635 = vld [vmem:[%s1] sm:$0xff]
      %v636 = vld [vmem:[%s1 + $0x8] sm:$0xff]
      %v637 = vld [vmem:[%s1 + $0x10] sm:$0xff]
      %v638 = vld [vmem:[%s1 + $0x18] sm:$0x7]
      %v639 = vld [vmem:[%s2] sm:$0x1]
      %v641 = vlaneseq
      %v642 = vshrl.u32 %v641, 7
      %v643 = vsub.s32 0, %v642
      %v644 = vrot.slane %v639, %v643
      %vm646 = vcmask 220160
      %v648 = vsel %vm646, %v627, 0
      %v651 = vsel %vm646, %v628, 0
      %v654 = vsel %vm646, %v629, 0
      %v657 = vsel %vm646, %v630, 0
      %v660 = vsel %vm646, %v631, 0
      %v663 = vsel %vm646, %v632, 0
      %v666 = vsel %vm646, %v633, 0
      %v669 = vsel %vm646, %v634, 0
      %vm671 = vcmask 1042432
      %v673 = vsel %vm671, %v638, 0
      %675 = vmatprep.subr.mxu0 0.0
      %676 = vmatpush1.msra.mxu0 0.0
      %677 = vmatprep.subr.mxu0 0.0
      %678 = vmatpush1.msra.mxu0 0.0
      %679 = vmatprep.subr.mxu0 0.0
      %680 = vmatpush1.msra.mxu0 0.0
      %681 = vmatprep.subr.mxu0 0.0
      %682 = vmatpush1.msra.mxu0 0.0
      %683 = vmatprep.subr.mxu0 0.0
      %684 = vmatpush1.msra.mxu0 0.0
      %685 = vmatprep.subr.mxu0 0.0
      %686 = vmatpush1.msra.mxu0 0.0
      %687 = vmatprep.subr.mxu0 0.0
      %688 = vmatpush1.msra.mxu0 0.0
      %689 = vmatprep.subr.mxu0 0.0
      %690 = vmatpush1.msra.mxu0 0.0
      %691 = vmatprep.subr.mxu0 0.0
      %692 = vmatpush1.msra.mxu0 0.0
      %693 = vmatprep.subr.mxu0 0.0
      %694 = vmatpush1.msra.mxu0 0.0
      %695 = vmatprep.subr.mxu0 0.0
      %696 = vmatpush1.msra.mxu0 0.0
      %697 = vmatprep.subr.mxu0 0.0
      %698 = vmatpush1.msra.mxu0 0.0
      %699 = vmatprep.subr.mxu0 0.0
      %700 = vmatpush1.msra.mxu0 %v673
      %701 = vmatprep.subr.mxu0 0.0
      %702 = vmatpush1.msra.mxu0 %v637
      %703 = vmatprep.subr.mxu0 0.0
      %704 = vmatpush1.msra.mxu0 %v636
      %705 = vmatprep.subr.mxu0 0.0
      %706 = vmatpush1.msra.mxu0 %v635
      %707 = vmatprep.subr.mxu0 0.0
      %708 = vmatpush2.msra.mxu0 0.0
      %709 = vmatprep.subr.mxu0 0.0
      %710 = vmatpush2.msra.mxu0 0.0
      %711 = vmatprep.subr.mxu0 0.0
      %712 = vmatpush2.msra.mxu0 0.0
      %713 = vmatprep.subr.mxu0 0.0
      %714 = vmatpush2.msra.mxu0 0.0
      %715 = vmatprep.subr.mxu0 0.0
      %716 = vmatpush2.msra.mxu0 0.0
      %717 = vmatprep.subr.mxu0 0.0
      %718 = vmatpush2.msra.mxu0 0.0
      %719 = vmatprep.subr.mxu0 0.0
      %720 = vmatpush2.msra.mxu0 0.0
      %721 = vmatprep.subr.mxu0 0.0
      %722 = vmatpush2.msra.mxu0 0.0
      %723 = vmatprep.subr.mxu0 0.0
      %724 = vmatpush2.msra.mxu0 0.0
      %725 = vmatprep.subr.mxu0 0.0
      %726 = vmatpush2.msra.mxu0 0.0
      %727 = vmatprep.subr.mxu0 0.0
      %728 = vmatpush2.msra.mxu0 0.0
      %729 = vmatprep.subr.mxu0 0.0
      %730 = vmatpush2.msra.mxu0 0.0
      %731 = vmatprep.subr.mxu0 0.0
      %732 = vmatpush2.msra.mxu0 0.0
      %733 = vmatprep.subr.mxu0 0.0
      %734 = vmatpush2.msra.mxu0 0.0
      %735 = vmatprep.subr.mxu0 0.0
      %736 = vmatpush2.msra.mxu0 0.0
      %737 = vmatprep.subr.mxu0 0.0
      %738 = vmatpush2.msra.mxu0 0.0
      %739 = vmatprep.mubr.f32.mxu0 0.0
      %740 = vmatmul.mubr.f32.gmra.mxu0 %v648
      %v741 = vpop.f32.mrf.mxu0
      %v742 = vadd.f32 %v644, %v741
      %v743 = vpop.f32.mrf.mxu0
      %744 = vmatprep.mubr.f32.mxu0 0.0
      %745 = vmatmul.mubr.f32.gmra.mxu0 %v651
      %v746 = vpop.f32.mrf.mxu0
      %v747 = vadd.f32 %v644, %v746
      %v748 = vpop.f32.mrf.mxu0
      %749 = vmatprep.mubr.f32.mxu0 0.0
      %750 = vmatmul.mubr.f32.gmra.mxu0 %v654
      %v751 = vpop.f32.mrf.mxu0
      %v752 = vadd.f32 %v644, %v751
      %v753 = vpop.f32.mrf.mxu0
      %754 = vmatprep.mubr.f32.mxu0 0.0
      %755 = vmatmul.mubr.f32.gmra.mxu0 %v657
      %v756 = vpop.f32.mrf.mxu0
      %v757 = vadd.f32 %v644, %v756
      %v758 = vpop.f32.mrf.mxu0
      %759 = vmatprep.mubr.f32.mxu0 0.0
      %760 = vmatmul.mubr.f32.gmra.mxu0 %v660
      %v761 = vpop.f32.mrf.mxu0
      %v762 = vadd.f32 %v644, %v761
      %v763 = vpop.f32.mrf.mxu0
      %764 = vmatprep.mubr.f32.mxu0 0.0
      %765 = vmatmul.mubr.f32.gmra.mxu0 %v663
      %v766 = vpop.f32.mrf.mxu0
      %v767 = vadd.f32 %v644, %v766
      %v768 = vpop.f32.mrf.mxu0
      %769 = vmatprep.mubr.f32.mxu0 0.0
      %770 = vmatmul.mubr.f32.gmra.mxu0 %v666
      %v771 = vpop.f32.mrf.mxu0
      %v772 = vadd.f32 %v644, %v771
      %v773 = vpop.f32.mrf.mxu0
      %774 = vmatprep.mubr.f32.mxu0 0.0
      %775 = vmatmul.mubr.f32.gmra.mxu0 %v669
      %v776 = vpop.f32.mrf.mxu0
      %v777 = vadd.f32 %v644, %v776
      %v778 = vpop.f32.mrf.mxu0
      %779 = vdwg.mxu0
      %vm780 = vcmp.ge.f32.partialorder %v742, 0.0
      %vm781 = vcmp.ge.f32.partialorder %v747, 0.0
      %vm782 = vcmp.ge.f32.partialorder %v752, 0.0
      %vm783 = vcmp.ge.f32.partialorder %v757, 0.0
      %vm784 = vcmp.ge.f32.partialorder %v762, 0.0
      %vm785 = vcmp.ge.f32.partialorder %v767, 0.0
      %vm786 = vcmp.ge.f32.partialorder %v772, 0.0
      %vm787 = vcmp.ge.f32.partialorder %v777, 0.0
      %v788 = vmul.f32 %v742, 0.01
      %v789 = vmul.f32 %v747, 0.01
      %v790 = vmul.f32 %v752, 0.01
      %v791 = vmul.f32 %v757, 0.01
      %v792 = vmul.f32 %v762, 0.01
      %v793 = vmul.f32 %v767, 0.01
      %v794 = vmul.f32 %v772, 0.01
      %v795 = vmul.f32 %v777, 0.01
      %v796 = vsel %vm780, %v742, %v788
      %v797 = vsel %vm781, %v747, %v789
      %v798 = vsel %vm782, %v752, %v790
      %v799 = vsel %vm783, %v757, %v791
      %v800 = vsel %vm784, %v762, %v792
      %v801 = vsel %vm785, %v767, %v793
      %v802 = vsel %vm786, %v772, %v794
      %v803 = vsel %vm787, %v777, %v795
      %vm804 = vcmask 261120
      %805 = vst.msk [vmem:[#allocation2] sm:$0xff] %vm804, 0.0
      %vm806 = vcmask 259072
      %807 = vst.msk [vmem:[#allocation2 + $0x8] sm:$0x3f] %vm806, 0.0
      %808 = vst.msk [vmem:[#allocation2 + $0x10] sm:$0xff] %vm804, 0.0
      %809 = vst.msk [vmem:[#allocation2 + $0x18] sm:$0x3f] %vm806, 0.0
      %810 = vst.msk [vmem:[#allocation2 + $0x20] sm:$0xff] %vm804, 0.0
      %811 = vst.msk [vmem:[#allocation2 + $0x28] sm:$0x3f] %vm806, 0.0
      %812 = vst.msk [vmem:[#allocation2 + $0x30] sm:$0xff] %vm804, 0.0
      %813 = vst.msk [vmem:[#allocation2 + $0x38] sm:$0x3f] %vm806, 0.0
      %814 = vst.msk [vmem:[#allocation2 + $0x40] sm:$0xff] %vm804, 0.0
      %815 = vst.msk [vmem:[#allocation2 + $0x48] sm:$0x3f] %vm806, 0.0
      %816 = vst.msk [vmem:[#allocation2 + $0x50] sm:$0xff] %vm804, 0.0
      %817 = vst.msk [vmem:[#allocation2 + $0x58] sm:$0x3f] %vm806, 0.0
      %818 = vst.msk [vmem:[#allocation2 + $0x60] sm:$0xff] %vm804, 0.0
      %819 = vst.msk [vmem:[#allocation2 + $0x68] sm:$0x3f] %vm806, 0.0
      %820 = vst.msk [vmem:[#allocation2 + $0x70] sm:$0xff] %vm804, 0.0
      %821 = vst.msk [vmem:[#allocation2 + $0x78] sm:$0x3f] %vm806, 0.0
      %822 = vst.msk [vmem:[#allocation2 + $0x80] sm:$0xff] %vm804, 0.0
      %823 = vst.msk [vmem:[#allocation2 + $0x88] sm:$0x3f] %vm806, 0.0
      %824 = vst.msk [vmem:[#allocation2 + $0x90] sm:$0xff] %vm804, 0.0
      %825 = vst.msk [vmem:[#allocation2 + $0x98] sm:$0x3f] %vm806, 0.0
      %826 = vst.msk [vmem:[#allocation2 + $0xa0] sm:$0xff] %vm804, 0.0
      %827 = vst.msk [vmem:[#allocation2 + $0xa8] sm:$0x3f] %vm806, 0.0
      %828 = vst.msk [vmem:[#allocation2 + $0xb0] sm:$0xff] %vm804, 0.0
      %829 = vst.msk [vmem:[#allocation2 + $0xb8] sm:$0x3f] %vm806, 0.0
      %830 = vst.msk [vmem:[#allocation2 + $0xc0] sm:$0xff] %vm804, 0.0
      %831 = vst.msk [vmem:[#allocation2 + $0xc8] sm:$0x3f] %vm806, 0.0
      %832 = vst.msk [vmem:[#allocation2 + $0xd0] sm:$0xff] %vm804, 0.0
      %833 = vst.msk [vmem:[#allocation2 + $0xd8] sm:$0x3f] %vm806, 0.0
      %s834 = scalar_lea.vmem [#allocation2], 48
      %835 = vst.msk [vmem:[%s834 + $0x3] sm:$0xff] %vm804, %v796
      %836 = vst.msk [vmem:[%s834 + $0x13] sm:$0xff] %vm804, %v797
      %837 = vst.msk [vmem:[%s834 + $0x23] sm:$0xff] %vm804, %v798
      %838 = vst.msk [vmem:[%s834 + $0x33] sm:$0xff] %vm804, %v799
      %839 = vst.msk [vmem:[%s834 + $0x43] sm:$0xff] %vm804, %v800
      %840 = vst.msk [vmem:[%s834 + $0x53] sm:$0xff] %vm804, %v801
      %841 = vst.msk [vmem:[%s834 + $0x63] sm:$0xff] %vm804, %v802
      %842 = vst.msk [vmem:[%s834 + $0x73] sm:$0xff] %vm804, %v803
      %v843 = vld [vmem:[%s3] sm:$0xff]
      %v844 = vld [vmem:[%s3 + $0x8] sm:$0xff]
      %v845 = vld [vmem:[%s3 + $0x10] sm:$0xff]
      %v846 = vld [vmem:[%s3 + $0x18] sm:$0xff]
      %v847 = vld [vmem:[%s3 + $0x20] sm:$0xff]
      %v848 = vld [vmem:[%s3 + $0x28] sm:$0xff]
      %v849 = vld [vmem:[%s3 + $0x30] sm:$0x1]
      %v850 = vld [vmem:[#allocation2] sm:$0xff]
      %v851 = vld [vmem:[#allocation2 + $0x8] sm:$0x3f]
      %v852 = vld [vmem:[#allocation2 + $0x10] sm:$0xff]
      %v853 = vld [vmem:[#allocation2 + $0x18] sm:$0x3f]
      %v854 = vld [vmem:[#allocation2 + $0x20] sm:$0xff]
      %v855 = vld [vmem:[#allocation2 + $0x28] sm:$0x3f]
      %v856 = vld [vmem:[#allocation2 + $0x30] sm:$0xff]
      %v857 = vld [vmem:[#allocation2 + $0x38] sm:$0x3f]
      %v858 = vld [vmem:[#allocation2 + $0x40] sm:$0xff]
      %v859 = vld [vmem:[#allocation2 + $0x48] sm:$0x3f]
      %v860 = vld [vmem:[#allocation2 + $0x50] sm:$0xff]
      %v861 = vld [vmem:[#allocation2 + $0x58] sm:$0x3f]
      %v862 = vld [vmem:[#allocation2 + $0x60] sm:$0xff]
      %v863 = vld [vmem:[#allocation2 + $0x68] sm:$0x3f]
      %v864 = vld [vmem:[#allocation2 + $0x70] sm:$0xff]
      %v865 = vld [vmem:[#allocation2 + $0x78] sm:$0x3f]
      %v866 = vlaneseq
      %v867 = vshrl.u32 %v866, 7
      %v868 = vsub.s32 0, %v867
      %v869 = vrot.slane %v843, %v868
      %v870 = vmul.f32 %v850, %v869
      %v871 = vmul.f32 %v852, %v869
      %v872 = vmul.f32 %v854, %v869
      %v873 = vmul.f32 %v856, %v869
      %v874 = vmul.f32 %v858, %v869
      %v875 = vmul.f32 %v860, %v869
      %v876 = vmul.f32 %v862, %v869
      %v877 = vmul.f32 %v864, %v869
      %v878 = vadd.f32 %v870, 0.0
      %v879 = vadd.f32 %v871, 0.0
      %v880 = vadd.f32 %v872, 0.0
      %v881 = vadd.f32 %v873, 0.0
      %v882 = vadd.f32 %v874, 0.0
      %v883 = vadd.f32 %v875, 0.0
      %v884 = vadd.f32 %v876, 0.0
      %v885 = vadd.f32 %v877, 0.0
      %v886 = vlaneseq
      %v887 = vshrl.u32 %v886, 7
      %v888 = vsub.s32 1, %v887
      %v889 = vrot.slane %v843, %v888
      %v890 = vmul.f32 %v850, %v889
      %v891 = vmul.f32 %v851, %v889
      %v892 = vmul.f32 %v852, %v889
      %v893 = vmul.f32 %v853, %v889
      %v894 = vmul.f32 %v854, %v889
      %v895 = vmul.f32 %v855, %v889
      %v896 = vmul.f32 %v856, %v889
      %v897 = vmul.f32 %v857, %v889
      %v898 = vmul.f32 %v858, %v889
      %v899 = vmul.f32 %v859, %v889
      %v900 = vmul.f32 %v860, %v889
      %v901 = vmul.f32 %v861, %v889
      %v902 = vmul.f32 %v862, %v889
      %v903 = vmul.f32 %v863, %v889
      %v904 = vmul.f32 %v864, %v889
      %v905 = vmul.f32 %v865, %v889
      %vm922 = vcmask 1046528
      %v923 = vrot.slane %v890, 1
      %v924 = vrot.slane %v891, 1
      %v925 = vsel %vm922, %v923, %v924
      %v926 = vrot.slane %v892, 1
      %v927 = vrot.slane %v893, 1
      %v928 = vsel %vm922, %v926, %v927
      %v929 = vrot.slane %v894, 1
      %v930 = vrot.slane %v895, 1
      %v931 = vsel %vm922, %v929, %v930
      %v932 = vrot.slane %v896, 1
      %v933 = vrot.slane %v897, 1
      %v934 = vsel %vm922, %v932, %v933
      %v935 = vrot.slane %v898, 1
      %v936 = vrot.slane %v899, 1
      %v937 = vsel %vm922, %v935, %v936
      %v938 = vrot.slane %v900, 1
      %v939 = vrot.slane %v901, 1
      %v940 = vsel %vm922, %v938, %v939
      %v941 = vrot.slane %v902, 1
      %v942 = vrot.slane %v903, 1
      %v943 = vsel %vm922, %v941, %v942
      %v944 = vrot.slane %v904, 1
      %v945 = vrot.slane %v905, 1
      %v946 = vsel %vm922, %v944, %v945
      %v955 = vadd.f32 %v878, %v925
      %v956 = vadd.f32 %v879, %v928
      %v957 = vadd.f32 %v880, %v931
      %v958 = vadd.f32 %v881, %v934
      %v959 = vadd.f32 %v882, %v937
      %v960 = vadd.f32 %v883, %v940
      %v961 = vadd.f32 %v884, %v943
      %v962 = vadd.f32 %v885, %v946
      %v963 = vlaneseq
      %v964 = vshrl.u32 %v963, 7
      %v965 = vsub.s32 2, %v964
      %v966 = vrot.slane %v843, %v965
      %v967 = vmul.f32 %v850, %v966
      %v968 = vmul.f32 %v851, %v966
      %v969 = vmul.f32 %v852, %v966
      %v970 = vmul.f32 %v853, %v966
      %v971 = vmul.f32 %v854, %v966
      %v972 = vmul.f32 %v855, %v966
      %v973 = vmul.f32 %v856, %v966
      %v974 = vmul.f32 %v857, %v966
      %v975 = vmul.f32 %v858, %v966
      %v976 = vmul.f32 %v859, %v966
      %v977 = vmul.f32 %v860, %v966
      %v978 = vmul.f32 %v861, %v966
      %v979 = vmul.f32 %v862, %v966
      %v980 = vmul.f32 %v863, %v966
      %v981 = vmul.f32 %v864, %v966
      %v982 = vmul.f32 %v865, %v966
      %vm999 = vcmask 1045504
      %v1000 = vrot.slane %v967, 2
      %v1001 = vrot.slane %v968, 2
      %v1002 = vsel %vm999, %v1000, %v1001
      %v1003 = vrot.slane %v969, 2
      %v1004 = vrot.slane %v970, 2
      %v1005 = vsel %vm999, %v1003, %v1004
      %v1006 = vrot.slane %v971, 2
      %v1007 = vrot.slane %v972, 2
      %v1008 = vsel %vm999, %v1006, %v1007
      %v1009 = vrot.slane %v973, 2
      %v1010 = vrot.slane %v974, 2
      %v1011 = vsel %vm999, %v1009, %v1010
      %v1012 = vrot.slane %v975, 2
      %v1013 = vrot.slane %v976, 2
      %v1014 = vsel %vm999, %v1012, %v1013
      %v1015 = vrot.slane %v977, 2
      %v1016 = vrot.slane %v978, 2
      %v1017 = vsel %vm999, %v1015, %v1016
      %v1018 = vrot.slane %v979, 2
      %v1019 = vrot.slane %v980, 2
      %v1020 = vsel %vm999, %v1018, %v1019
      %v1021 = vrot.slane %v981, 2
      %v1022 = vrot.slane %v982, 2
      %v1023 = vsel %vm999, %v1021, %v1022
      %v1032 = vadd.f32 %v955, %v1002
      %v1033 = vadd.f32 %v956, %v1005
      %v1034 = vadd.f32 %v957, %v1008
      %v1035 = vadd.f32 %v958, %v1011
      %v1036 = vadd.f32 %v959, %v1014
      %v1037 = vadd.f32 %v960, %v1017
      %v1038 = vadd.f32 %v961, %v1020
      %v1039 = vadd.f32 %v962, %v1023
      %v1040 = vlaneseq
      %v1041 = vshrl.u32 %v1040, 7
      %v1042 = vsub.s32 3, %v1041
      %v1043 = vrot.slane %v843, %v1042
      %v1044 = vmul.f32 %v850, %v1043
      %v1045 = vmul.f32 %v851, %v1043
      %v1046 = vmul.f32 %v852, %v1043
      %v1047 = vmul.f32 %v853, %v1043
      %v1048 = vmul.f32 %v854, %v1043
      %v1049 = vmul.f32 %v855, %v1043
      %v1050 = vmul.f32 %v856, %v1043
      %v1051 = vmul.f32 %v857, %v1043
      %v1052 = vmul.f32 %v858, %v1043
      %v1053 = vmul.f32 %v859, %v1043
      %v1054 = vmul.f32 %v860, %v1043
      %v1055 = vmul.f32 %v861, %v1043
      %v1056 = vmul.f32 %v862, %v1043
      %v1057 = vmul.f32 %v863, %v1043
      %v1058 = vmul.f32 %v864, %v1043
      %v1059 = vmul.f32 %v865, %v1043
      %vm1076 = vcmask 1044480
      %v1077 = vrot.slane %v1044, 3
      %v1078 = vrot.slane %v1045, 3
      %v1079 = vsel %vm1076, %v1077, %v1078
      %v1080 = vrot.slane %v1046, 3
      %v1081 = vrot.slane %v1047, 3
      %v1082 = vsel %vm1076, %v1080, %v1081
      %v1083 = vrot.slane %v1048, 3
      %v1084 = vrot.slane %v1049, 3
      %v1085 = vsel %vm1076, %v1083, %v1084
      %v1086 = vrot.slane %v1050, 3
      %v1087 = vrot.slane %v1051, 3
      %v1088 = vsel %vm1076, %v1086, %v1087
      %v1089 = vrot.slane %v1052, 3
      %v1090 = vrot.slane %v1053, 3
      %v1091 = vsel %vm1076, %v1089, %v1090
      %v1092 = vrot.slane %v1054, 3
      %v1093 = vrot.slane %v1055, 3
      %v1094 = vsel %vm1076, %v1092, %v1093
      %v1095 = vrot.slane %v1056, 3
      %v1096 = vrot.slane %v1057, 3
      %v1097 = vsel %vm1076, %v1095, %v1096
      %v1098 = vrot.slane %v1058, 3
      %v1099 = vrot.slane %v1059, 3
      %v1100 = vsel %vm1076, %v1098, %v1099
      %v1109 = vadd.f32 %v1032, %v1079
      %v1110 = vadd.f32 %v1033, %v1082
      %v1111 = vadd.f32 %v1034, %v1085
      %v1112 = vadd.f32 %v1035, %v1088
      %v1113 = vadd.f32 %v1036, %v1091
      %v1114 = vadd.f32 %v1037, %v1094
      %v1115 = vadd.f32 %v1038, %v1097
      %v1116 = vadd.f32 %v1039, %v1100
      %v1117 = vlaneseq
      %v1118 = vshrl.u32 %v1117, 7
      %v1119 = vsub.s32 4, %v1118
      %v1120 = vrot.slane %v843, %v1119
      %v1121 = vmul.f32 %v850, %v1120
      %v1122 = vmul.f32 %v851, %v1120
      %v1123 = vmul.f32 %v852, %v1120
      %v1124 = vmul.f32 %v853, %v1120
      %v1125 = vmul.f32 %v854, %v1120
      %v1126 = vmul.f32 %v855, %v1120
      %v1127 = vmul.f32 %v856, %v1120
      %v1128 = vmul.f32 %v857, %v1120
      %v1129 = vmul.f32 %v858, %v1120
      %v1130 = vmul.f32 %v859, %v1120
      %v1131 = vmul.f32 %v860, %v1120
      %v1132 = vmul.f32 %v861, %v1120
      %v1133 = vmul.f32 %v862, %v1120
      %v1134 = vmul.f32 %v863, %v1120
      %v1135 = vmul.f32 %v864, %v1120
      %v1136 = vmul.f32 %v865, %v1120
      %vm1153 = vcmask 1043456
      %v1154 = vrot.slane %v1121, 4
      %v1155 = vrot.slane %v1122, 4
      %v1156 = vsel %vm1153, %v1154, %v1155
      %v1157 = vrot.slane %v1123, 4
      %v1158 = vrot.slane %v1124, 4
      %v1159 = vsel %vm1153, %v1157, %v1158
      %v1160 = vrot.slane %v1125, 4
      %v1161 = vrot.slane %v1126, 4
      %v1162 = vsel %vm1153, %v1160, %v1161
      %v1163 = vrot.slane %v1127, 4
      %v1164 = vrot.slane %v1128, 4
      %v1165 = vsel %vm1153, %v1163, %v1164
      %v1166 = vrot.slane %v1129, 4
      %v1167 = vrot.slane %v1130, 4
      %v1168 = vsel %vm1153, %v1166, %v1167
      %v1169 = vrot.slane %v1131, 4
      %v1170 = vrot.slane %v1132, 4
      %v1171 = vsel %vm1153, %v1169, %v1170
      %v1172 = vrot.slane %v1133, 4
      %v1173 = vrot.slane %v1134, 4
      %v1174 = vsel %vm1153, %v1172, %v1173
      %v1175 = vrot.slane %v1135, 4
      %v1176 = vrot.slane %v1136, 4
      %v1177 = vsel %vm1153, %v1175, %v1176
      %v1186 = vadd.f32 %v1109, %v1156
      %v1187 = vadd.f32 %v1110, %v1159
      %v1188 = vadd.f32 %v1111, %v1162
      %v1189 = vadd.f32 %v1112, %v1165
      %v1190 = vadd.f32 %v1113, %v1168
      %v1191 = vadd.f32 %v1114, %v1171
      %v1192 = vadd.f32 %v1115, %v1174
      %v1193 = vadd.f32 %v1116, %v1177
      %v1194 = vlaneseq
      %v1195 = vshrl.u32 %v1194, 7
      %v1196 = vsub.s32 5, %v1195
      %v1197 = vrot.slane %v843, %v1196
      %v1198 = vmul.f32 %v850, %v1197
      %v1199 = vmul.f32 %v851, %v1197
      %v1200 = vmul.f32 %v852, %v1197
      %v1201 = vmul.f32 %v853, %v1197
      %v1202 = vmul.f32 %v854, %v1197
      %v1203 = vmul.f32 %v855, %v1197
      %v1204 = vmul.f32 %v856, %v1197
      %v1205 = vmul.f32 %v857, %v1197
      %v1206 = vmul.f32 %v858, %v1197
      %v1207 = vmul.f32 %v859, %v1197
      %v1208 = vmul.f32 %v860, %v1197
      %v1209 = vmul.f32 %v861, %v1197
      %v1210 = vmul.f32 %v862, %v1197
      %v1211 = vmul.f32 %v863, %v1197
      %v1212 = vmul.f32 %v864, %v1197
      %v1213 = vmul.f32 %v865, %v1197
      %v1230 = vrot.slane %v1198, 5
      %v1231 = vrot.slane %v1199, 5
      %v1232 = vsel %vm671, %v1230, %v1231
      %v1233 = vrot.slane %v1200, 5
      %v1234 = vrot.slane %v1201, 5
      %v1235 = vsel %vm671, %v1233, %v1234
      %v1236 = vrot.slane %v1202, 5
      %v1237 = vrot.slane %v1203, 5
      %v1238 = vsel %vm671, %v1236, %v1237
      %v1239 = vrot.slane %v1204, 5
      %v1240 = vrot.slane %v1205, 5
      %v1241 = vsel %vm671, %v1239, %v1240
      %v1242 = vrot.slane %v1206, 5
      %v1243 = vrot.slane %v1207, 5
      %v1244 = vsel %vm671, %v1242, %v1243
      %v1245 = vrot.slane %v1208, 5
      %v1246 = vrot.slane %v1209, 5
      %v1247 = vsel %vm671, %v1245, %v1246
      %v1248 = vrot.slane %v1210, 5
      %v1249 = vrot.slane %v1211, 5
      %v1250 = vsel %vm671, %v1248, %v1249
      %v1251 = vrot.slane %v1212, 5
      %v1252 = vrot.slane %v1213, 5
      %v1253 = vsel %vm671, %v1251, %v1252
      %v1262 = vadd.f32 %v1186, %v1232
      %v1263 = vadd.f32 %v1187, %v1235
      %v1264 = vadd.f32 %v1188, %v1238
      %v1265 = vadd.f32 %v1189, %v1241
      %v1266 = vadd.f32 %v1190, %v1244
      %v1267 = vadd.f32 %v1191, %v1247
      %v1268 = vadd.f32 %v1192, %v1250
      %v1269 = vadd.f32 %v1193, %v1253
      %v1270 = vlaneseq
      %v1271 = vshrl.u32 %v1270, 7
      %v1272 = vsub.s32 6, %v1271
      %v1273 = vrot.slane %v843, %v1272
      %v1274 = vmul.f32 %v850, %v1273
      %v1275 = vmul.f32 %v851, %v1273
      %v1276 = vmul.f32 %v852, %v1273
      %v1277 = vmul.f32 %v853, %v1273
      %v1278 = vmul.f32 %v854, %v1273
      %v1279 = vmul.f32 %v855, %v1273
      %v1280 = vmul.f32 %v856, %v1273
      %v1281 = vmul.f32 %v857, %v1273
      %v1282 = vmul.f32 %v858, %v1273
      %v1283 = vmul.f32 %v859, %v1273
      %v1284 = vmul.f32 %v860, %v1273
      %v1285 = vmul.f32 %v861, %v1273
      %v1286 = vmul.f32 %v862, %v1273
      %v1287 = vmul.f32 %v863, %v1273
      %v1288 = vmul.f32 %v864, %v1273
      %v1289 = vmul.f32 %v865, %v1273
      %vm1306 = vcmask 1041408
      %v1307 = vrot.slane %v1274, 6
      %v1308 = vrot.slane %v1275, 6
      %v1309 = vsel %vm1306, %v1307, %v1308
      %v1310 = vrot.slane %v1276, 6
      %v1311 = vrot.slane %v1277, 6
      %v1312 = vsel %vm1306, %v1310, %v1311
      %v1313 = vrot.slane %v1278, 6
      %v1314 = vrot.slane %v1279, 6
      %v1315 = vsel %vm1306, %v1313, %v1314
      %v1316 = vrot.slane %v1280, 6
      %v1317 = vrot.slane %v1281, 6
      %v1318 = vsel %vm1306, %v1316, %v1317
      %v1319 = vrot.slane %v1282, 6
      %v1320 = vrot.slane %v1283, 6
      %v1321 = vsel %vm1306, %v1319, %v1320
      %v1322 = vrot.slane %v1284, 6
      %v1323 = vrot.slane %v1285, 6
      %v1324 = vsel %vm1306, %v1322, %v1323
      %v1325 = vrot.slane %v1286, 6
      %v1326 = vrot.slane %v1287, 6
      %v1327 = vsel %vm1306, %v1325, %v1326
      %v1328 = vrot.slane %v1288, 6
      %v1329 = vrot.slane %v1289, 6
      %v1330 = vsel %vm1306, %v1328, %v1329
      %v1339 = vadd.f32 %v1262, %v1309
      %v1340 = vadd.f32 %v1263, %v1312
      %v1341 = vadd.f32 %v1264, %v1315
      %v1342 = vadd.f32 %v1265, %v1318
      %v1343 = vadd.f32 %v1266, %v1321
      %v1344 = vadd.f32 %v1267, %v1324
      %v1345 = vadd.f32 %v1268, %v1327
      %v1346 = vadd.f32 %v1269, %v1330
      %s1347 = scalar_lea.vmem [#allocation2], 16
      %v1348 = vld [vmem:[%s1347] sm:$0xff]
      %v1349 = vld [vmem:[%s1347 + $0x8] sm:$0x3f]
      %v1350 = vld [vmem:[%s1347 + $0x10] sm:$0xff]
      %v1351 = vld [vmem:[%s1347 + $0x18] sm:$0x3f]
      %v1352 = vld [vmem:[%s1347 + $0x20] sm:$0xff]
      %v1353 = vld [vmem:[%s1347 + $0x28] sm:$0x3f]
      %v1354 = vld [vmem:[%s1347 + $0x30] sm:$0xff]
      %v1355 = vld [vmem:[%s1347 + $0x38] sm:$0x3f]
      %v1356 = vld [vmem:[%s1347 + $0x40] sm:$0xff]
      %v1357 = vld [vmem:[%s1347 + $0x48] sm:$0x3f]
      %v1358 = vld [vmem:[%s1347 + $0x50] sm:$0xff]
      %v1359 = vld [vmem:[%s1347 + $0x58] sm:$0x3f]
      %v1360 = vld [vmem:[%s1347 + $0x60] sm:$0xff]
      %v1361 = vld [vmem:[%s1347 + $0x68] sm:$0x3f]
      %v1362 = vld [vmem:[%s1347 + $0x70] sm:$0xff]
      %v1363 = vld [vmem:[%s1347 + $0x78] sm:$0x3f]
      %v1364 = vlaneseq
      %v1365 = vshrl.u32 %v1364, 7
      %v1366 = vsub.s32 7, %v1365
      %v1367 = vrot.slane %v843, %v1366
      %v1368 = vmul.f32 %v1348, %v1367
      %v1369 = vmul.f32 %v1350, %v1367
      %v1370 = vmul.f32 %v1352, %v1367
      %v1371 = vmul.f32 %v1354, %v1367
      %v1372 = vmul.f32 %v1356, %v1367
      %v1373 = vmul.f32 %v1358, %v1367
      %v1374 = vmul.f32 %v1360, %v1367
      %v1375 = vmul.f32 %v1362, %v1367
      %v1376 = vadd.f32 %v1339, %v1368
      %v1377 = vadd.f32 %v1340, %v1369
      %v1378 = vadd.f32 %v1341, %v1370
      %v1379 = vadd.f32 %v1342, %v1371
      %v1380 = vadd.f32 %v1343, %v1372
      %v1381 = vadd.f32 %v1344, %v1373
      %v1382 = vadd.f32 %v1345, %v1374
      %v1383 = vadd.f32 %v1346, %v1375
      %v1384 = vlaneseq
      %v1385 = vshrl.u32 %v1384, 7
      %v1386 = vsub.s32 0, %v1385
      %v1387 = vrot.slane %v844, %v1386
      %v1388 = vmul.f32 %v1348, %v1387
      %v1389 = vmul.f32 %v1349, %v1387
      %v1390 = vmul.f32 %v1350, %v1387
      %v1391 = vmul.f32 %v1351, %v1387
      %v1392 = vmul.f32 %v1352, %v1387
      %v1393 = vmul.f32 %v1353, %v1387
      %v1394 = vmul.f32 %v1354, %v1387
      %v1395 = vmul.f32 %v1355, %v1387
      %v1396 = vmul.f32 %v1356, %v1387
      %v1397 = vmul.f32 %v1357, %v1387
      %v1398 = vmul.f32 %v1358, %v1387
      %v1399 = vmul.f32 %v1359, %v1387
      %v1400 = vmul.f32 %v1360, %v1387
      %v1401 = vmul.f32 %v1361, %v1387
      %v1402 = vmul.f32 %v1362, %v1387
      %v1403 = vmul.f32 %v1363, %v1387
      %v1420 = vrot.slane %v1388, 1
      %v1421 = vrot.slane %v1389, 1
      %v1422 = vsel %vm922, %v1420, %v1421
      %v1423 = vrot.slane %v1390, 1
      %v1424 = vrot.slane %v1391, 1
      %v1425 = vsel %vm922, %v1423, %v1424
      %v1426 = vrot.slane %v1392, 1
      %v1427 = vrot.slane %v1393, 1
      %v1428 = vsel %vm922, %v1426, %v1427
      %v1429 = vrot.slane %v1394, 1
      %v1430 = vrot.slane %v1395, 1
      %v1431 = vsel %vm922, %v1429, %v1430
      %v1432 = vrot.slane %v1396, 1
      %v1433 = vrot.slane %v1397, 1
      %v1434 = vsel %vm922, %v1432, %v1433
      %v1435 = vrot.slane %v1398, 1
      %v1436 = vrot.slane %v1399, 1
      %v1437 = vsel %vm922, %v1435, %v1436
      %v1438 = vrot.slane %v1400, 1
      %v1439 = vrot.slane %v1401, 1
      %v1440 = vsel %vm922, %v1438, %v1439
      %v1441 = vrot.slane %v1402, 1
      %v1442 = vrot.slane %v1403, 1
      %v1443 = vsel %vm922, %v1441, %v1442
      %v1452 = vadd.f32 %v1376, %v1422
      %v1453 = vadd.f32 %v1377, %v1425
      %v1454 = vadd.f32 %v1378, %v1428
      %v1455 = vadd.f32 %v1379, %v1431
      %v1456 = vadd.f32 %v1380, %v1434
      %v1457 = vadd.f32 %v1381, %v1437
      %v1458 = vadd.f32 %v1382, %v1440
      %v1459 = vadd.f32 %v1383, %v1443
      %v1460 = vlaneseq
      %v1461 = vshrl.u32 %v1460, 7
      %v1462 = vsub.s32 1, %v1461
      %v1463 = vrot.slane %v844, %v1462
      %v1464 = vmul.f32 %v1348, %v1463
      %v1465 = vmul.f32 %v1349, %v1463
      %v1466 = vmul.f32 %v1350, %v1463
      %v1467 = vmul.f32 %v1351, %v1463
      %v1468 = vmul.f32 %v1352, %v1463
      %v1469 = vmul.f32 %v1353, %v1463
      %v1470 = vmul.f32 %v1354, %v1463
      %v1471 = vmul.f32 %v1355, %v1463
      %v1472 = vmul.f32 %v1356, %v1463
      %v1473 = vmul.f32 %v1357, %v1463
      %v1474 = vmul.f32 %v1358, %v1463
      %v1475 = vmul.f32 %v1359, %v1463
      %v1476 = vmul.f32 %v1360, %v1463
      %v1477 = vmul.f32 %v1361, %v1463
      %v1478 = vmul.f32 %v1362, %v1463
      %v1479 = vmul.f32 %v1363, %v1463
      %v1496 = vrot.slane %v1464, 2
      %v1497 = vrot.slane %v1465, 2
      %v1498 = vsel %vm999, %v1496, %v1497
      %v1499 = vrot.slane %v1466, 2
      %v1500 = vrot.slane %v1467, 2
      %v1501 = vsel %vm999, %v1499, %v1500
      %v1502 = vrot.slane %v1468, 2
      %v1503 = vrot.slane %v1469, 2
      %v1504 = vsel %vm999, %v1502, %v1503
      %v1505 = vrot.slane %v1470, 2
      %v1506 = vrot.slane %v1471, 2
      %v1507 = vsel %vm999, %v1505, %v1506
      %v1508 = vrot.slane %v1472, 2
      %v1509 = vrot.slane %v1473, 2
      %v1510 = vsel %vm999, %v1508, %v1509
      %v1511 = vrot.slane %v1474, 2
      %v1512 = vrot.slane %v1475, 2
      %v1513 = vsel %vm999, %v1511, %v1512
      %v1514 = vrot.slane %v1476, 2
      %v1515 = vrot.slane %v1477, 2
      %v1516 = vsel %vm999, %v1514, %v1515
      %v1517 = vrot.slane %v1478, 2
      %v1518 = vrot.slane %v1479, 2
      %v1519 = vsel %vm999, %v1517, %v1518
      %v1528 = vadd.f32 %v1452, %v1498
      %v1529 = vadd.f32 %v1453, %v1501
      %v1530 = vadd.f32 %v1454, %v1504
      %v1531 = vadd.f32 %v1455, %v1507
      %v1532 = vadd.f32 %v1456, %v1510
      %v1533 = vadd.f32 %v1457, %v1513
      %v1534 = vadd.f32 %v1458, %v1516
      %v1535 = vadd.f32 %v1459, %v1519
      %v1536 = vlaneseq
      %v1537 = vshrl.u32 %v1536, 7
      %v1538 = vsub.s32 2, %v1537
      %v1539 = vrot.slane %v844, %v1538
      %v1540 = vmul.f32 %v1348, %v1539
      %v1541 = vmul.f32 %v1349, %v1539
      %v1542 = vmul.f32 %v1350, %v1539
      %v1543 = vmul.f32 %v1351, %v1539
      %v1544 = vmul.f32 %v1352, %v1539
      %v1545 = vmul.f32 %v1353, %v1539
      %v1546 = vmul.f32 %v1354, %v1539
      %v1547 = vmul.f32 %v1355, %v1539
      %v1548 = vmul.f32 %v1356, %v1539
      %v1549 = vmul.f32 %v1357, %v1539
      %v1550 = vmul.f32 %v1358, %v1539
      %v1551 = vmul.f32 %v1359, %v1539
      %v1552 = vmul.f32 %v1360, %v1539
      %v1553 = vmul.f32 %v1361, %v1539
      %v1554 = vmul.f32 %v1362, %v1539
      %v1555 = vmul.f32 %v1363, %v1539
      %v1572 = vrot.slane %v1540, 3
      %v1573 = vrot.slane %v1541, 3
      %v1574 = vsel %vm1076, %v1572, %v1573
      %v1575 = vrot.slane %v1542, 3
      %v1576 = vrot.slane %v1543, 3
      %v1577 = vsel %vm1076, %v1575, %v1576
      %v1578 = vrot.slane %v1544, 3
      %v1579 = vrot.slane %v1545, 3
      %v1580 = vsel %vm1076, %v1578, %v1579
      %v1581 = vrot.slane %v1546, 3
      %v1582 = vrot.slane %v1547, 3
      %v1583 = vsel %vm1076, %v1581, %v1582
      %v1584 = vrot.slane %v1548, 3
      %v1585 = vrot.slane %v1549, 3
      %v1586 = vsel %vm1076, %v1584, %v1585
      %v1587 = vrot.slane %v1550, 3
      %v1588 = vrot.slane %v1551, 3
      %v1589 = vsel %vm1076, %v1587, %v1588
      %v1590 = vrot.slane %v1552, 3
      %v1591 = vrot.slane %v1553, 3
      %v1592 = vsel %vm1076, %v1590, %v1591
      %v1593 = vrot.slane %v1554, 3
      %v1594 = vrot.slane %v1555, 3
      %v1595 = vsel %vm1076, %v1593, %v1594
      %v1604 = vadd.f32 %v1528, %v1574
      %v1605 = vadd.f32 %v1529, %v1577
      %v1606 = vadd.f32 %v1530, %v1580
      %v1607 = vadd.f32 %v1531, %v1583
      %v1608 = vadd.f32 %v1532, %v1586
      %v1609 = vadd.f32 %v1533, %v1589
      %v1610 = vadd.f32 %v1534, %v1592
      %v1611 = vadd.f32 %v1535, %v1595
      %v1612 = vlaneseq
      %v1613 = vshrl.u32 %v1612, 7
      %v1614 = vsub.s32 3, %v1613
      %v1615 = vrot.slane %v844, %v1614
      %v1616 = vmul.f32 %v1348, %v1615
      %v1617 = vmul.f32 %v1349, %v1615
      %v1618 = vmul.f32 %v1350, %v1615
      %v1619 = vmul.f32 %v1351, %v1615
      %v1620 = vmul.f32 %v1352, %v1615
      %v1621 = vmul.f32 %v1353, %v1615
      %v1622 = vmul.f32 %v1354, %v1615
      %v1623 = vmul.f32 %v1355, %v1615
      %v1624 = vmul.f32 %v1356, %v1615
      %v1625 = vmul.f32 %v1357, %v1615
      %v1626 = vmul.f32 %v1358, %v1615
      %v1627 = vmul.f32 %v1359, %v1615
      %v1628 = vmul.f32 %v1360, %v1615
      %v1629 = vmul.f32 %v1361, %v1615
      %v1630 = vmul.f32 %v1362, %v1615
      %v1631 = vmul.f32 %v1363, %v1615
      %v1648 = vrot.slane %v1616, 4
      %v1649 = vrot.slane %v1617, 4
      %v1650 = vsel %vm1153, %v1648, %v1649
      %v1651 = vrot.slane %v1618, 4
      %v1652 = vrot.slane %v1619, 4
      %v1653 = vsel %vm1153, %v1651, %v1652
      %v1654 = vrot.slane %v1620, 4
      %v1655 = vrot.slane %v1621, 4
      %v1656 = vsel %vm1153, %v1654, %v1655
      %v1657 = vrot.slane %v1622, 4
      %v1658 = vrot.slane %v1623, 4
      %v1659 = vsel %vm1153, %v1657, %v1658
      %v1660 = vrot.slane %v1624, 4
      %v1661 = vrot.slane %v1625, 4
      %v1662 = vsel %vm1153, %v1660, %v1661
      %v1663 = vrot.slane %v1626, 4
      %v1664 = vrot.slane %v1627, 4
      %v1665 = vsel %vm1153, %v1663, %v1664
      %v1666 = vrot.slane %v1628, 4
      %v1667 = vrot.slane %v1629, 4
      %v1668 = vsel %vm1153, %v1666, %v1667
      %v1669 = vrot.slane %v1630, 4
      %v1670 = vrot.slane %v1631, 4
      %v1671 = vsel %vm1153, %v1669, %v1670
      %v1680 = vadd.f32 %v1604, %v1650
      %v1681 = vadd.f32 %v1605, %v1653
      %v1682 = vadd.f32 %v1606, %v1656
      %v1683 = vadd.f32 %v1607, %v1659
      %v1684 = vadd.f32 %v1608, %v1662
      %v1685 = vadd.f32 %v1609, %v1665
      %v1686 = vadd.f32 %v1610, %v1668
      %v1687 = vadd.f32 %v1611, %v1671
      %v1688 = vlaneseq
      %v1689 = vshrl.u32 %v1688, 7
      %v1690 = vsub.s32 4, %v1689
      %v1691 = vrot.slane %v844, %v1690
      %v1692 = vmul.f32 %v1348, %v1691
      %v1693 = vmul.f32 %v1349, %v1691
      %v1694 = vmul.f32 %v1350, %v1691
      %v1695 = vmul.f32 %v1351, %v1691
      %v1696 = vmul.f32 %v1352, %v1691
      %v1697 = vmul.f32 %v1353, %v1691
      %v1698 = vmul.f32 %v1354, %v1691
      %v1699 = vmul.f32 %v1355, %v1691
      %v1700 = vmul.f32 %v1356, %v1691
      %v1701 = vmul.f32 %v1357, %v1691
      %v1702 = vmul.f32 %v1358, %v1691
      %v1703 = vmul.f32 %v1359, %v1691
      %v1704 = vmul.f32 %v1360, %v1691
      %v1705 = vmul.f32 %v1361, %v1691
      %v1706 = vmul.f32 %v1362, %v1691
      %v1707 = vmul.f32 %v1363, %v1691
      %v1724 = vrot.slane %v1692, 5
      %v1725 = vrot.slane %v1693, 5
      %v1726 = vsel %vm671, %v1724, %v1725
      %v1727 = vrot.slane %v1694, 5
      %v1728 = vrot.slane %v1695, 5
      %v1729 = vsel %vm671, %v1727, %v1728
      %v1730 = vrot.slane %v1696, 5
      %v1731 = vrot.slane %v1697, 5
      %v1732 = vsel %vm671, %v1730, %v1731
      %v1733 = vrot.slane %v1698, 5
      %v1734 = vrot.slane %v1699, 5
      %v1735 = vsel %vm671, %v1733, %v1734
      %v1736 = vrot.slane %v1700, 5
      %v1737 = vrot.slane %v1701, 5
      %v1738 = vsel %vm671, %v1736, %v1737
      %v1739 = vrot.slane %v1702, 5
      %v1740 = vrot.slane %v1703, 5
      %v1741 = vsel %vm671, %v1739, %v1740
      %v1742 = vrot.slane %v1704, 5
      %v1743 = vrot.slane %v1705, 5
      %v1744 = vsel %vm671, %v1742, %v1743
      %v1745 = vrot.slane %v1706, 5
      %v1746 = vrot.slane %v1707, 5
      %v1747 = vsel %vm671, %v1745, %v1746
      %v1756 = vadd.f32 %v1680, %v1726
      %v1757 = vadd.f32 %v1681, %v1729
      %v1758 = vadd.f32 %v1682, %v1732
      %v1759 = vadd.f32 %v1683, %v1735
      %v1760 = vadd.f32 %v1684, %v1738
      %v1761 = vadd.f32 %v1685, %v1741
      %v1762 = vadd.f32 %v1686, %v1744
      %v1763 = vadd.f32 %v1687, %v1747
      %v1764 = vlaneseq
      %v1765 = vshrl.u32 %v1764, 7
      %v1766 = vsub.s32 5, %v1765
      %v1767 = vrot.slane %v844, %v1766
      %v1768 = vmul.f32 %v1348, %v1767
      %v1769 = vmul.f32 %v1349, %v1767
      %v1770 = vmul.f32 %v1350, %v1767
      %v1771 = vmul.f32 %v1351, %v1767
      %v1772 = vmul.f32 %v1352, %v1767
      %v1773 = vmul.f32 %v1353, %v1767
      %v1774 = vmul.f32 %v1354, %v1767
      %v1775 = vmul.f32 %v1355, %v1767
      %v1776 = vmul.f32 %v1356, %v1767
      %v1777 = vmul.f32 %v1357, %v1767
      %v1778 = vmul.f32 %v1358, %v1767
      %v1779 = vmul.f32 %v1359, %v1767
      %v1780 = vmul.f32 %v1360, %v1767
      %v1781 = vmul.f32 %v1361, %v1767
      %v1782 = vmul.f32 %v1362, %v1767
      %v1783 = vmul.f32 %v1363, %v1767
      %v1800 = vrot.slane %v1768, 6
      %v1801 = vrot.slane %v1769, 6
      %v1802 = vsel %vm1306, %v1800, %v1801
      %v1803 = vrot.slane %v1770, 6
      %v1804 = vrot.slane %v1771, 6
      %v1805 = vsel %vm1306, %v1803, %v1804
      %v1806 = vrot.slane %v1772, 6
      %v1807 = vrot.slane %v1773, 6
      %v1808 = vsel %vm1306, %v1806, %v1807
      %v1809 = vrot.slane %v1774, 6
      %v1810 = vrot.slane %v1775, 6
      %v1811 = vsel %vm1306, %v1809, %v1810
      %v1812 = vrot.slane %v1776, 6
      %v1813 = vrot.slane %v1777, 6
      %v1814 = vsel %vm1306, %v1812, %v1813
      %v1815 = vrot.slane %v1778, 6
      %v1816 = vrot.slane %v1779, 6
      %v1817 = vsel %vm1306, %v1815, %v1816
      %v1818 = vrot.slane %v1780, 6
      %v1819 = vrot.slane %v1781, 6
      %v1820 = vsel %vm1306, %v1818, %v1819
      %v1821 = vrot.slane %v1782, 6
      %v1822 = vrot.slane %v1783, 6
      %v1823 = vsel %vm1306, %v1821, %v1822
      %v1832 = vadd.f32 %v1756, %v1802
      %v1833 = vadd.f32 %v1757, %v1805
      %v1834 = vadd.f32 %v1758, %v1808
      %v1835 = vadd.f32 %v1759, %v1811
      %v1836 = vadd.f32 %v1760, %v1814
      %v1837 = vadd.f32 %v1761, %v1817
      %v1838 = vadd.f32 %v1762, %v1820
      %v1839 = vadd.f32 %v1763, %v1823
      %s1840 = scalar_lea.vmem [#allocation2], 32
      %v1841 = vld [vmem:[%s1840] sm:$0xff]
      %v1842 = vld [vmem:[%s1840 + $0x8] sm:$0x3f]
      %v1843 = vld [vmem:[%s1840 + $0x10] sm:$0xff]
      %v1844 = vld [vmem:[%s1840 + $0x18] sm:$0x3f]
      %v1845 = vld [vmem:[%s1840 + $0x20] sm:$0xff]
      %v1846 = vld [vmem:[%s1840 + $0x28] sm:$0x3f]
      %v1847 = vld [vmem:[%s1840 + $0x30] sm:$0xff]
      %v1848 = vld [vmem:[%s1840 + $0x38] sm:$0x3f]
      %v1849 = vld [vmem:[%s1840 + $0x40] sm:$0xff]
      %v1850 = vld [vmem:[%s1840 + $0x48] sm:$0x3f]
      %v1851 = vld [vmem:[%s1840 + $0x50] sm:$0xff]
      %v1852 = vld [vmem:[%s1840 + $0x58] sm:$0x3f]
      %v1853 = vld [vmem:[%s1840 + $0x60] sm:$0xff]
      %v1854 = vld [vmem:[%s1840 + $0x68] sm:$0x3f]
      %v1855 = vld [vmem:[%s1840 + $0x70] sm:$0xff]
      %v1856 = vld [vmem:[%s1840 + $0x78] sm:$0x3f]
      %v1857 = vlaneseq
      %v1858 = vshrl.u32 %v1857, 7
      %v1859 = vsub.s32 6, %v1858
      %v1860 = vrot.slane %v844, %v1859
      %v1861 = vmul.f32 %v1841, %v1860
      %v1862 = vmul.f32 %v1843, %v1860
      %v1863 = vmul.f32 %v1845, %v1860
      %v1864 = vmul.f32 %v1847, %v1860
      %v1865 = vmul.f32 %v1849, %v1860
      %v1866 = vmul.f32 %v1851, %v1860
      %v1867 = vmul.f32 %v1853, %v1860
      %v1868 = vmul.f32 %v1855, %v1860
      %v1869 = vadd.f32 %v1832, %v1861
      %v1870 = vadd.f32 %v1833, %v1862
      %v1871 = vadd.f32 %v1834, %v1863
      %v1872 = vadd.f32 %v1835, %v1864
      %v1873 = vadd.f32 %v1836, %v1865
      %v1874 = vadd.f32 %v1837, %v1866
      %v1875 = vadd.f32 %v1838, %v1867
      %v1876 = vadd.f32 %v1839, %v1868
      %v1877 = vlaneseq
      %v1878 = vshrl.u32 %v1877, 7
      %v1879 = vsub.s32 7, %v1878
      %v1880 = vrot.slane %v844, %v1879
      %v1881 = vmul.f32 %v1841, %v1880
      %v1882 = vmul.f32 %v1842, %v1880
      %v1883 = vmul.f32 %v1843, %v1880
      %v1884 = vmul.f32 %v1844, %v1880
      %v1885 = vmul.f32 %v1845, %v1880
      %v1886 = vmul.f32 %v1846, %v1880
      %v1887 = vmul.f32 %v1847, %v1880
      %v1888 = vmul.f32 %v1848, %v1880
      %v1889 = vmul.f32 %v1849, %v1880
      %v1890 = vmul.f32 %v1850, %v1880
      %v1891 = vmul.f32 %v1851, %v1880
      %v1892 = vmul.f32 %v1852, %v1880
      %v1893 = vmul.f32 %v1853, %v1880
      %v1894 = vmul.f32 %v1854, %v1880
      %v1895 = vmul.f32 %v1855, %v1880
      %v1896 = vmul.f32 %v1856, %v1880
      %v1913 = vrot.slane %v1881, 1
      %v1914 = vrot.slane %v1882, 1
      %v1915 = vsel %vm922, %v1913, %v1914
      %v1916 = vrot.slane %v1883, 1
      %v1917 = vrot.slane %v1884, 1
      %v1918 = vsel %vm922, %v1916, %v1917
      %v1919 = vrot.slane %v1885, 1
      %v1920 = vrot.slane %v1886, 1
      %v1921 = vsel %vm922, %v1919, %v1920
      %v1922 = vrot.slane %v1887, 1
      %v1923 = vrot.slane %v1888, 1
      %v1924 = vsel %vm922, %v1922, %v1923
      %v1925 = vrot.slane %v1889, 1
      %v1926 = vrot.slane %v1890, 1
      %v1927 = vsel %vm922, %v1925, %v1926
      %v1928 = vrot.slane %v1891, 1
      %v1929 = vrot.slane %v1892, 1
      %v1930 = vsel %vm922, %v1928, %v1929
      %v1931 = vrot.slane %v1893, 1
      %v1932 = vrot.slane %v1894, 1
      %v1933 = vsel %vm922, %v1931, %v1932
      %v1934 = vrot.slane %v1895, 1
      %v1935 = vrot.slane %v1896, 1
      %v1936 = vsel %vm922, %v1934, %v1935
      %v1945 = vadd.f32 %v1869, %v1915
      %v1946 = vadd.f32 %v1870, %v1918
      %v1947 = vadd.f32 %v1871, %v1921
      %v1948 = vadd.f32 %v1872, %v1924
      %v1949 = vadd.f32 %v1873, %v1927
      %v1950 = vadd.f32 %v1874, %v1930
      %v1951 = vadd.f32 %v1875, %v1933
      %v1952 = vadd.f32 %v1876, %v1936
      %v1953 = vlaneseq
      %v1954 = vshrl.u32 %v1953, 7
      %v1955 = vsub.s32 0, %v1954
      %v1956 = vrot.slane %v845, %v1955
      %v1957 = vmul.f32 %v1841, %v1956
      %v1958 = vmul.f32 %v1842, %v1956
      %v1959 = vmul.f32 %v1843, %v1956
      %v1960 = vmul.f32 %v1844, %v1956
      %v1961 = vmul.f32 %v1845, %v1956
      %v1962 = vmul.f32 %v1846, %v1956
      %v1963 = vmul.f32 %v1847, %v1956
      %v1964 = vmul.f32 %v1848, %v1956
      %v1965 = vmul.f32 %v1849, %v1956
      %v1966 = vmul.f32 %v1850, %v1956
      %v1967 = vmul.f32 %v1851, %v1956
      %v1968 = vmul.f32 %v1852, %v1956
      %v1969 = vmul.f32 %v1853, %v1956
      %v1970 = vmul.f32 %v1854, %v1956
      %v1971 = vmul.f32 %v1855, %v1956
      %v1972 = vmul.f32 %v1856, %v1956
      %v1989 = vrot.slane %v1957, 2
      %v1990 = vrot.slane %v1958, 2
      %v1991 = vsel %vm999, %v1989, %v1990
      %v1992 = vrot.slane %v1959, 2
      %v1993 = vrot.slane %v1960, 2
      %v1994 = vsel %vm999, %v1992, %v1993
      %v1995 = vrot.slane %v1961, 2
      %v1996 = vrot.slane %v1962, 2
      %v1997 = vsel %vm999, %v1995, %v1996
      %v1998 = vrot.slane %v1963, 2
      %v1999 = vrot.slane %v1964, 2
      %v2000 = vsel %vm999, %v1998, %v1999
      %v2001 = vrot.slane %v1965, 2
      %v2002 = vrot.slane %v1966, 2
      %v2003 = vsel %vm999, %v2001, %v2002
      %v2004 = vrot.slane %v1967, 2
      %v2005 = vrot.slane %v1968, 2
      %v2006 = vsel %vm999, %v2004, %v2005
      %v2007 = vrot.slane %v1969, 2
      %v2008 = vrot.slane %v1970, 2
      %v2009 = vsel %vm999, %v2007, %v2008
      %v2010 = vrot.slane %v1971, 2
      %v2011 = vrot.slane %v1972, 2
      %v2012 = vsel %vm999, %v2010, %v2011
      %v2021 = vadd.f32 %v1945, %v1991
      %v2022 = vadd.f32 %v1946, %v1994
      %v2023 = vadd.f32 %v1947, %v1997
      %v2024 = vadd.f32 %v1948, %v2000
      %v2025 = vadd.f32 %v1949, %v2003
      %v2026 = vadd.f32 %v1950, %v2006
      %v2027 = vadd.f32 %v1951, %v2009
      %v2028 = vadd.f32 %v1952, %v2012
      %v2029 = vlaneseq
      %v2030 = vshrl.u32 %v2029, 7
      %v2031 = vsub.s32 1, %v2030
      %v2032 = vrot.slane %v845, %v2031
      %v2033 = vmul.f32 %v1841, %v2032
      %v2034 = vmul.f32 %v1842, %v2032
      %v2035 = vmul.f32 %v1843, %v2032
      %v2036 = vmul.f32 %v1844, %v2032
      %v2037 = vmul.f32 %v1845, %v2032
      %v2038 = vmul.f32 %v1846, %v2032
      %v2039 = vmul.f32 %v1847, %v2032
      %v2040 = vmul.f32 %v1848, %v2032
      %v2041 = vmul.f32 %v1849, %v2032
      %v2042 = vmul.f32 %v1850, %v2032
      %v2043 = vmul.f32 %v1851, %v2032
      %v2044 = vmul.f32 %v1852, %v2032
      %v2045 = vmul.f32 %v1853, %v2032
      %v2046 = vmul.f32 %v1854, %v2032
      %v2047 = vmul.f32 %v1855, %v2032
      %v2048 = vmul.f32 %v1856, %v2032
      %v2065 = vrot.slane %v2033, 3
      %v2066 = vrot.slane %v2034, 3
      %v2067 = vsel %vm1076, %v2065, %v2066
      %v2068 = vrot.slane %v2035, 3
      %v2069 = vrot.slane %v2036, 3
      %v2070 = vsel %vm1076, %v2068, %v2069
      %v2071 = vrot.slane %v2037, 3
      %v2072 = vrot.slane %v2038, 3
      %v2073 = vsel %vm1076, %v2071, %v2072
      %v2074 = vrot.slane %v2039, 3
      %v2075 = vrot.slane %v2040, 3
      %v2076 = vsel %vm1076, %v2074, %v2075
      %v2077 = vrot.slane %v2041, 3
      %v2078 = vrot.slane %v2042, 3
      %v2079 = vsel %vm1076, %v2077, %v2078
      %v2080 = vrot.slane %v2043, 3
      %v2081 = vrot.slane %v2044, 3
      %v2082 = vsel %vm1076, %v2080, %v2081
      %v2083 = vrot.slane %v2045, 3
      %v2084 = vrot.slane %v2046, 3
      %v2085 = vsel %vm1076, %v2083, %v2084
      %v2086 = vrot.slane %v2047, 3
      %v2087 = vrot.slane %v2048, 3
      %v2088 = vsel %vm1076, %v2086, %v2087
      %v2097 = vadd.f32 %v2021, %v2067
      %v2098 = vadd.f32 %v2022, %v2070
      %v2099 = vadd.f32 %v2023, %v2073
      %v2100 = vadd.f32 %v2024, %v2076
      %v2101 = vadd.f32 %v2025, %v2079
      %v2102 = vadd.f32 %v2026, %v2082
      %v2103 = vadd.f32 %v2027, %v2085
      %v2104 = vadd.f32 %v2028, %v2088
      %v2105 = vlaneseq
      %v2106 = vshrl.u32 %v2105, 7
      %v2107 = vsub.s32 2, %v2106
      %v2108 = vrot.slane %v845, %v2107
      %v2109 = vmul.f32 %v1841, %v2108
      %v2110 = vmul.f32 %v1842, %v2108
      %v2111 = vmul.f32 %v1843, %v2108
      %v2112 = vmul.f32 %v1844, %v2108
      %v2113 = vmul.f32 %v1845, %v2108
      %v2114 = vmul.f32 %v1846, %v2108
      %v2115 = vmul.f32 %v1847, %v2108
      %v2116 = vmul.f32 %v1848, %v2108
      %v2117 = vmul.f32 %v1849, %v2108
      %v2118 = vmul.f32 %v1850, %v2108
      %v2119 = vmul.f32 %v1851, %v2108
      %v2120 = vmul.f32 %v1852, %v2108
      %v2121 = vmul.f32 %v1853, %v2108
      %v2122 = vmul.f32 %v1854, %v2108
      %v2123 = vmul.f32 %v1855, %v2108
      %v2124 = vmul.f32 %v1856, %v2108
      %v2141 = vrot.slane %v2109, 4
      %v2142 = vrot.slane %v2110, 4
      %v2143 = vsel %vm1153, %v2141, %v2142
      %v2144 = vrot.slane %v2111, 4
      %v2145 = vrot.slane %v2112, 4
      %v2146 = vsel %vm1153, %v2144, %v2145
      %v2147 = vrot.slane %v2113, 4
      %v2148 = vrot.slane %v2114, 4
      %v2149 = vsel %vm1153, %v2147, %v2148
      %v2150 = vrot.slane %v2115, 4
      %v2151 = vrot.slane %v2116, 4
      %v2152 = vsel %vm1153, %v2150, %v2151
      %v2153 = vrot.slane %v2117, 4
      %v2154 = vrot.slane %v2118, 4
      %v2155 = vsel %vm1153, %v2153, %v2154
      %v2156 = vrot.slane %v2119, 4
      %v2157 = vrot.slane %v2120, 4
      %v2158 = vsel %vm1153, %v2156, %v2157
      %v2159 = vrot.slane %v2121, 4
      %v2160 = vrot.slane %v2122, 4
      %v2161 = vsel %vm1153, %v2159, %v2160
      %v2162 = vrot.slane %v2123, 4
      %v2163 = vrot.slane %v2124, 4
      %v2164 = vsel %vm1153, %v2162, %v2163
      %v2173 = vadd.f32 %v2097, %v2143
      %v2174 = vadd.f32 %v2098, %v2146
      %v2175 = vadd.f32 %v2099, %v2149
      %v2176 = vadd.f32 %v2100, %v2152
      %v2177 = vadd.f32 %v2101, %v2155
      %v2178 = vadd.f32 %v2102, %v2158
      %v2179 = vadd.f32 %v2103, %v2161
      %v2180 = vadd.f32 %v2104, %v2164
      %v2181 = vlaneseq
      %v2182 = vshrl.u32 %v2181, 7
      %v2183 = vsub.s32 3, %v2182
      %v2184 = vrot.slane %v845, %v2183
      %v2185 = vmul.f32 %v1841, %v2184
      %v2186 = vmul.f32 %v1842, %v2184
      %v2187 = vmul.f32 %v1843, %v2184
      %v2188 = vmul.f32 %v1844, %v2184
      %v2189 = vmul.f32 %v1845, %v2184
      %v2190 = vmul.f32 %v1846, %v2184
      %v2191 = vmul.f32 %v1847, %v2184
      %v2192 = vmul.f32 %v1848, %v2184
      %v2193 = vmul.f32 %v1849, %v2184
      %v2194 = vmul.f32 %v1850, %v2184
      %v2195 = vmul.f32 %v1851, %v2184
      %v2196 = vmul.f32 %v1852, %v2184
      %v2197 = vmul.f32 %v1853, %v2184
      %v2198 = vmul.f32 %v1854, %v2184
      %v2199 = vmul.f32 %v1855, %v2184
      %v2200 = vmul.f32 %v1856, %v2184
      %v2217 = vrot.slane %v2185, 5
      %v2218 = vrot.slane %v2186, 5
      %v2219 = vsel %vm671, %v2217, %v2218
      %v2220 = vrot.slane %v2187, 5
      %v2221 = vrot.slane %v2188, 5
      %v2222 = vsel %vm671, %v2220, %v2221
      %v2223 = vrot.slane %v2189, 5
      %v2224 = vrot.slane %v2190, 5
      %v2225 = vsel %vm671, %v2223, %v2224
      %v2226 = vrot.slane %v2191, 5
      %v2227 = vrot.slane %v2192, 5
      %v2228 = vsel %vm671, %v2226, %v2227
      %v2229 = vrot.slane %v2193, 5
      %v2230 = vrot.slane %v2194, 5
      %v2231 = vsel %vm671, %v2229, %v2230
      %v2232 = vrot.slane %v2195, 5
      %v2233 = vrot.slane %v2196, 5
      %v2234 = vsel %vm671, %v2232, %v2233
      %v2235 = vrot.slane %v2197, 5
      %v2236 = vrot.slane %v2198, 5
      %v2237 = vsel %vm671, %v2235, %v2236
      %v2238 = vrot.slane %v2199, 5
      %v2239 = vrot.slane %v2200, 5
      %v2240 = vsel %vm671, %v2238, %v2239
      %v2249 = vadd.f32 %v2173, %v2219
      %v2250 = vadd.f32 %v2174, %v2222
      %v2251 = vadd.f32 %v2175, %v2225
      %v2252 = vadd.f32 %v2176, %v2228
      %v2253 = vadd.f32 %v2177, %v2231
      %v2254 = vadd.f32 %v2178, %v2234
      %v2255 = vadd.f32 %v2179, %v2237
      %v2256 = vadd.f32 %v2180, %v2240
      %v2257 = vlaneseq
      %v2258 = vshrl.u32 %v2257, 7
      %v2259 = vsub.s32 4, %v2258
      %v2260 = vrot.slane %v845, %v2259
      %v2261 = vmul.f32 %v1841, %v2260
      %v2262 = vmul.f32 %v1842, %v2260
      %v2263 = vmul.f32 %v1843, %v2260
      %v2264 = vmul.f32 %v1844, %v2260
      %v2265 = vmul.f32 %v1845, %v2260
      %v2266 = vmul.f32 %v1846, %v2260
      %v2267 = vmul.f32 %v1847, %v2260
      %v2268 = vmul.f32 %v1848, %v2260
      %v2269 = vmul.f32 %v1849, %v2260
      %v2270 = vmul.f32 %v1850, %v2260
      %v2271 = vmul.f32 %v1851, %v2260
      %v2272 = vmul.f32 %v1852, %v2260
      %v2273 = vmul.f32 %v1853, %v2260
      %v2274 = vmul.f32 %v1854, %v2260
      %v2275 = vmul.f32 %v1855, %v2260
      %v2276 = vmul.f32 %v1856, %v2260
      %v2293 = vrot.slane %v2261, 6
      %v2294 = vrot.slane %v2262, 6
      %v2295 = vsel %vm1306, %v2293, %v2294
      %v2296 = vrot.slane %v2263, 6
      %v2297 = vrot.slane %v2264, 6
      %v2298 = vsel %vm1306, %v2296, %v2297
      %v2299 = vrot.slane %v2265, 6
      %v2300 = vrot.slane %v2266, 6
      %v2301 = vsel %vm1306, %v2299, %v2300
      %v2302 = vrot.slane %v2267, 6
      %v2303 = vrot.slane %v2268, 6
      %v2304 = vsel %vm1306, %v2302, %v2303
      %v2305 = vrot.slane %v2269, 6
      %v2306 = vrot.slane %v2270, 6
      %v2307 = vsel %vm1306, %v2305, %v2306
      %v2308 = vrot.slane %v2271, 6
      %v2309 = vrot.slane %v2272, 6
      %v2310 = vsel %vm1306, %v2308, %v2309
      %v2311 = vrot.slane %v2273, 6
      %v2312 = vrot.slane %v2274, 6
      %v2313 = vsel %vm1306, %v2311, %v2312
      %v2314 = vrot.slane %v2275, 6
      %v2315 = vrot.slane %v2276, 6
      %v2316 = vsel %vm1306, %v2314, %v2315
      %v2325 = vadd.f32 %v2249, %v2295
      %v2326 = vadd.f32 %v2250, %v2298
      %v2327 = vadd.f32 %v2251, %v2301
      %v2328 = vadd.f32 %v2252, %v2304
      %v2329 = vadd.f32 %v2253, %v2307
      %v2330 = vadd.f32 %v2254, %v2310
      %v2331 = vadd.f32 %v2255, %v2313
      %v2332 = vadd.f32 %v2256, %v2316
      %v2333 = vld [vmem:[%s834] sm:$0xff]
      %v2334 = vld [vmem:[%s834 + $0x8] sm:$0x3f]
      %v2335 = vld [vmem:[%s834 + $0x10] sm:$0xff]
      %v2336 = vld [vmem:[%s834 + $0x18] sm:$0x3f]
      %v2337 = vld [vmem:[%s834 + $0x20] sm:$0xff]
      %v2338 = vld [vmem:[%s834 + $0x28] sm:$0x3f]
      %v2339 = vld [vmem:[%s834 + $0x30] sm:$0xff]
      %v2340 = vld [vmem:[%s834 + $0x38] sm:$0x3f]
      %v2341 = vld [vmem:[%s834 + $0x40] sm:$0xff]
      %v2342 = vld [vmem:[%s834 + $0x48] sm:$0x3f]
      %v2343 = vld [vmem:[%s834 + $0x50] sm:$0xff]
      %v2344 = vld [vmem:[%s834 + $0x58] sm:$0x3f]
      %v2345 = vld [vmem:[%s834 + $0x60] sm:$0xff]
      %v2346 = vld [vmem:[%s834 + $0x68] sm:$0x3f]
      %v2347 = vld [vmem:[%s834 + $0x70] sm:$0xff]
      %v2348 = vld [vmem:[%s834 + $0x78] sm:$0x3f]
      %v2349 = vlaneseq
      %v2350 = vshrl.u32 %v2349, 7
      %v2351 = vsub.s32 5, %v2350
      %v2352 = vrot.slane %v845, %v2351
      %v2353 = vmul.f32 %v2333, %v2352
      %v2354 = vmul.f32 %v2335, %v2352
      %v2355 = vmul.f32 %v2337, %v2352
      %v2356 = vmul.f32 %v2339, %v2352
      %v2357 = vmul.f32 %v2341, %v2352
      %v2358 = vmul.f32 %v2343, %v2352
      %v2359 = vmul.f32 %v2345, %v2352
      %v2360 = vmul.f32 %v2347, %v2352
      %v2361 = vadd.f32 %v2325, %v2353
      %v2362 = vadd.f32 %v2326, %v2354
      %v2363 = vadd.f32 %v2327, %v2355
      %v2364 = vadd.f32 %v2328, %v2356
      %v2365 = vadd.f32 %v2329, %v2357
      %v2366 = vadd.f32 %v2330, %v2358
      %v2367 = vadd.f32 %v2331, %v2359
      %v2368 = vadd.f32 %v2332, %v2360
      %v2369 = vlaneseq
      %v2370 = vshrl.u32 %v2369, 7
      %v2371 = vsub.s32 6, %v2370
      %v2372 = vrot.slane %v845, %v2371
      %v2373 = vmul.f32 %v2333, %v2372
      %v2374 = vmul.f32 %v2334, %v2372
      %v2375 = vmul.f32 %v2335, %v2372
      %v2376 = vmul.f32 %v2336, %v2372
      %v2377 = vmul.f32 %v2337, %v2372
      %v2378 = vmul.f32 %v2338, %v2372
      %v2379 = vmul.f32 %v2339, %v2372
      %v2380 = vmul.f32 %v2340, %v2372
      %v2381 = vmul.f32 %v2341, %v2372
      %v2382 = vmul.f32 %v2342, %v2372
      %v2383 = vmul.f32 %v2343, %v2372
      %v2384 = vmul.f32 %v2344, %v2372
      %v2385 = vmul.f32 %v2345, %v2372
      %v2386 = vmul.f32 %v2346, %v2372
      %v2387 = vmul.f32 %v2347, %v2372
      %v2388 = vmul.f32 %v2348, %v2372
      %v2405 = vrot.slane %v2373, 1
      %v2406 = vrot.slane %v2374, 1
      %v2407 = vsel %vm922, %v2405, %v2406
      %v2408 = vrot.slane %v2375, 1
      %v2409 = vrot.slane %v2376, 1
      %v2410 = vsel %vm922, %v2408, %v2409
      %v2411 = vrot.slane %v2377, 1
      %v2412 = vrot.slane %v2378, 1
      %v2413 = vsel %vm922, %v2411, %v2412
      %v2414 = vrot.slane %v2379, 1
      %v2415 = vrot.slane %v2380, 1
      %v2416 = vsel %vm922, %v2414, %v2415
      %v2417 = vrot.slane %v2381, 1
      %v2418 = vrot.slane %v2382, 1
      %v2419 = vsel %vm922, %v2417, %v2418
      %v2420 = vrot.slane %v2383, 1
      %v2421 = vrot.slane %v2384, 1
      %v2422 = vsel %vm922, %v2420, %v2421
      %v2423 = vrot.slane %v2385, 1
      %v2424 = vrot.slane %v2386, 1
      %v2425 = vsel %vm922, %v2423, %v2424
      %v2426 = vrot.slane %v2387, 1
      %v2427 = vrot.slane %v2388, 1
      %v2428 = vsel %vm922, %v2426, %v2427
      %v2437 = vadd.f32 %v2361, %v2407
      %v2438 = vadd.f32 %v2362, %v2410
      %v2439 = vadd.f32 %v2363, %v2413
      %v2440 = vadd.f32 %v2364, %v2416
      %v2441 = vadd.f32 %v2365, %v2419
      %v2442 = vadd.f32 %v2366, %v2422
      %v2443 = vadd.f32 %v2367, %v2425
      %v2444 = vadd.f32 %v2368, %v2428
      %v2445 = vlaneseq
      %v2446 = vshrl.u32 %v2445, 7
      %v2447 = vsub.s32 7, %v2446
      %v2448 = vrot.slane %v845, %v2447
      %v2449 = vmul.f32 %v2333, %v2448
      %v2450 = vmul.f32 %v2334, %v2448
      %v2451 = vmul.f32 %v2335, %v2448
      %v2452 = vmul.f32 %v2336, %v2448
      %v2453 = vmul.f32 %v2337, %v2448
      %v2454 = vmul.f32 %v2338, %v2448
      %v2455 = vmul.f32 %v2339, %v2448
      %v2456 = vmul.f32 %v2340, %v2448
      %v2457 = vmul.f32 %v2341, %v2448
      %v2458 = vmul.f32 %v2342, %v2448
      %v2459 = vmul.f32 %v2343, %v2448
      %v2460 = vmul.f32 %v2344, %v2448
      %v2461 = vmul.f32 %v2345, %v2448
      %v2462 = vmul.f32 %v2346, %v2448
      %v2463 = vmul.f32 %v2347, %v2448
      %v2464 = vmul.f32 %v2348, %v2448
      %v2481 = vrot.slane %v2449, 2
      %v2482 = vrot.slane %v2450, 2
      %v2483 = vsel %vm999, %v2481, %v2482
      %v2484 = vrot.slane %v2451, 2
      %v2485 = vrot.slane %v2452, 2
      %v2486 = vsel %vm999, %v2484, %v2485
      %v2487 = vrot.slane %v2453, 2
      %v2488 = vrot.slane %v2454, 2
      %v2489 = vsel %vm999, %v2487, %v2488
      %v2490 = vrot.slane %v2455, 2
      %v2491 = vrot.slane %v2456, 2
      %v2492 = vsel %vm999, %v2490, %v2491
      %v2493 = vrot.slane %v2457, 2
      %v2494 = vrot.slane %v2458, 2
      %v2495 = vsel %vm999, %v2493, %v2494
      %v2496 = vrot.slane %v2459, 2
      %v2497 = vrot.slane %v2460, 2
      %v2498 = vsel %vm999, %v2496, %v2497
      %v2499 = vrot.slane %v2461, 2
      %v2500 = vrot.slane %v2462, 2
      %v2501 = vsel %vm999, %v2499, %v2500
      %v2502 = vrot.slane %v2463, 2
      %v2503 = vrot.slane %v2464, 2
      %v2504 = vsel %vm999, %v2502, %v2503
      %v2513 = vadd.f32 %v2437, %v2483
      %v2514 = vadd.f32 %v2438, %v2486
      %v2515 = vadd.f32 %v2439, %v2489
      %v2516 = vadd.f32 %v2440, %v2492
      %v2517 = vadd.f32 %v2441, %v2495
      %v2518 = vadd.f32 %v2442, %v2498
      %v2519 = vadd.f32 %v2443, %v2501
      %v2520 = vadd.f32 %v2444, %v2504
      %v2521 = vlaneseq
      %v2522 = vshrl.u32 %v2521, 7
      %v2523 = vsub.s32 0, %v2522
      %v2524 = vrot.slane %v846, %v2523
      %v2525 = vmul.f32 %v2333, %v2524
      %v2526 = vmul.f32 %v2334, %v2524
      %v2527 = vmul.f32 %v2335, %v2524
      %v2528 = vmul.f32 %v2336, %v2524
      %v2529 = vmul.f32 %v2337, %v2524
      %v2530 = vmul.f32 %v2338, %v2524
      %v2531 = vmul.f32 %v2339, %v2524
      %v2532 = vmul.f32 %v2340, %v2524
      %v2533 = vmul.f32 %v2341, %v2524
      %v2534 = vmul.f32 %v2342, %v2524
      %v2535 = vmul.f32 %v2343, %v2524
      %v2536 = vmul.f32 %v2344, %v2524
      %v2537 = vmul.f32 %v2345, %v2524
      %v2538 = vmul.f32 %v2346, %v2524
      %v2539 = vmul.f32 %v2347, %v2524
      %v2540 = vmul.f32 %v2348, %v2524
      %v2557 = vrot.slane %v2525, 3
      %v2558 = vrot.slane %v2526, 3
      %v2559 = vsel %vm1076, %v2557, %v2558
      %v2560 = vrot.slane %v2527, 3
      %v2561 = vrot.slane %v2528, 3
      %v2562 = vsel %vm1076, %v2560, %v2561
      %v2563 = vrot.slane %v2529, 3
      %v2564 = vrot.slane %v2530, 3
      %v2565 = vsel %vm1076, %v2563, %v2564
      %v2566 = vrot.slane %v2531, 3
      %v2567 = vrot.slane %v2532, 3
      %v2568 = vsel %vm1076, %v2566, %v2567
      %v2569 = vrot.slane %v2533, 3
      %v2570 = vrot.slane %v2534, 3
      %v2571 = vsel %vm1076, %v2569, %v2570
      %v2572 = vrot.slane %v2535, 3
      %v2573 = vrot.slane %v2536, 3
      %v2574 = vsel %vm1076, %v2572, %v2573
      %v2575 = vrot.slane %v2537, 3
      %v2576 = vrot.slane %v2538, 3
      %v2577 = vsel %vm1076, %v2575, %v2576
      %v2578 = vrot.slane %v2539, 3
      %v2579 = vrot.slane %v2540, 3
      %v2580 = vsel %vm1076, %v2578, %v2579
      %v2589 = vadd.f32 %v2513, %v2559
      %v2590 = vadd.f32 %v2514, %v2562
      %v2591 = vadd.f32 %v2515, %v2565
      %v2592 = vadd.f32 %v2516, %v2568
      %v2593 = vadd.f32 %v2517, %v2571
      %v2594 = vadd.f32 %v2518, %v2574
      %v2595 = vadd.f32 %v2519, %v2577
      %v2596 = vadd.f32 %v2520, %v2580
      %v2597 = vlaneseq
      %v2598 = vshrl.u32 %v2597, 7
      %v2599 = vsub.s32 1, %v2598
      %v2600 = vrot.slane %v846, %v2599
      %v2601 = vmul.f32 %v2333, %v2600
      %v2602 = vmul.f32 %v2334, %v2600
      %v2603 = vmul.f32 %v2335, %v2600
      %v2604 = vmul.f32 %v2336, %v2600
      %v2605 = vmul.f32 %v2337, %v2600
      %v2606 = vmul.f32 %v2338, %v2600
      %v2607 = vmul.f32 %v2339, %v2600
      %v2608 = vmul.f32 %v2340, %v2600
      %v2609 = vmul.f32 %v2341, %v2600
      %v2610 = vmul.f32 %v2342, %v2600
      %v2611 = vmul.f32 %v2343, %v2600
      %v2612 = vmul.f32 %v2344, %v2600
      %v2613 = vmul.f32 %v2345, %v2600
      %v2614 = vmul.f32 %v2346, %v2600
      %v2615 = vmul.f32 %v2347, %v2600
      %v2616 = vmul.f32 %v2348, %v2600
      %v2633 = vrot.slane %v2601, 4
      %v2634 = vrot.slane %v2602, 4
      %v2635 = vsel %vm1153, %v2633, %v2634
      %v2636 = vrot.slane %v2603, 4
      %v2637 = vrot.slane %v2604, 4
      %v2638 = vsel %vm1153, %v2636, %v2637
      %v2639 = vrot.slane %v2605, 4
      %v2640 = vrot.slane %v2606, 4
      %v2641 = vsel %vm1153, %v2639, %v2640
      %v2642 = vrot.slane %v2607, 4
      %v2643 = vrot.slane %v2608, 4
      %v2644 = vsel %vm1153, %v2642, %v2643
      %v2645 = vrot.slane %v2609, 4
      %v2646 = vrot.slane %v2610, 4
      %v2647 = vsel %vm1153, %v2645, %v2646
      %v2648 = vrot.slane %v2611, 4
      %v2649 = vrot.slane %v2612, 4
      %v2650 = vsel %vm1153, %v2648, %v2649
      %v2651 = vrot.slane %v2613, 4
      %v2652 = vrot.slane %v2614, 4
      %v2653 = vsel %vm1153, %v2651, %v2652
      %v2654 = vrot.slane %v2615, 4
      %v2655 = vrot.slane %v2616, 4
      %v2656 = vsel %vm1153, %v2654, %v2655
      %v2665 = vadd.f32 %v2589, %v2635
      %v2666 = vadd.f32 %v2590, %v2638
      %v2667 = vadd.f32 %v2591, %v2641
      %v2668 = vadd.f32 %v2592, %v2644
      %v2669 = vadd.f32 %v2593, %v2647
      %v2670 = vadd.f32 %v2594, %v2650
      %v2671 = vadd.f32 %v2595, %v2653
      %v2672 = vadd.f32 %v2596, %v2656
      %v2673 = vlaneseq
      %v2674 = vshrl.u32 %v2673, 7
      %v2675 = vsub.s32 2, %v2674
      %v2676 = vrot.slane %v846, %v2675
      %v2677 = vmul.f32 %v2333, %v2676
      %v2678 = vmul.f32 %v2334, %v2676
      %v2679 = vmul.f32 %v2335, %v2676
      %v2680 = vmul.f32 %v2336, %v2676
      %v2681 = vmul.f32 %v2337, %v2676
      %v2682 = vmul.f32 %v2338, %v2676
      %v2683 = vmul.f32 %v2339, %v2676
      %v2684 = vmul.f32 %v2340, %v2676
      %v2685 = vmul.f32 %v2341, %v2676
      %v2686 = vmul.f32 %v2342, %v2676
      %v2687 = vmul.f32 %v2343, %v2676
      %v2688 = vmul.f32 %v2344, %v2676
      %v2689 = vmul.f32 %v2345, %v2676
      %v2690 = vmul.f32 %v2346, %v2676
      %v2691 = vmul.f32 %v2347, %v2676
      %v2692 = vmul.f32 %v2348, %v2676
      %v2709 = vrot.slane %v2677, 5
      %v2710 = vrot.slane %v2678, 5
      %v2711 = vsel %vm671, %v2709, %v2710
      %v2712 = vrot.slane %v2679, 5
      %v2713 = vrot.slane %v2680, 5
      %v2714 = vsel %vm671, %v2712, %v2713
      %v2715 = vrot.slane %v2681, 5
      %v2716 = vrot.slane %v2682, 5
      %v2717 = vsel %vm671, %v2715, %v2716
      %v2718 = vrot.slane %v2683, 5
      %v2719 = vrot.slane %v2684, 5
      %v2720 = vsel %vm671, %v2718, %v2719
      %v2721 = vrot.slane %v2685, 5
      %v2722 = vrot.slane %v2686, 5
      %v2723 = vsel %vm671, %v2721, %v2722
      %v2724 = vrot.slane %v2687, 5
      %v2725 = vrot.slane %v2688, 5
      %v2726 = vsel %vm671, %v2724, %v2725
      %v2727 = vrot.slane %v2689, 5
      %v2728 = vrot.slane %v2690, 5
      %v2729 = vsel %vm671, %v2727, %v2728
      %v2730 = vrot.slane %v2691, 5
      %v2731 = vrot.slane %v2692, 5
      %v2732 = vsel %vm671, %v2730, %v2731
      %v2741 = vadd.f32 %v2665, %v2711
      %v2742 = vadd.f32 %v2666, %v2714
      %v2743 = vadd.f32 %v2667, %v2717
      %v2744 = vadd.f32 %v2668, %v2720
      %v2745 = vadd.f32 %v2669, %v2723
      %v2746 = vadd.f32 %v2670, %v2726
      %v2747 = vadd.f32 %v2671, %v2729
      %v2748 = vadd.f32 %v2672, %v2732
      %v2749 = vlaneseq
      %v2750 = vshrl.u32 %v2749, 7
      %v2751 = vsub.s32 3, %v2750
      %v2752 = vrot.slane %v846, %v2751
      %v2753 = vmul.f32 %v2333, %v2752
      %v2754 = vmul.f32 %v2334, %v2752
      %v2755 = vmul.f32 %v2335, %v2752
      %v2756 = vmul.f32 %v2336, %v2752
      %v2757 = vmul.f32 %v2337, %v2752
      %v2758 = vmul.f32 %v2338, %v2752
      %v2759 = vmul.f32 %v2339, %v2752
      %v2760 = vmul.f32 %v2340, %v2752
      %v2761 = vmul.f32 %v2341, %v2752
      %v2762 = vmul.f32 %v2342, %v2752
      %v2763 = vmul.f32 %v2343, %v2752
      %v2764 = vmul.f32 %v2344, %v2752
      %v2765 = vmul.f32 %v2345, %v2752
      %v2766 = vmul.f32 %v2346, %v2752
      %v2767 = vmul.f32 %v2347, %v2752
      %v2768 = vmul.f32 %v2348, %v2752
      %v2785 = vrot.slane %v2753, 6
      %v2786 = vrot.slane %v2754, 6
      %v2787 = vsel %vm1306, %v2785, %v2786
      %v2788 = vrot.slane %v2755, 6
      %v2789 = vrot.slane %v2756, 6
      %v2790 = vsel %vm1306, %v2788, %v2789
      %v2791 = vrot.slane %v2757, 6
      %v2792 = vrot.slane %v2758, 6
      %v2793 = vsel %vm1306, %v2791, %v2792
      %v2794 = vrot.slane %v2759, 6
      %v2795 = vrot.slane %v2760, 6
      %v2796 = vsel %vm1306, %v2794, %v2795
      %v2797 = vrot.slane %v2761, 6
      %v2798 = vrot.slane %v2762, 6
      %v2799 = vsel %vm1306, %v2797, %v2798
      %v2800 = vrot.slane %v2763, 6
      %v2801 = vrot.slane %v2764, 6
      %v2802 = vsel %vm1306, %v2800, %v2801
      %v2803 = vrot.slane %v2765, 6
      %v2804 = vrot.slane %v2766, 6
      %v2805 = vsel %vm1306, %v2803, %v2804
      %v2806 = vrot.slane %v2767, 6
      %v2807 = vrot.slane %v2768, 6
      %v2808 = vsel %vm1306, %v2806, %v2807
      %v2817 = vadd.f32 %v2741, %v2787
      %v2818 = vadd.f32 %v2742, %v2790
      %v2819 = vadd.f32 %v2743, %v2793
      %v2820 = vadd.f32 %v2744, %v2796
      %v2821 = vadd.f32 %v2745, %v2799
      %v2822 = vadd.f32 %v2746, %v2802
      %v2823 = vadd.f32 %v2747, %v2805
      %v2824 = vadd.f32 %v2748, %v2808
      %s2825 = scalar_lea.vmem [#allocation2], 64
      %v2826 = vld [vmem:[%s2825] sm:$0xff]
      %v2827 = vld [vmem:[%s2825 + $0x8] sm:$0x3f]
      %v2828 = vld [vmem:[%s2825 + $0x10] sm:$0xff]
      %v2829 = vld [vmem:[%s2825 + $0x18] sm:$0x3f]
      %v2830 = vld [vmem:[%s2825 + $0x20] sm:$0xff]
      %v2831 = vld [vmem:[%s2825 + $0x28] sm:$0x3f]
      %v2832 = vld [vmem:[%s2825 + $0x30] sm:$0xff]
      %v2833 = vld [vmem:[%s2825 + $0x38] sm:$0x3f]
      %v2834 = vld [vmem:[%s2825 + $0x40] sm:$0xff]
      %v2835 = vld [vmem:[%s2825 + $0x48] sm:$0x3f]
      %v2836 = vld [vmem:[%s2825 + $0x50] sm:$0xff]
      %v2837 = vld [vmem:[%s2825 + $0x58] sm:$0x3f]
      %v2838 = vld [vmem:[%s2825 + $0x60] sm:$0xff]
      %v2839 = vld [vmem:[%s2825 + $0x68] sm:$0x3f]
      %v2840 = vld [vmem:[%s2825 + $0x70] sm:$0xff]
      %v2841 = vld [vmem:[%s2825 + $0x78] sm:$0x3f]
      %v2842 = vlaneseq
      %v2843 = vshrl.u32 %v2842, 7
      %v2844 = vsub.s32 4, %v2843
      %v2845 = vrot.slane %v846, %v2844
      %v2846 = vmul.f32 %v2826, %v2845
      %v2847 = vmul.f32 %v2828, %v2845
      %v2848 = vmul.f32 %v2830, %v2845
      %v2849 = vmul.f32 %v2832, %v2845
      %v2850 = vmul.f32 %v2834, %v2845
      %v2851 = vmul.f32 %v2836, %v2845
      %v2852 = vmul.f32 %v2838, %v2845
      %v2853 = vmul.f32 %v2840, %v2845
      %v2854 = vadd.f32 %v2817, %v2846
      %v2855 = vadd.f32 %v2818, %v2847
      %v2856 = vadd.f32 %v2819, %v2848
      %v2857 = vadd.f32 %v2820, %v2849
      %v2858 = vadd.f32 %v2821, %v2850
      %v2859 = vadd.f32 %v2822, %v2851
      %v2860 = vadd.f32 %v2823, %v2852
      %v2861 = vadd.f32 %v2824, %v2853
      %v2862 = vlaneseq
      %v2863 = vshrl.u32 %v2862, 7
      %v2864 = vsub.s32 5, %v2863
      %v2865 = vrot.slane %v846, %v2864
      %v2866 = vmul.f32 %v2826, %v2865
      %v2867 = vmul.f32 %v2827, %v2865
      %v2868 = vmul.f32 %v2828, %v2865
      %v2869 = vmul.f32 %v2829, %v2865
      %v2870 = vmul.f32 %v2830, %v2865
      %v2871 = vmul.f32 %v2831, %v2865
      %v2872 = vmul.f32 %v2832, %v2865
      %v2873 = vmul.f32 %v2833, %v2865
      %v2874 = vmul.f32 %v2834, %v2865
      %v2875 = vmul.f32 %v2835, %v2865
      %v2876 = vmul.f32 %v2836, %v2865
      %v2877 = vmul.f32 %v2837, %v2865
      %v2878 = vmul.f32 %v2838, %v2865
      %v2879 = vmul.f32 %v2839, %v2865
      %v2880 = vmul.f32 %v2840, %v2865
      %v2881 = vmul.f32 %v2841, %v2865
      %v2898 = vrot.slane %v2866, 1
      %v2899 = vrot.slane %v2867, 1
      %v2900 = vsel %vm922, %v2898, %v2899
      %v2901 = vrot.slane %v2868, 1
      %v2902 = vrot.slane %v2869, 1
      %v2903 = vsel %vm922, %v2901, %v2902
      %v2904 = vrot.slane %v2870, 1
      %v2905 = vrot.slane %v2871, 1
      %v2906 = vsel %vm922, %v2904, %v2905
      %v2907 = vrot.slane %v2872, 1
      %v2908 = vrot.slane %v2873, 1
      %v2909 = vsel %vm922, %v2907, %v2908
      %v2910 = vrot.slane %v2874, 1
      %v2911 = vrot.slane %v2875, 1
      %v2912 = vsel %vm922, %v2910, %v2911
      %v2913 = vrot.slane %v2876, 1
      %v2914 = vrot.slane %v2877, 1
      %v2915 = vsel %vm922, %v2913, %v2914
      %v2916 = vrot.slane %v2878, 1
      %v2917 = vrot.slane %v2879, 1
      %v2918 = vsel %vm922, %v2916, %v2917
      %v2919 = vrot.slane %v2880, 1
      %v2920 = vrot.slane %v2881, 1
      %v2921 = vsel %vm922, %v2919, %v2920
      %v2930 = vadd.f32 %v2854, %v2900
      %v2931 = vadd.f32 %v2855, %v2903
      %v2932 = vadd.f32 %v2856, %v2906
      %v2933 = vadd.f32 %v2857, %v2909
      %v2934 = vadd.f32 %v2858, %v2912
      %v2935 = vadd.f32 %v2859, %v2915
      %v2936 = vadd.f32 %v2860, %v2918
      %v2937 = vadd.f32 %v2861, %v2921
      %v2938 = vlaneseq
      %v2939 = vshrl.u32 %v2938, 7
      %v2940 = vsub.s32 6, %v2939
      %v2941 = vrot.slane %v846, %v2940
      %v2942 = vmul.f32 %v2826, %v2941
      %v2943 = vmul.f32 %v2827, %v2941
      %v2944 = vmul.f32 %v2828, %v2941
      %v2945 = vmul.f32 %v2829, %v2941
      %v2946 = vmul.f32 %v2830, %v2941
      %v2947 = vmul.f32 %v2831, %v2941
      %v2948 = vmul.f32 %v2832, %v2941
      %v2949 = vmul.f32 %v2833, %v2941
      %v2950 = vmul.f32 %v2834, %v2941
      %v2951 = vmul.f32 %v2835, %v2941
      %v2952 = vmul.f32 %v2836, %v2941
      %v2953 = vmul.f32 %v2837, %v2941
      %v2954 = vmul.f32 %v2838, %v2941
      %v2955 = vmul.f32 %v2839, %v2941
      %v2956 = vmul.f32 %v2840, %v2941
      %v2957 = vmul.f32 %v2841, %v2941
      %v2974 = vrot.slane %v2942, 2
      %v2975 = vrot.slane %v2943, 2
      %v2976 = vsel %vm999, %v2974, %v2975
      %v2977 = vrot.slane %v2944, 2
      %v2978 = vrot.slane %v2945, 2
      %v2979 = vsel %vm999, %v2977, %v2978
      %v2980 = vrot.slane %v2946, 2
      %v2981 = vrot.slane %v2947, 2
      %v2982 = vsel %vm999, %v2980, %v2981
      %v2983 = vrot.slane %v2948, 2
      %v2984 = vrot.slane %v2949, 2
      %v2985 = vsel %vm999, %v2983, %v2984
      %v2986 = vrot.slane %v2950, 2
      %v2987 = vrot.slane %v2951, 2
      %v2988 = vsel %vm999, %v2986, %v2987
      %v2989 = vrot.slane %v2952, 2
      %v2990 = vrot.slane %v2953, 2
      %v2991 = vsel %vm999, %v2989, %v2990
      %v2992 = vrot.slane %v2954, 2
      %v2993 = vrot.slane %v2955, 2
      %v2994 = vsel %vm999, %v2992, %v2993
      %v2995 = vrot.slane %v2956, 2
      %v2996 = vrot.slane %v2957, 2
      %v2997 = vsel %vm999, %v2995, %v2996
      %v3006 = vadd.f32 %v2930, %v2976
      %v3007 = vadd.f32 %v2931, %v2979
      %v3008 = vadd.f32 %v2932, %v2982
      %v3009 = vadd.f32 %v2933, %v2985
      %v3010 = vadd.f32 %v2934, %v2988
      %v3011 = vadd.f32 %v2935, %v2991
      %v3012 = vadd.f32 %v2936, %v2994
      %v3013 = vadd.f32 %v2937, %v2997
      %v3014 = vlaneseq
      %v3015 = vshrl.u32 %v3014, 7
      %v3016 = vsub.s32 7, %v3015
      %v3017 = vrot.slane %v846, %v3016
      %v3018 = vmul.f32 %v2826, %v3017
      %v3019 = vmul.f32 %v2827, %v3017
      %v3020 = vmul.f32 %v2828, %v3017
      %v3021 = vmul.f32 %v2829, %v3017
      %v3022 = vmul.f32 %v2830, %v3017
      %v3023 = vmul.f32 %v2831, %v3017
      %v3024 = vmul.f32 %v2832, %v3017
      %v3025 = vmul.f32 %v2833, %v3017
      %v3026 = vmul.f32 %v2834, %v3017
      %v3027 = vmul.f32 %v2835, %v3017
      %v3028 = vmul.f32 %v2836, %v3017
      %v3029 = vmul.f32 %v2837, %v3017
      %v3030 = vmul.f32 %v2838, %v3017
      %v3031 = vmul.f32 %v2839, %v3017
      %v3032 = vmul.f32 %v2840, %v3017
      %v3033 = vmul.f32 %v2841, %v3017
      %v3050 = vrot.slane %v3018, 3
      %v3051 = vrot.slane %v3019, 3
      %v3052 = vsel %vm1076, %v3050, %v3051
      %v3053 = vrot.slane %v3020, 3
      %v3054 = vrot.slane %v3021, 3
      %v3055 = vsel %vm1076, %v3053, %v3054
      %v3056 = vrot.slane %v3022, 3
      %v3057 = vrot.slane %v3023, 3
      %v3058 = vsel %vm1076, %v3056, %v3057
      %v3059 = vrot.slane %v3024, 3
      %v3060 = vrot.slane %v3025, 3
      %v3061 = vsel %vm1076, %v3059, %v3060
      %v3062 = vrot.slane %v3026, 3
      %v3063 = vrot.slane %v3027, 3
      %v3064 = vsel %vm1076, %v3062, %v3063
      %v3065 = vrot.slane %v3028, 3
      %v3066 = vrot.slane %v3029, 3
      %v3067 = vsel %vm1076, %v3065, %v3066
      %v3068 = vrot.slane %v3030, 3
      %v3069 = vrot.slane %v3031, 3
      %v3070 = vsel %vm1076, %v3068, %v3069
      %v3071 = vrot.slane %v3032, 3
      %v3072 = vrot.slane %v3033, 3
      %v3073 = vsel %vm1076, %v3071, %v3072
      %v3082 = vadd.f32 %v3006, %v3052
      %v3083 = vadd.f32 %v3007, %v3055
      %v3084 = vadd.f32 %v3008, %v3058
      %v3085 = vadd.f32 %v3009, %v3061
      %v3086 = vadd.f32 %v3010, %v3064
      %v3087 = vadd.f32 %v3011, %v3067
      %v3088 = vadd.f32 %v3012, %v3070
      %v3089 = vadd.f32 %v3013, %v3073
      %v3090 = vlaneseq
      %v3091 = vshrl.u32 %v3090, 7
      %v3092 = vsub.s32 0, %v3091
      %v3093 = vrot.slane %v847, %v3092
      %v3094 = vmul.f32 %v2826, %v3093
      %v3095 = vmul.f32 %v2827, %v3093
      %v3096 = vmul.f32 %v2828, %v3093
      %v3097 = vmul.f32 %v2829, %v3093
      %v3098 = vmul.f32 %v2830, %v3093
      %v3099 = vmul.f32 %v2831, %v3093
      %v3100 = vmul.f32 %v2832, %v3093
      %v3101 = vmul.f32 %v2833, %v3093
      %v3102 = vmul.f32 %v2834, %v3093
      %v3103 = vmul.f32 %v2835, %v3093
      %v3104 = vmul.f32 %v2836, %v3093
      %v3105 = vmul.f32 %v2837, %v3093
      %v3106 = vmul.f32 %v2838, %v3093
      %v3107 = vmul.f32 %v2839, %v3093
      %v3108 = vmul.f32 %v2840, %v3093
      %v3109 = vmul.f32 %v2841, %v3093
      %v3126 = vrot.slane %v3094, 4
      %v3127 = vrot.slane %v3095, 4
      %v3128 = vsel %vm1153, %v3126, %v3127
      %v3129 = vrot.slane %v3096, 4
      %v3130 = vrot.slane %v3097, 4
      %v3131 = vsel %vm1153, %v3129, %v3130
      %v3132 = vrot.slane %v3098, 4
      %v3133 = vrot.slane %v3099, 4
      %v3134 = vsel %vm1153, %v3132, %v3133
      %v3135 = vrot.slane %v3100, 4
      %v3136 = vrot.slane %v3101, 4
      %v3137 = vsel %vm1153, %v3135, %v3136
      %v3138 = vrot.slane %v3102, 4
      %v3139 = vrot.slane %v3103, 4
      %v3140 = vsel %vm1153, %v3138, %v3139
      %v3141 = vrot.slane %v3104, 4
      %v3142 = vrot.slane %v3105, 4
      %v3143 = vsel %vm1153, %v3141, %v3142
      %v3144 = vrot.slane %v3106, 4
      %v3145 = vrot.slane %v3107, 4
      %v3146 = vsel %vm1153, %v3144, %v3145
      %v3147 = vrot.slane %v3108, 4
      %v3148 = vrot.slane %v3109, 4
      %v3149 = vsel %vm1153, %v3147, %v3148
      %v3158 = vadd.f32 %v3082, %v3128
      %v3159 = vadd.f32 %v3083, %v3131
      %v3160 = vadd.f32 %v3084, %v3134
      %v3161 = vadd.f32 %v3085, %v3137
      %v3162 = vadd.f32 %v3086, %v3140
      %v3163 = vadd.f32 %v3087, %v3143
      %v3164 = vadd.f32 %v3088, %v3146
      %v3165 = vadd.f32 %v3089, %v3149
      %v3166 = vlaneseq
      %v3167 = vshrl.u32 %v3166, 7
      %v3168 = vsub.s32 1, %v3167
      %v3169 = vrot.slane %v847, %v3168
      %v3170 = vmul.f32 %v2826, %v3169
      %v3171 = vmul.f32 %v2827, %v3169
      %v3172 = vmul.f32 %v2828, %v3169
      %v3173 = vmul.f32 %v2829, %v3169
      %v3174 = vmul.f32 %v2830, %v3169
      %v3175 = vmul.f32 %v2831, %v3169
      %v3176 = vmul.f32 %v2832, %v3169
      %v3177 = vmul.f32 %v2833, %v3169
      %v3178 = vmul.f32 %v2834, %v3169
      %v3179 = vmul.f32 %v2835, %v3169
      %v3180 = vmul.f32 %v2836, %v3169
      %v3181 = vmul.f32 %v2837, %v3169
      %v3182 = vmul.f32 %v2838, %v3169
      %v3183 = vmul.f32 %v2839, %v3169
      %v3184 = vmul.f32 %v2840, %v3169
      %v3185 = vmul.f32 %v2841, %v3169
      %v3202 = vrot.slane %v3170, 5
      %v3203 = vrot.slane %v3171, 5
      %v3204 = vsel %vm671, %v3202, %v3203
      %v3205 = vrot.slane %v3172, 5
      %v3206 = vrot.slane %v3173, 5
      %v3207 = vsel %vm671, %v3205, %v3206
      %v3208 = vrot.slane %v3174, 5
      %v3209 = vrot.slane %v3175, 5
      %v3210 = vsel %vm671, %v3208, %v3209
      %v3211 = vrot.slane %v3176, 5
      %v3212 = vrot.slane %v3177, 5
      %v3213 = vsel %vm671, %v3211, %v3212
      %v3214 = vrot.slane %v3178, 5
      %v3215 = vrot.slane %v3179, 5
      %v3216 = vsel %vm671, %v3214, %v3215
      %v3217 = vrot.slane %v3180, 5
      %v3218 = vrot.slane %v3181, 5
      %v3219 = vsel %vm671, %v3217, %v3218
      %v3220 = vrot.slane %v3182, 5
      %v3221 = vrot.slane %v3183, 5
      %v3222 = vsel %vm671, %v3220, %v3221
      %v3223 = vrot.slane %v3184, 5
      %v3224 = vrot.slane %v3185, 5
      %v3225 = vsel %vm671, %v3223, %v3224
      %v3234 = vadd.f32 %v3158, %v3204
      %v3235 = vadd.f32 %v3159, %v3207
      %v3236 = vadd.f32 %v3160, %v3210
      %v3237 = vadd.f32 %v3161, %v3213
      %v3238 = vadd.f32 %v3162, %v3216
      %v3239 = vadd.f32 %v3163, %v3219
      %v3240 = vadd.f32 %v3164, %v3222
      %v3241 = vadd.f32 %v3165, %v3225
      %v3242 = vlaneseq
      %v3243 = vshrl.u32 %v3242, 7
      %v3244 = vsub.s32 2, %v3243
      %v3245 = vrot.slane %v847, %v3244
      %v3246 = vmul.f32 %v2826, %v3245
      %v3247 = vmul.f32 %v2827, %v3245
      %v3248 = vmul.f32 %v2828, %v3245
      %v3249 = vmul.f32 %v2829, %v3245
      %v3250 = vmul.f32 %v2830, %v3245
      %v3251 = vmul.f32 %v2831, %v3245
      %v3252 = vmul.f32 %v2832, %v3245
      %v3253 = vmul.f32 %v2833, %v3245
      %v3254 = vmul.f32 %v2834, %v3245
      %v3255 = vmul.f32 %v2835, %v3245
      %v3256 = vmul.f32 %v2836, %v3245
      %v3257 = vmul.f32 %v2837, %v3245
      %v3258 = vmul.f32 %v2838, %v3245
      %v3259 = vmul.f32 %v2839, %v3245
      %v3260 = vmul.f32 %v2840, %v3245
      %v3261 = vmul.f32 %v2841, %v3245
      %v3278 = vrot.slane %v3246, 6
      %v3279 = vrot.slane %v3247, 6
      %v3280 = vsel %vm1306, %v3278, %v3279
      %v3281 = vrot.slane %v3248, 6
      %v3282 = vrot.slane %v3249, 6
      %v3283 = vsel %vm1306, %v3281, %v3282
      %v3284 = vrot.slane %v3250, 6
      %v3285 = vrot.slane %v3251, 6
      %v3286 = vsel %vm1306, %v3284, %v3285
      %v3287 = vrot.slane %v3252, 6
      %v3288 = vrot.slane %v3253, 6
      %v3289 = vsel %vm1306, %v3287, %v3288
      %v3290 = vrot.slane %v3254, 6
      %v3291 = vrot.slane %v3255, 6
      %v3292 = vsel %vm1306, %v3290, %v3291
      %v3293 = vrot.slane %v3256, 6
      %v3294 = vrot.slane %v3257, 6
      %v3295 = vsel %vm1306, %v3293, %v3294
      %v3296 = vrot.slane %v3258, 6
      %v3297 = vrot.slane %v3259, 6
      %v3298 = vsel %vm1306, %v3296, %v3297
      %v3299 = vrot.slane %v3260, 6
      %v3300 = vrot.slane %v3261, 6
      %v3301 = vsel %vm1306, %v3299, %v3300
      %v3310 = vadd.f32 %v3234, %v3280
      %v3311 = vadd.f32 %v3235, %v3283
      %v3312 = vadd.f32 %v3236, %v3286
      %v3313 = vadd.f32 %v3237, %v3289
      %v3314 = vadd.f32 %v3238, %v3292
      %v3315 = vadd.f32 %v3239, %v3295
      %v3316 = vadd.f32 %v3240, %v3298
      %v3317 = vadd.f32 %v3241, %v3301
      %s3318 = scalar_lea.vmem [#allocation2], 80
      %v3319 = vld [vmem:[%s3318] sm:$0xff]
      %v3320 = vld [vmem:[%s3318 + $0x8] sm:$0x3f]
      %v3321 = vld [vmem:[%s3318 + $0x10] sm:$0xff]
      %v3322 = vld [vmem:[%s3318 + $0x18] sm:$0x3f]
      %v3323 = vld [vmem:[%s3318 + $0x20] sm:$0xff]
      %v3324 = vld [vmem:[%s3318 + $0x28] sm:$0x3f]
      %v3325 = vld [vmem:[%s3318 + $0x30] sm:$0xff]
      %v3326 = vld [vmem:[%s3318 + $0x38] sm:$0x3f]
      %v3327 = vld [vmem:[%s3318 + $0x40] sm:$0xff]
      %v3328 = vld [vmem:[%s3318 + $0x48] sm:$0x3f]
      %v3329 = vld [vmem:[%s3318 + $0x50] sm:$0xff]
      %v3330 = vld [vmem:[%s3318 + $0x58] sm:$0x3f]
      %v3331 = vld [vmem:[%s3318 + $0x60] sm:$0xff]
      %v3332 = vld [vmem:[%s3318 + $0x68] sm:$0x3f]
      %v3333 = vld [vmem:[%s3318 + $0x70] sm:$0xff]
      %v3334 = vld [vmem:[%s3318 + $0x78] sm:$0x3f]
      %v3335 = vlaneseq
      %v3336 = vshrl.u32 %v3335, 7
      %v3337 = vsub.s32 3, %v3336
      %v3338 = vrot.slane %v847, %v3337
      %v3339 = vmul.f32 %v3319, %v3338
      %v3340 = vmul.f32 %v3321, %v3338
      %v3341 = vmul.f32 %v3323, %v3338
      %v3342 = vmul.f32 %v3325, %v3338
      %v3343 = vmul.f32 %v3327, %v3338
      %v3344 = vmul.f32 %v3329, %v3338
      %v3345 = vmul.f32 %v3331, %v3338
      %v3346 = vmul.f32 %v3333, %v3338
      %v3347 = vadd.f32 %v3310, %v3339
      %v3348 = vadd.f32 %v3311, %v3340
      %v3349 = vadd.f32 %v3312, %v3341
      %v3350 = vadd.f32 %v3313, %v3342
      %v3351 = vadd.f32 %v3314, %v3343
      %v3352 = vadd.f32 %v3315, %v3344
      %v3353 = vadd.f32 %v3316, %v3345
      %v3354 = vadd.f32 %v3317, %v3346
      %v3355 = vlaneseq
      %v3356 = vshrl.u32 %v3355, 7
      %v3357 = vsub.s32 4, %v3356
      %v3358 = vrot.slane %v847, %v3357
      %v3359 = vmul.f32 %v3319, %v3358
      %v3360 = vmul.f32 %v3320, %v3358
      %v3361 = vmul.f32 %v3321, %v3358
      %v3362 = vmul.f32 %v3322, %v3358
      %v3363 = vmul.f32 %v3323, %v3358
      %v3364 = vmul.f32 %v3324, %v3358
      %v3365 = vmul.f32 %v3325, %v3358
      %v3366 = vmul.f32 %v3326, %v3358
      %v3367 = vmul.f32 %v3327, %v3358
      %v3368 = vmul.f32 %v3328, %v3358
      %v3369 = vmul.f32 %v3329, %v3358
      %v3370 = vmul.f32 %v3330, %v3358
      %v3371 = vmul.f32 %v3331, %v3358
      %v3372 = vmul.f32 %v3332, %v3358
      %v3373 = vmul.f32 %v3333, %v3358
      %v3374 = vmul.f32 %v3334, %v3358
      %v3391 = vrot.slane %v3359, 1
      %v3392 = vrot.slane %v3360, 1
      %v3393 = vsel %vm922, %v3391, %v3392
      %v3394 = vrot.slane %v3361, 1
      %v3395 = vrot.slane %v3362, 1
      %v3396 = vsel %vm922, %v3394, %v3395
      %v3397 = vrot.slane %v3363, 1
      %v3398 = vrot.slane %v3364, 1
      %v3399 = vsel %vm922, %v3397, %v3398
      %v3400 = vrot.slane %v3365, 1
      %v3401 = vrot.slane %v3366, 1
      %v3402 = vsel %vm922, %v3400, %v3401
      %v3403 = vrot.slane %v3367, 1
      %v3404 = vrot.slane %v3368, 1
      %v3405 = vsel %vm922, %v3403, %v3404
      %v3406 = vrot.slane %v3369, 1
      %v3407 = vrot.slane %v3370, 1
      %v3408 = vsel %vm922, %v3406, %v3407
      %v3409 = vrot.slane %v3371, 1
      %v3410 = vrot.slane %v3372, 1
      %v3411 = vsel %vm922, %v3409, %v3410
      %v3412 = vrot.slane %v3373, 1
      %v3413 = vrot.slane %v3374, 1
      %v3414 = vsel %vm922, %v3412, %v3413
      %v3423 = vadd.f32 %v3347, %v3393
      %v3424 = vadd.f32 %v3348, %v3396
      %v3425 = vadd.f32 %v3349, %v3399
      %v3426 = vadd.f32 %v3350, %v3402
      %v3427 = vadd.f32 %v3351, %v3405
      %v3428 = vadd.f32 %v3352, %v3408
      %v3429 = vadd.f32 %v3353, %v3411
      %v3430 = vadd.f32 %v3354, %v3414
      %v3431 = vlaneseq
      %v3432 = vshrl.u32 %v3431, 7
      %v3433 = vsub.s32 5, %v3432
      %v3434 = vrot.slane %v847, %v3433
      %v3435 = vmul.f32 %v3319, %v3434
      %v3436 = vmul.f32 %v3320, %v3434
      %v3437 = vmul.f32 %v3321, %v3434
      %v3438 = vmul.f32 %v3322, %v3434
      %v3439 = vmul.f32 %v3323, %v3434
      %v3440 = vmul.f32 %v3324, %v3434
      %v3441 = vmul.f32 %v3325, %v3434
      %v3442 = vmul.f32 %v3326, %v3434
      %v3443 = vmul.f32 %v3327, %v3434
      %v3444 = vmul.f32 %v3328, %v3434
      %v3445 = vmul.f32 %v3329, %v3434
      %v3446 = vmul.f32 %v3330, %v3434
      %v3447 = vmul.f32 %v3331, %v3434
      %v3448 = vmul.f32 %v3332, %v3434
      %v3449 = vmul.f32 %v3333, %v3434
      %v3450 = vmul.f32 %v3334, %v3434
      %v3467 = vrot.slane %v3435, 2
      %v3468 = vrot.slane %v3436, 2
      %v3469 = vsel %vm999, %v3467, %v3468
      %v3470 = vrot.slane %v3437, 2
      %v3471 = vrot.slane %v3438, 2
      %v3472 = vsel %vm999, %v3470, %v3471
      %v3473 = vrot.slane %v3439, 2
      %v3474 = vrot.slane %v3440, 2
      %v3475 = vsel %vm999, %v3473, %v3474
      %v3476 = vrot.slane %v3441, 2
      %v3477 = vrot.slane %v3442, 2
      %v3478 = vsel %vm999, %v3476, %v3477
      %v3479 = vrot.slane %v3443, 2
      %v3480 = vrot.slane %v3444, 2
      %v3481 = vsel %vm999, %v3479, %v3480
      %v3482 = vrot.slane %v3445, 2
      %v3483 = vrot.slane %v3446, 2
      %v3484 = vsel %vm999, %v3482, %v3483
      %v3485 = vrot.slane %v3447, 2
      %v3486 = vrot.slane %v3448, 2
      %v3487 = vsel %vm999, %v3485, %v3486
      %v3488 = vrot.slane %v3449, 2
      %v3489 = vrot.slane %v3450, 2
      %v3490 = vsel %vm999, %v3488, %v3489
      %v3499 = vadd.f32 %v3423, %v3469
      %v3500 = vadd.f32 %v3424, %v3472
      %v3501 = vadd.f32 %v3425, %v3475
      %v3502 = vadd.f32 %v3426, %v3478
      %v3503 = vadd.f32 %v3427, %v3481
      %v3504 = vadd.f32 %v3428, %v3484
      %v3505 = vadd.f32 %v3429, %v3487
      %v3506 = vadd.f32 %v3430, %v3490
      %v3507 = vlaneseq
      %v3508 = vshrl.u32 %v3507, 7
      %v3509 = vsub.s32 6, %v3508
      %v3510 = vrot.slane %v847, %v3509
      %v3511 = vmul.f32 %v3319, %v3510
      %v3512 = vmul.f32 %v3320, %v3510
      %v3513 = vmul.f32 %v3321, %v3510
      %v3514 = vmul.f32 %v3322, %v3510
      %v3515 = vmul.f32 %v3323, %v3510
      %v3516 = vmul.f32 %v3324, %v3510
      %v3517 = vmul.f32 %v3325, %v3510
      %v3518 = vmul.f32 %v3326, %v3510
      %v3519 = vmul.f32 %v3327, %v3510
      %v3520 = vmul.f32 %v3328, %v3510
      %v3521 = vmul.f32 %v3329, %v3510
      %v3522 = vmul.f32 %v3330, %v3510
      %v3523 = vmul.f32 %v3331, %v3510
      %v3524 = vmul.f32 %v3332, %v3510
      %v3525 = vmul.f32 %v3333, %v3510
      %v3526 = vmul.f32 %v3334, %v3510
      %v3543 = vrot.slane %v3511, 3
      %v3544 = vrot.slane %v3512, 3
      %v3545 = vsel %vm1076, %v3543, %v3544
      %v3546 = vrot.slane %v3513, 3
      %v3547 = vrot.slane %v3514, 3
      %v3548 = vsel %vm1076, %v3546, %v3547
      %v3549 = vrot.slane %v3515, 3
      %v3550 = vrot.slane %v3516, 3
      %v3551 = vsel %vm1076, %v3549, %v3550
      %v3552 = vrot.slane %v3517, 3
      %v3553 = vrot.slane %v3518, 3
      %v3554 = vsel %vm1076, %v3552, %v3553
      %v3555 = vrot.slane %v3519, 3
      %v3556 = vrot.slane %v3520, 3
      %v3557 = vsel %vm1076, %v3555, %v3556
      %v3558 = vrot.slane %v3521, 3
      %v3559 = vrot.slane %v3522, 3
      %v3560 = vsel %vm1076, %v3558, %v3559
      %v3561 = vrot.slane %v3523, 3
      %v3562 = vrot.slane %v3524, 3
      %v3563 = vsel %vm1076, %v3561, %v3562
      %v3564 = vrot.slane %v3525, 3
      %v3565 = vrot.slane %v3526, 3
      %v3566 = vsel %vm1076, %v3564, %v3565
      %v3575 = vadd.f32 %v3499, %v3545
      %v3576 = vadd.f32 %v3500, %v3548
      %v3577 = vadd.f32 %v3501, %v3551
      %v3578 = vadd.f32 %v3502, %v3554
      %v3579 = vadd.f32 %v3503, %v3557
      %v3580 = vadd.f32 %v3504, %v3560
      %v3581 = vadd.f32 %v3505, %v3563
      %v3582 = vadd.f32 %v3506, %v3566
      %v3583 = vlaneseq
      %v3584 = vshrl.u32 %v3583, 7
      %v3585 = vsub.s32 7, %v3584
      %v3586 = vrot.slane %v847, %v3585
      %v3587 = vmul.f32 %v3319, %v3586
      %v3588 = vmul.f32 %v3320, %v3586
      %v3589 = vmul.f32 %v3321, %v3586
      %v3590 = vmul.f32 %v3322, %v3586
      %v3591 = vmul.f32 %v3323, %v3586
      %v3592 = vmul.f32 %v3324, %v3586
      %v3593 = vmul.f32 %v3325, %v3586
      %v3594 = vmul.f32 %v3326, %v3586
      %v3595 = vmul.f32 %v3327, %v3586
      %v3596 = vmul.f32 %v3328, %v3586
      %v3597 = vmul.f32 %v3329, %v3586
      %v3598 = vmul.f32 %v3330, %v3586
      %v3599 = vmul.f32 %v3331, %v3586
      %v3600 = vmul.f32 %v3332, %v3586
      %v3601 = vmul.f32 %v3333, %v3586
      %v3602 = vmul.f32 %v3334, %v3586
      %v3619 = vrot.slane %v3587, 4
      %v3620 = vrot.slane %v3588, 4
      %v3621 = vsel %vm1153, %v3619, %v3620
      %v3622 = vrot.slane %v3589, 4
      %v3623 = vrot.slane %v3590, 4
      %v3624 = vsel %vm1153, %v3622, %v3623
      %v3625 = vrot.slane %v3591, 4
      %v3626 = vrot.slane %v3592, 4
      %v3627 = vsel %vm1153, %v3625, %v3626
      %v3628 = vrot.slane %v3593, 4
      %v3629 = vrot.slane %v3594, 4
      %v3630 = vsel %vm1153, %v3628, %v3629
      %v3631 = vrot.slane %v3595, 4
      %v3632 = vrot.slane %v3596, 4
      %v3633 = vsel %vm1153, %v3631, %v3632
      %v3634 = vrot.slane %v3597, 4
      %v3635 = vrot.slane %v3598, 4
      %v3636 = vsel %vm1153, %v3634, %v3635
      %v3637 = vrot.slane %v3599, 4
      %v3638 = vrot.slane %v3600, 4
      %v3639 = vsel %vm1153, %v3637, %v3638
      %v3640 = vrot.slane %v3601, 4
      %v3641 = vrot.slane %v3602, 4
      %v3642 = vsel %vm1153, %v3640, %v3641
      %v3651 = vadd.f32 %v3575, %v3621
      %v3652 = vadd.f32 %v3576, %v3624
      %v3653 = vadd.f32 %v3577, %v3627
      %v3654 = vadd.f32 %v3578, %v3630
      %v3655 = vadd.f32 %v3579, %v3633
      %v3656 = vadd.f32 %v3580, %v3636
      %v3657 = vadd.f32 %v3581, %v3639
      %v3658 = vadd.f32 %v3582, %v3642
      %v3659 = vlaneseq
      %v3660 = vshrl.u32 %v3659, 7
      %v3661 = vsub.s32 0, %v3660
      %v3662 = vrot.slane %v848, %v3661
      %v3663 = vmul.f32 %v3319, %v3662
      %v3664 = vmul.f32 %v3320, %v3662
      %v3665 = vmul.f32 %v3321, %v3662
      %v3666 = vmul.f32 %v3322, %v3662
      %v3667 = vmul.f32 %v3323, %v3662
      %v3668 = vmul.f32 %v3324, %v3662
      %v3669 = vmul.f32 %v3325, %v3662
      %v3670 = vmul.f32 %v3326, %v3662
      %v3671 = vmul.f32 %v3327, %v3662
      %v3672 = vmul.f32 %v3328, %v3662
      %v3673 = vmul.f32 %v3329, %v3662
      %v3674 = vmul.f32 %v3330, %v3662
      %v3675 = vmul.f32 %v3331, %v3662
      %v3676 = vmul.f32 %v3332, %v3662
      %v3677 = vmul.f32 %v3333, %v3662
      %v3678 = vmul.f32 %v3334, %v3662
      %v3695 = vrot.slane %v3663, 5
      %v3696 = vrot.slane %v3664, 5
      %v3697 = vsel %vm671, %v3695, %v3696
      %v3698 = vrot.slane %v3665, 5
      %v3699 = vrot.slane %v3666, 5
      %v3700 = vsel %vm671, %v3698, %v3699
      %v3701 = vrot.slane %v3667, 5
      %v3702 = vrot.slane %v3668, 5
      %v3703 = vsel %vm671, %v3701, %v3702
      %v3704 = vrot.slane %v3669, 5
      %v3705 = vrot.slane %v3670, 5
      %v3706 = vsel %vm671, %v3704, %v3705
      %v3707 = vrot.slane %v3671, 5
      %v3708 = vrot.slane %v3672, 5
      %v3709 = vsel %vm671, %v3707, %v3708
      %v3710 = vrot.slane %v3673, 5
      %v3711 = vrot.slane %v3674, 5
      %v3712 = vsel %vm671, %v3710, %v3711
      %v3713 = vrot.slane %v3675, 5
      %v3714 = vrot.slane %v3676, 5
      %v3715 = vsel %vm671, %v3713, %v3714
      %v3716 = vrot.slane %v3677, 5
      %v3717 = vrot.slane %v3678, 5
      %v3718 = vsel %vm671, %v3716, %v3717
      %v3727 = vadd.f32 %v3651, %v3697
      %v3728 = vadd.f32 %v3652, %v3700
      %v3729 = vadd.f32 %v3653, %v3703
      %v3730 = vadd.f32 %v3654, %v3706
      %v3731 = vadd.f32 %v3655, %v3709
      %v3732 = vadd.f32 %v3656, %v3712
      %v3733 = vadd.f32 %v3657, %v3715
      %v3734 = vadd.f32 %v3658, %v3718
      %v3735 = vlaneseq
      %v3736 = vshrl.u32 %v3735, 7
      %v3737 = vsub.s32 1, %v3736
      %v3738 = vrot.slane %v848, %v3737
      %v3739 = vmul.f32 %v3319, %v3738
      %v3740 = vmul.f32 %v3320, %v3738
      %v3741 = vmul.f32 %v3321, %v3738
      %v3742 = vmul.f32 %v3322, %v3738
      %v3743 = vmul.f32 %v3323, %v3738
      %v3744 = vmul.f32 %v3324, %v3738
      %v3745 = vmul.f32 %v3325, %v3738
      %v3746 = vmul.f32 %v3326, %v3738
      %v3747 = vmul.f32 %v3327, %v3738
      %v3748 = vmul.f32 %v3328, %v3738
      %v3749 = vmul.f32 %v3329, %v3738
      %v3750 = vmul.f32 %v3330, %v3738
      %v3751 = vmul.f32 %v3331, %v3738
      %v3752 = vmul.f32 %v3332, %v3738
      %v3753 = vmul.f32 %v3333, %v3738
      %v3754 = vmul.f32 %v3334, %v3738
      %v3771 = vrot.slane %v3739, 6
      %v3772 = vrot.slane %v3740, 6
      %v3773 = vsel %vm1306, %v3771, %v3772
      %v3774 = vrot.slane %v3741, 6
      %v3775 = vrot.slane %v3742, 6
      %v3776 = vsel %vm1306, %v3774, %v3775
      %v3777 = vrot.slane %v3743, 6
      %v3778 = vrot.slane %v3744, 6
      %v3779 = vsel %vm1306, %v3777, %v3778
      %v3780 = vrot.slane %v3745, 6
      %v3781 = vrot.slane %v3746, 6
      %v3782 = vsel %vm1306, %v3780, %v3781
      %v3783 = vrot.slane %v3747, 6
      %v3784 = vrot.slane %v3748, 6
      %v3785 = vsel %vm1306, %v3783, %v3784
      %v3786 = vrot.slane %v3749, 6
      %v3787 = vrot.slane %v3750, 6
      %v3788 = vsel %vm1306, %v3786, %v3787
      %v3789 = vrot.slane %v3751, 6
      %v3790 = vrot.slane %v3752, 6
      %v3791 = vsel %vm1306, %v3789, %v3790
      %v3792 = vrot.slane %v3753, 6
      %v3793 = vrot.slane %v3754, 6
      %v3794 = vsel %vm1306, %v3792, %v3793
      %v3803 = vadd.f32 %v3727, %v3773
      %v3804 = vadd.f32 %v3728, %v3776
      %v3805 = vadd.f32 %v3729, %v3779
      %v3806 = vadd.f32 %v3730, %v3782
      %v3807 = vadd.f32 %v3731, %v3785
      %v3808 = vadd.f32 %v3732, %v3788
      %v3809 = vadd.f32 %v3733, %v3791
      %v3810 = vadd.f32 %v3734, %v3794
      %s3811 = scalar_lea.vmem [#allocation2], 96
      %v3812 = vld [vmem:[%s3811] sm:$0xff]
      %v3813 = vld [vmem:[%s3811 + $0x8] sm:$0x3f]
      %v3814 = vld [vmem:[%s3811 + $0x10] sm:$0xff]
      %v3815 = vld [vmem:[%s3811 + $0x18] sm:$0x3f]
      %v3816 = vld [vmem:[%s3811 + $0x20] sm:$0xff]
      %v3817 = vld [vmem:[%s3811 + $0x28] sm:$0x3f]
      %v3818 = vld [vmem:[%s3811 + $0x30] sm:$0xff]
      %v3819 = vld [vmem:[%s3811 + $0x38] sm:$0x3f]
      %v3820 = vld [vmem:[%s3811 + $0x40] sm:$0xff]
      %v3821 = vld [vmem:[%s3811 + $0x48] sm:$0x3f]
      %v3822 = vld [vmem:[%s3811 + $0x50] sm:$0xff]
      %v3823 = vld [vmem:[%s3811 + $0x58] sm:$0x3f]
      %v3824 = vld [vmem:[%s3811 + $0x60] sm:$0xff]
      %v3825 = vld [vmem:[%s3811 + $0x68] sm:$0x3f]
      %v3826 = vld [vmem:[%s3811 + $0x70] sm:$0xff]
      %v3827 = vld [vmem:[%s3811 + $0x78] sm:$0x3f]
      %v3828 = vlaneseq
      %v3829 = vshrl.u32 %v3828, 7
      %v3830 = vsub.s32 2, %v3829
      %v3831 = vrot.slane %v848, %v3830
      %v3832 = vmul.f32 %v3812, %v3831
      %v3833 = vmul.f32 %v3814, %v3831
      %v3834 = vmul.f32 %v3816, %v3831
      %v3835 = vmul.f32 %v3818, %v3831
      %v3836 = vmul.f32 %v3820, %v3831
      %v3837 = vmul.f32 %v3822, %v3831
      %v3838 = vmul.f32 %v3824, %v3831
      %v3839 = vmul.f32 %v3826, %v3831
      %v3840 = vadd.f32 %v3803, %v3832
      %v3841 = vadd.f32 %v3804, %v3833
      %v3842 = vadd.f32 %v3805, %v3834
      %v3843 = vadd.f32 %v3806, %v3835
      %v3844 = vadd.f32 %v3807, %v3836
      %v3845 = vadd.f32 %v3808, %v3837
      %v3846 = vadd.f32 %v3809, %v3838
      %v3847 = vadd.f32 %v3810, %v3839
      %v3848 = vlaneseq
      %v3849 = vshrl.u32 %v3848, 7
      %v3850 = vsub.s32 3, %v3849
      %v3851 = vrot.slane %v848, %v3850
      %v3852 = vmul.f32 %v3812, %v3851
      %v3853 = vmul.f32 %v3813, %v3851
      %v3854 = vmul.f32 %v3814, %v3851
      %v3855 = vmul.f32 %v3815, %v3851
      %v3856 = vmul.f32 %v3816, %v3851
      %v3857 = vmul.f32 %v3817, %v3851
      %v3858 = vmul.f32 %v3818, %v3851
      %v3859 = vmul.f32 %v3819, %v3851
      %v3860 = vmul.f32 %v3820, %v3851
      %v3861 = vmul.f32 %v3821, %v3851
      %v3862 = vmul.f32 %v3822, %v3851
      %v3863 = vmul.f32 %v3823, %v3851
      %v3864 = vmul.f32 %v3824, %v3851
      %v3865 = vmul.f32 %v3825, %v3851
      %v3866 = vmul.f32 %v3826, %v3851
      %v3867 = vmul.f32 %v3827, %v3851
      %v3884 = vrot.slane %v3852, 1
      %v3885 = vrot.slane %v3853, 1
      %v3886 = vsel %vm922, %v3884, %v3885
      %v3887 = vrot.slane %v3854, 1
      %v3888 = vrot.slane %v3855, 1
      %v3889 = vsel %vm922, %v3887, %v3888
      %v3890 = vrot.slane %v3856, 1
      %v3891 = vrot.slane %v3857, 1
      %v3892 = vsel %vm922, %v3890, %v3891
      %v3893 = vrot.slane %v3858, 1
      %v3894 = vrot.slane %v3859, 1
      %v3895 = vsel %vm922, %v3893, %v3894
      %v3896 = vrot.slane %v3860, 1
      %v3897 = vrot.slane %v3861, 1
      %v3898 = vsel %vm922, %v3896, %v3897
      %v3899 = vrot.slane %v3862, 1
      %v3900 = vrot.slane %v3863, 1
      %v3901 = vsel %vm922, %v3899, %v3900
      %v3902 = vrot.slane %v3864, 1
      %v3903 = vrot.slane %v3865, 1
      %v3904 = vsel %vm922, %v3902, %v3903
      %v3905 = vrot.slane %v3866, 1
      %v3906 = vrot.slane %v3867, 1
      %v3907 = vsel %vm922, %v3905, %v3906
      %v3916 = vadd.f32 %v3840, %v3886
      %v3917 = vadd.f32 %v3841, %v3889
      %v3918 = vadd.f32 %v3842, %v3892
      %v3919 = vadd.f32 %v3843, %v3895
      %v3920 = vadd.f32 %v3844, %v3898
      %v3921 = vadd.f32 %v3845, %v3901
      %v3922 = vadd.f32 %v3846, %v3904
      %v3923 = vadd.f32 %v3847, %v3907
      %v3924 = vlaneseq
      %v3925 = vshrl.u32 %v3924, 7
      %v3926 = vsub.s32 4, %v3925
      %v3927 = vrot.slane %v848, %v3926
      %v3928 = vmul.f32 %v3812, %v3927
      %v3929 = vmul.f32 %v3813, %v3927
      %v3930 = vmul.f32 %v3814, %v3927
      %v3931 = vmul.f32 %v3815, %v3927
      %v3932 = vmul.f32 %v3816, %v3927
      %v3933 = vmul.f32 %v3817, %v3927
      %v3934 = vmul.f32 %v3818, %v3927
      %v3935 = vmul.f32 %v3819, %v3927
      %v3936 = vmul.f32 %v3820, %v3927
      %v3937 = vmul.f32 %v3821, %v3927
      %v3938 = vmul.f32 %v3822, %v3927
      %v3939 = vmul.f32 %v3823, %v3927
      %v3940 = vmul.f32 %v3824, %v3927
      %v3941 = vmul.f32 %v3825, %v3927
      %v3942 = vmul.f32 %v3826, %v3927
      %v3943 = vmul.f32 %v3827, %v3927
      %v3960 = vrot.slane %v3928, 2
      %v3961 = vrot.slane %v3929, 2
      %v3962 = vsel %vm999, %v3960, %v3961
      %v3963 = vrot.slane %v3930, 2
      %v3964 = vrot.slane %v3931, 2
      %v3965 = vsel %vm999, %v3963, %v3964
      %v3966 = vrot.slane %v3932, 2
      %v3967 = vrot.slane %v3933, 2
      %v3968 = vsel %vm999, %v3966, %v3967
      %v3969 = vrot.slane %v3934, 2
      %v3970 = vrot.slane %v3935, 2
      %v3971 = vsel %vm999, %v3969, %v3970
      %v3972 = vrot.slane %v3936, 2
      %v3973 = vrot.slane %v3937, 2
      %v3974 = vsel %vm999, %v3972, %v3973
      %v3975 = vrot.slane %v3938, 2
      %v3976 = vrot.slane %v3939, 2
      %v3977 = vsel %vm999, %v3975, %v3976
      %v3978 = vrot.slane %v3940, 2
      %v3979 = vrot.slane %v3941, 2
      %v3980 = vsel %vm999, %v3978, %v3979
      %v3981 = vrot.slane %v3942, 2
      %v3982 = vrot.slane %v3943, 2
      %v3983 = vsel %vm999, %v3981, %v3982
      %v3992 = vadd.f32 %v3916, %v3962
      %v3993 = vadd.f32 %v3917, %v3965
      %v3994 = vadd.f32 %v3918, %v3968
      %v3995 = vadd.f32 %v3919, %v3971
      %v3996 = vadd.f32 %v3920, %v3974
      %v3997 = vadd.f32 %v3921, %v3977
      %v3998 = vadd.f32 %v3922, %v3980
      %v3999 = vadd.f32 %v3923, %v3983
      %v4000 = vlaneseq
      %v4001 = vshrl.u32 %v4000, 7
      %v4002 = vsub.s32 5, %v4001
      %v4003 = vrot.slane %v848, %v4002
      %v4004 = vmul.f32 %v3812, %v4003
      %v4005 = vmul.f32 %v3813, %v4003
      %v4006 = vmul.f32 %v3814, %v4003
      %v4007 = vmul.f32 %v3815, %v4003
      %v4008 = vmul.f32 %v3816, %v4003
      %v4009 = vmul.f32 %v3817, %v4003
      %v4010 = vmul.f32 %v3818, %v4003
      %v4011 = vmul.f32 %v3819, %v4003
      %v4012 = vmul.f32 %v3820, %v4003
      %v4013 = vmul.f32 %v3821, %v4003
      %v4014 = vmul.f32 %v3822, %v4003
      %v4015 = vmul.f32 %v3823, %v4003
      %v4016 = vmul.f32 %v3824, %v4003
      %v4017 = vmul.f32 %v3825, %v4003
      %v4018 = vmul.f32 %v3826, %v4003
      %v4019 = vmul.f32 %v3827, %v4003
      %v4036 = vrot.slane %v4004, 3
      %v4037 = vrot.slane %v4005, 3
      %v4038 = vsel %vm1076, %v4036, %v4037
      %v4039 = vrot.slane %v4006, 3
      %v4040 = vrot.slane %v4007, 3
      %v4041 = vsel %vm1076, %v4039, %v4040
      %v4042 = vrot.slane %v4008, 3
      %v4043 = vrot.slane %v4009, 3
      %v4044 = vsel %vm1076, %v4042, %v4043
      %v4045 = vrot.slane %v4010, 3
      %v4046 = vrot.slane %v4011, 3
      %v4047 = vsel %vm1076, %v4045, %v4046
      %v4048 = vrot.slane %v4012, 3
      %v4049 = vrot.slane %v4013, 3
      %v4050 = vsel %vm1076, %v4048, %v4049
      %v4051 = vrot.slane %v4014, 3
      %v4052 = vrot.slane %v4015, 3
      %v4053 = vsel %vm1076, %v4051, %v4052
      %v4054 = vrot.slane %v4016, 3
      %v4055 = vrot.slane %v4017, 3
      %v4056 = vsel %vm1076, %v4054, %v4055
      %v4057 = vrot.slane %v4018, 3
      %v4058 = vrot.slane %v4019, 3
      %v4059 = vsel %vm1076, %v4057, %v4058
      %v4068 = vadd.f32 %v3992, %v4038
      %v4069 = vadd.f32 %v3993, %v4041
      %v4070 = vadd.f32 %v3994, %v4044
      %v4071 = vadd.f32 %v3995, %v4047
      %v4072 = vadd.f32 %v3996, %v4050
      %v4073 = vadd.f32 %v3997, %v4053
      %v4074 = vadd.f32 %v3998, %v4056
      %v4075 = vadd.f32 %v3999, %v4059
      %v4076 = vlaneseq
      %v4077 = vshrl.u32 %v4076, 7
      %v4078 = vsub.s32 6, %v4077
      %v4079 = vrot.slane %v848, %v4078
      %v4080 = vmul.f32 %v3812, %v4079
      %v4081 = vmul.f32 %v3813, %v4079
      %v4082 = vmul.f32 %v3814, %v4079
      %v4083 = vmul.f32 %v3815, %v4079
      %v4084 = vmul.f32 %v3816, %v4079
      %v4085 = vmul.f32 %v3817, %v4079
      %v4086 = vmul.f32 %v3818, %v4079
      %v4087 = vmul.f32 %v3819, %v4079
      %v4088 = vmul.f32 %v3820, %v4079
      %v4089 = vmul.f32 %v3821, %v4079
      %v4090 = vmul.f32 %v3822, %v4079
      %v4091 = vmul.f32 %v3823, %v4079
      %v4092 = vmul.f32 %v3824, %v4079
      %v4093 = vmul.f32 %v3825, %v4079
      %v4094 = vmul.f32 %v3826, %v4079
      %v4095 = vmul.f32 %v3827, %v4079
      %v4112 = vrot.slane %v4080, 4
      %v4113 = vrot.slane %v4081, 4
      %v4114 = vsel %vm1153, %v4112, %v4113
      %v4115 = vrot.slane %v4082, 4
      %v4116 = vrot.slane %v4083, 4
      %v4117 = vsel %vm1153, %v4115, %v4116
      %v4118 = vrot.slane %v4084, 4
      %v4119 = vrot.slane %v4085, 4
      %v4120 = vsel %vm1153, %v4118, %v4119
      %v4121 = vrot.slane %v4086, 4
      %v4122 = vrot.slane %v4087, 4
      %v4123 = vsel %vm1153, %v4121, %v4122
      %v4124 = vrot.slane %v4088, 4
      %v4125 = vrot.slane %v4089, 4
      %v4126 = vsel %vm1153, %v4124, %v4125
      %v4127 = vrot.slane %v4090, 4
      %v4128 = vrot.slane %v4091, 4
      %v4129 = vsel %vm1153, %v4127, %v4128
      %v4130 = vrot.slane %v4092, 4
      %v4131 = vrot.slane %v4093, 4
      %v4132 = vsel %vm1153, %v4130, %v4131
      %v4133 = vrot.slane %v4094, 4
      %v4134 = vrot.slane %v4095, 4
      %v4135 = vsel %vm1153, %v4133, %v4134
      %v4144 = vadd.f32 %v4068, %v4114
      %v4145 = vadd.f32 %v4069, %v4117
      %v4146 = vadd.f32 %v4070, %v4120
      %v4147 = vadd.f32 %v4071, %v4123
      %v4148 = vadd.f32 %v4072, %v4126
      %v4149 = vadd.f32 %v4073, %v4129
      %v4150 = vadd.f32 %v4074, %v4132
      %v4151 = vadd.f32 %v4075, %v4135
      %v4152 = vlaneseq
      %v4153 = vshrl.u32 %v4152, 7
      %v4154 = vsub.s32 7, %v4153
      %v4155 = vrot.slane %v848, %v4154
      %v4156 = vmul.f32 %v3812, %v4155
      %v4157 = vmul.f32 %v3813, %v4155
      %v4158 = vmul.f32 %v3814, %v4155
      %v4159 = vmul.f32 %v3815, %v4155
      %v4160 = vmul.f32 %v3816, %v4155
      %v4161 = vmul.f32 %v3817, %v4155
      %v4162 = vmul.f32 %v3818, %v4155
      %v4163 = vmul.f32 %v3819, %v4155
      %v4164 = vmul.f32 %v3820, %v4155
      %v4165 = vmul.f32 %v3821, %v4155
      %v4166 = vmul.f32 %v3822, %v4155
      %v4167 = vmul.f32 %v3823, %v4155
      %v4168 = vmul.f32 %v3824, %v4155
      %v4169 = vmul.f32 %v3825, %v4155
      %v4170 = vmul.f32 %v3826, %v4155
      %v4171 = vmul.f32 %v3827, %v4155
      %v4188 = vrot.slane %v4156, 5
      %v4189 = vrot.slane %v4157, 5
      %v4190 = vsel %vm671, %v4188, %v4189
      %v4191 = vrot.slane %v4158, 5
      %v4192 = vrot.slane %v4159, 5
      %v4193 = vsel %vm671, %v4191, %v4192
      %v4194 = vrot.slane %v4160, 5
      %v4195 = vrot.slane %v4161, 5
      %v4196 = vsel %vm671, %v4194, %v4195
      %v4197 = vrot.slane %v4162, 5
      %v4198 = vrot.slane %v4163, 5
      %v4199 = vsel %vm671, %v4197, %v4198
      %v4200 = vrot.slane %v4164, 5
      %v4201 = vrot.slane %v4165, 5
      %v4202 = vsel %vm671, %v4200, %v4201
      %v4203 = vrot.slane %v4166, 5
      %v4204 = vrot.slane %v4167, 5
      %v4205 = vsel %vm671, %v4203, %v4204
      %v4206 = vrot.slane %v4168, 5
      %v4207 = vrot.slane %v4169, 5
      %v4208 = vsel %vm671, %v4206, %v4207
      %v4209 = vrot.slane %v4170, 5
      %v4210 = vrot.slane %v4171, 5
      %v4211 = vsel %vm671, %v4209, %v4210
      %v4220 = vadd.f32 %v4144, %v4190
      %v4221 = vadd.f32 %v4145, %v4193
      %v4222 = vadd.f32 %v4146, %v4196
      %v4223 = vadd.f32 %v4147, %v4199
      %v4224 = vadd.f32 %v4148, %v4202
      %v4225 = vadd.f32 %v4149, %v4205
      %v4226 = vadd.f32 %v4150, %v4208
      %v4227 = vadd.f32 %v4151, %v4211
      %v4228 = vlaneseq
      %v4229 = vshrl.u32 %v4228, 7
      %v4230 = vsub.s32 0, %v4229
      %v4231 = vrot.slane %v849, %v4230
      %v4232 = vmul.f32 %v3812, %v4231
      %v4233 = vmul.f32 %v3813, %v4231
      %v4234 = vmul.f32 %v3814, %v4231
      %v4235 = vmul.f32 %v3815, %v4231
      %v4236 = vmul.f32 %v3816, %v4231
      %v4237 = vmul.f32 %v3817, %v4231
      %v4238 = vmul.f32 %v3818, %v4231
      %v4239 = vmul.f32 %v3819, %v4231
      %v4240 = vmul.f32 %v3820, %v4231
      %v4241 = vmul.f32 %v3821, %v4231
      %v4242 = vmul.f32 %v3822, %v4231
      %v4243 = vmul.f32 %v3823, %v4231
      %v4244 = vmul.f32 %v3824, %v4231
      %v4245 = vmul.f32 %v3825, %v4231
      %v4246 = vmul.f32 %v3826, %v4231
      %v4247 = vmul.f32 %v3827, %v4231
      %v4264 = vrot.slane %v4232, 6
      %v4265 = vrot.slane %v4233, 6
      %v4266 = vsel %vm1306, %v4264, %v4265
      %v4267 = vrot.slane %v4234, 6
      %v4268 = vrot.slane %v4235, 6
      %v4269 = vsel %vm1306, %v4267, %v4268
      %v4270 = vrot.slane %v4236, 6
      %v4271 = vrot.slane %v4237, 6
      %v4272 = vsel %vm1306, %v4270, %v4271
      %v4273 = vrot.slane %v4238, 6
      %v4274 = vrot.slane %v4239, 6
      %v4275 = vsel %vm1306, %v4273, %v4274
      %v4276 = vrot.slane %v4240, 6
      %v4277 = vrot.slane %v4241, 6
      %v4278 = vsel %vm1306, %v4276, %v4277
      %v4279 = vrot.slane %v4242, 6
      %v4280 = vrot.slane %v4243, 6
      %v4281 = vsel %vm1306, %v4279, %v4280
      %v4282 = vrot.slane %v4244, 6
      %v4283 = vrot.slane %v4245, 6
      %v4284 = vsel %vm1306, %v4282, %v4283
      %v4285 = vrot.slane %v4246, 6
      %v4286 = vrot.slane %v4247, 6
      %v4287 = vsel %vm1306, %v4285, %v4286
      %v4296 = vadd.f32 %v4220, %v4266
      %v4297 = vadd.f32 %v4221, %v4269
      %v4298 = vadd.f32 %v4222, %v4272
      %v4299 = vadd.f32 %v4223, %v4275
      %v4300 = vadd.f32 %v4224, %v4278
      %v4301 = vadd.f32 %v4225, %v4281
      %v4302 = vadd.f32 %v4226, %v4284
      %v4303 = vadd.f32 %v4227, %v4287
      %v4304 = vld [vmem:[%s4] sm:$0x1]
      %v4306 = vlaneseq
      %v4307 = vshrl.u32 %v4306, 7
      %v4308 = vsub.s32 0, %v4307
      %v4309 = vrot.slane %v4304, %v4308
      %v4311 = vadd.f32 %v4296, %v4309
      %v4312 = vadd.f32 %v4297, %v4309
      %v4313 = vadd.f32 %v4298, %v4309
      %v4314 = vadd.f32 %v4299, %v4309
      %v4315 = vadd.f32 %v4300, %v4309
      %v4316 = vadd.f32 %v4301, %v4309
      %v4317 = vadd.f32 %v4302, %v4309
      %v4318 = vadd.f32 %v4303, %v4309
      %vm4319 = vcmp.ge.f32.partialorder %v4311, 0.0
      %vm4320 = vcmp.ge.f32.partialorder %v4312, 0.0
      %vm4321 = vcmp.ge.f32.partialorder %v4313, 0.0
      %vm4322 = vcmp.ge.f32.partialorder %v4314, 0.0
      %vm4323 = vcmp.ge.f32.partialorder %v4315, 0.0
      %vm4324 = vcmp.ge.f32.partialorder %v4316, 0.0
      %vm4325 = vcmp.ge.f32.partialorder %v4317, 0.0
      %vm4326 = vcmp.ge.f32.partialorder %v4318, 0.0
      %v4327 = vmul.f32 %v4311, 0.01
      %v4328 = vmul.f32 %v4312, 0.01
      %v4329 = vmul.f32 %v4313, 0.01
      %v4330 = vmul.f32 %v4314, 0.01
      %v4331 = vmul.f32 %v4315, 0.01
      %v4332 = vmul.f32 %v4316, 0.01
      %v4333 = vmul.f32 %v4317, 0.01
      %v4334 = vmul.f32 %v4318, 0.01
      %v4335 = vsel %vm4319, %v4311, %v4327
      %v4336 = vsel %vm4320, %v4312, %v4328
      %v4337 = vsel %vm4321, %v4313, %v4329
      %v4338 = vsel %vm4322, %v4314, %v4330
      %v4339 = vsel %vm4323, %v4315, %v4331
      %v4340 = vsel %vm4324, %v4316, %v4332
      %v4341 = vsel %vm4325, %v4317, %v4333
      %v4342 = vsel %vm4326, %v4318, %v4334
      %4343 = vst.msk [vmem:[%s229] sm:$0xff] %vm804, %v4335
      %4344 = vst.msk [vmem:[%s229 + $0x8] sm:$0xff] %vm804, %v4336
      %4345 = vst.msk [vmem:[%s229 + $0x10] sm:$0xff] %vm804, %v4337
      %4346 = vst.msk [vmem:[%s229 + $0x18] sm:$0xff] %vm804, %v4338
      %4347 = vst.msk [vmem:[%s229 + $0x20] sm:$0xff] %vm804, %v4339
      %4348 = vst.msk [vmem:[%s229 + $0x28] sm:$0xff] %vm804, %v4340
      %4349 = vst.msk [vmem:[%s229 + $0x30] sm:$0xff] %vm804, %v4341
      %4350 = vst.msk [vmem:[%s229 + $0x38] sm:$0xff] %vm804, %v4342
      %p4351 = scmp.lt.s32.totalorder %s16, 1
      %s4352 = scalar_select %p4351, %s16, 1
      %s4353 = smul.addr %s4352, 8
      %s4354 = smul.addr %s4353, 8
      %s4355 = scalar_lea.vmem %s5, %s4354
      // Predicated region
      $region41: #{stem_forward.2} parent=39 // pred_check
        %p4356 = pneg %p144
      $region42: #{stem_forward.2} parent=39 // pred_check_branch
        %4358 = sbr.rel (%p4356) target = $region44
      $region43: #{stem_forward.2} parent=39 // pred_region
        _
      $region44: #{stem_forward.2} parent=39 // pred_fallthru
        _
    $region40: #{stem_forward.2} parent=5 // pred_fallthru
      _
    %p4359 = scmp.le.s32.totalorder 2, %s11
    // Predicated region
    $region45: #{stem_forward.2} parent=5 // pred_check
      %p4360 = pneg %p4359
    $region46: #{stem_forward.2} parent=5 // pred_check_branch
      %4362 = sbr.rel (%p4360) target = $region48
    $region47: #{stem_forward.2} parent=5 // pred_region
      %s4363 = ssub.s32 %s11, 2
      // Predicated region
      $region49: #{stem_forward.2} parent=47 // pred_check
        %p4364 = pneg %p150
      $region50: #{stem_forward.2} parent=47 // pred_check_branch
        %4366 = sbr.rel (%p4364) target = $region52
      $region51: #{stem_forward.2} parent=47 // pred_region
        %p4367 = scmp.lt.s32.totalorder %s17, 1
        %s4368 = scalar_select %p4367, %s17, 1
        %s4369 = smul.addr %s4368, 8
        %s4370 = smul.addr %s4369, 8
        %s4371 = scalar_lea.vmem %s5, %s4370
      $region52: #{stem_forward.2} parent=47 // pred_fallthru
        _
    $region48: #{stem_forward.2} parent=5 // pred_fallthru
      _
  $region6: #{stem_forward.2} parent=0 // loop_footer
    %s15 = sadd.s32 1, %s11
  $region7: #{stem_forward.2} parent=0 // loop_footer_branch
    %10 = sbr.rel target = $region3
  $region8: #{stem_forward.2} parent=0 // loop_exit
    _

</llo_original>
